<compile_context>
chip_gen: v7x
topology: tpu7x:2x2x1
jax: 0.10.0
libtpu: 0.0.40
codegen_flags: <defaults>
</compile_context>

<pallas_src>
import functools

import jax
import jax.numpy as jnp
import numpy as np
from jax.experimental import pallas as pl
from jax.experimental.pallas import tpu as pltpu

# (C_out, K, stride) for the four conv layers; fc: Linear(32, num_classes)
_CONV_CFG = [
    (256, 3, 2),
    (128, 3, 2),
    (64, 3, 2),
    (32, 1, 1),
]
_FC_IN = 32
_PAD_CLASSES = 128  # lane-dense padded logits width


def _conv_out_len(l, k, s):
    return (l - k) // s + 1


def _round_up(v, m):
    return (v + m - 1) // m * m


def _im2col_value(h, k_size, stride):
    """h: (N, L, C) value -> (N, L_out, K*C).

    Uses only static per-position slices and lane-aligned concatenation
    (k-major / channel-minor lane order, matching the weight reshape)."""
    n, l, c = h.shape
    l_out = _conv_out_len(l, k_size, stride)
    rows = [
        jnp.concatenate([h[:, t * stride + k, :] for k in range(k_size)], axis=-1)
        for t in range(l_out)
    ]
    return jnp.concatenate([r[:, None, :] for r in rows], axis=1)


def softmax_net_kernel(xcol_ref, w1_ref, b1_ref, w2_ref, b2_ref, w3_ref, b3_ref,
                       w4_ref, b4_ref, fcw_ref, fcb_ref, out_ref):
    tile_n, l1, kc1 = xcol_ref.shape  # layer-1 im2col is done in the wrapper

    # --- Conv1 + ReLU: one (N*L1, K*Cin) x (K*Cin, 256) matmul ---------------
    x1 = xcol_ref[...].reshape(tile_n * l1, kc1)
    h1 = jnp.maximum(
        jnp.dot(x1, w1_ref[...], preferred_element_type=jnp.float32) + b1_ref[...],
        0.0)                                                    # (N*L1, 256)

    # --- Conv2 + ReLU --------------------------------------------------------
    c1 = w1_ref.shape[1]
    l2 = _conv_out_len(l1, 3, 2)
    x2 = _im2col_value(h1.reshape(tile_n, l1, c1), 3, 2).reshape(tile_n * l2, 3 * c1)
    h2 = jnp.maximum(
        jnp.dot(x2, w2_ref[...], preferred_element_type=jnp.float32) + b2_ref[...],
        0.0)                                                    # (N*L2, 128)
    # TODO(synk): nn.Dropout(0.2) is identity at inference; training-mode dropout not modeled.

    # --- Conv3 + ReLU (reduces length to 1) ----------------------------------
    c2 = w2_ref.shape[1]
    l3 = _conv_out_len(l2, 3, 2)
    x3 = _im2col_value(h2.reshape(tile_n, l2, c2), 3, 2).reshape(tile_n * l3, 3 * c2)
    h3 = jnp.maximum(
        jnp.dot(x3, w3_ref[...], preferred_element_type=jnp.float32) + b3_ref[...],
        0.0)                                                    # (N, 64)  (l3 == 1)

    # --- Conv4 + ReLU (k=1, s=1 => plain matmul) -----------------------------
    h4 = jnp.maximum(
        jnp.dot(h3, w4_ref[...], preferred_element_type=jnp.float32) + b4_ref[...],
        0.0)                                                    # (N, 32)

    # --- squeeze(dim=2) + Linear -> lane-dense padded logits -----------------
    logits = jnp.dot(h4, fcw_ref[...], preferred_element_type=jnp.float32) + fcb_ref[...]
    out_ref[...] = logits.astype(out_ref.dtype)                 # (N, 128)


def _im2col_host(x_nlc, k_size, stride):
    """x_nlc: (N, L, C) -> (N, L_out, K*C), k-major / channel-minor lane order."""
    _, l, _ = x_nlc.shape
    l_out = _conv_out_len(l, k_size, stride)
    cols = [x_nlc[:, k:k + stride * (l_out - 1) + 1:stride, :] for k in range(k_size)]
    return jnp.concatenate(cols, axis=-1)


def _prepare_params(params, num_classes):
    """PyTorch layouts -> kernel layouts (all layout plumbing happens here):
       conv W (C_out, C_in, K) -> (K*C_in, C_out); bias -> (1, C_out);
       fc W (num_classes, 32) -> (32, 128) zero-padded; fc bias -> (1, 128)."""
    prepared = []
    for w, b in params[:-1]:
        c_out, c_in, k = w.shape
        w2d = jnp.transpose(w, (2, 1, 0)).reshape(k * c_in, c_out)
        prepared.append((w2d, b.reshape(1, c_out)))
    fcw, fcb = params[-1]
    fcw_p = jnp.zeros((_FC_IN, _PAD_CLASSES), jnp.float32).at[:, :num_classes].set(fcw.T)
    fcb_p = jnp.zeros((1, _PAD_CLASSES), jnp.float32).at[:, :num_classes].set(fcb)
    prepared.append((fcw_p, fcb_p))
    return prepared


@functools.partial(jax.jit, static_argnames=("num_classes",))
def softmax_forward(x_ncl, params, *, num_classes):
    """x_ncl: (N, C_in, L) float32 (PyTorch layout). Returns (N, num_classes) logits."""
    n, c_in, l = x_ncl.shape
    l1 = _conv_out_len(l, 3, 2)
    l2 = _conv_out_len(l1, 3, 2)
    l3 = _conv_out_len(l2, 3, 2)
    # PyTorch squeeze(dim=2) only matches `features -> (N, 32)` if the conv stack
    # reduces the length to exactly 1 (true for seq_len=16).
    assert l3 == 1, f"conv stack must reduce length to 1 (got {l3} for seq_len={l})"

    (w1, b1), (w2, b2), (w3, b3), (w4, b4), (fcw, fcb) = _prepare_params(params, num_classes)

    # NCL -> NLC, pad batch to a tile multiple, layer-1 im2col on the host side.
    x_nlc = jnp.transpose(x_ncl, (0, 2, 1))
    tile_n = min(512, _round_up(n, 8))        # multiple of 8 sublanes; VMEM-safe on v7x
    n_pad = _round_up(n, tile_n)
    if n_pad != n:
        x_nlc = jnp.pad(x_nlc, ((0, n_pad - n), (0, 0), (0, 0)))
    xcol = _im2col_host(x_nlc, 3, 2)          # (N_pad, L1, 3*C_in)

    weights = (w1, b1, w2, b2, w3, b3, w4, b4, fcw, fcb)

    def _full_spec(a):
        return pl.BlockSpec(a.shape, lambda i: (0,) * a.ndim)

    out = pl.pallas_call(
        softmax_net_kernel,
        out_shape=jax.ShapeDtypeStruct((n_pad, _PAD_CLASSES), jnp.float32),
        grid=(n_pad // tile_n,),
        in_specs=[pl.BlockSpec((tile_n, l1, 3 * c_in), lambda i: (i, 0, 0))]
                 + [_full_spec(a) for a in weights],
        out_specs=pl.BlockSpec((tile_n, _PAD_CLASSES), lambda i: (i, 0)),
        compiler_params=pltpu.CompilerParams(dimension_semantics=("parallel",)),
    )(xcol, *weights)

    return out[:n, :num_classes]


def init_params(key, initial_num_channels, num_classes):
    """PyTorch-default-style init, in PyTorch layouts:
       conv (C_out, C_in, K) / (C_out,), fc (num_classes, 32) / (num_classes,)."""
    params = []
    c_in = initial_num_channels
    for c_out, k, _ in _CONV_CFG:
        key, kw, kb = jax.random.split(key, 3)
        bound = 1.0 / float(c_in * k) ** 0.5
        w = jax.random.uniform(kw, (c_out, c_in, k), jnp.float32, -bound, bound)
        b = jax.random.uniform(kb, (c_out,), jnp.float32, -bound, bound)
        params.append((w, b))
        c_in = c_out
    key, kw, kb = jax.random.split(key, 3)
    bound = 1.0 / float(_FC_IN) ** 0.5
    fcw = jax.random.uniform(kw, (num_classes, _FC_IN), jnp.float32, -bound, bound)
    fcb = jax.random.uniform(kb, (num_classes,), jnp.float32, -bound, bound)
    params.append((fcw, fcb))
    return params


def reference_forward(x_ncl, params):
    """Pure-JAX reference with an independent (per-tap) conv formulation."""
    x = jnp.transpose(x_ncl, (0, 2, 1))                    # (N, L, C)
    for (w, b), (_, k, s) in zip(params[:-1], _CONV_CFG):
        wt = jnp.transpose(w, (2, 1, 0))                   # (K, C_in, C_out)
        l_out = _conv_out_len(x.shape[1], k, s)
        y = jnp.stack(
            [sum(x[:, t * s + kk, :] @ wt[kk] for kk in range(k)) + b
             for t in range(l_out)], axis=1)
        x = jnp.maximum(y, 0.0)
    feat = x[:, 0, :]                                      # squeeze(dim=2)
    fcw, fcb = params[-1]
    return feat @ fcw.T + fcb


if __name__ == "__main__":
    initial_num_channels = 4
    num_classes = 10
    batch = 2
    seq_len = 16   # lengths 16 -> 7 -> 3 -> 1 -> 1, so squeeze(dim=2) gives (N, 32)

    key = jax.random.PRNGKey(0)
    key, kx = jax.random.split(key)
    x = jax.random.normal(kx, (batch, initial_num_channels, seq_len), jnp.float32)
    params = init_params(key, initial_num_channels, num_classes)

    out = softmax_forward(x, params, num_classes=num_classes)
    jax.block_until_ready(out)
    assert out.shape == (batch, num_classes)
    assert out.dtype == jnp.float32

    ref = reference_forward(x, params)
    np.testing.assert_allclose(np.asarray(out), np.asarray(ref), rtol=1e-4, atol=1e-4)
    print("KERNEL_OK")
</pallas_src>

<mosaic_0001>
module attributes {stable_mosaic.version = 11 : i64} {
  func.func @softmax_net_kernel(%arg0: i32, %arg1: memref<8x7x12xf32, #tpu.memory_space<vmem>>, %arg2: memref<12x256xf32, #tpu.memory_space<vmem>>, %arg3: memref<1x256xf32, #tpu.memory_space<vmem>>, %arg4: memref<768x128xf32, #tpu.memory_space<vmem>>, %arg5: memref<1x128xf32, #tpu.memory_space<vmem>>, %arg6: memref<384x64xf32, #tpu.memory_space<vmem>>, %arg7: memref<1x64xf32, #tpu.memory_space<vmem>>, %arg8: memref<64x32xf32, #tpu.memory_space<vmem>>, %arg9: memref<1x32xf32, #tpu.memory_space<vmem>>, %arg10: memref<32x128xf32, #tpu.memory_space<vmem>>, %arg11: memref<1x128xf32, #tpu.memory_space<vmem>>, %arg12: memref<8x128xf32, #tpu.memory_space<vmem>>) attributes {dimension_semantics = [#tpu.dimension_semantics<parallel>], iteration_bounds = array<i64: 1>, scalar_prefetch = 0 : i64, scratch_operands = 0 : i64, tpu.core_type = #tpu.core_type<tc>, window_params = [{transform_indices = @transform_0, window_bounds = array<i64: 8, 7, 12>}, {pipeline_mode = #tpu.pipeline_mode<synchronous>, transform_indices = @transform_1, window_bounds = array<i64: 12, 256>}, {pipeline_mode = #tpu.pipeline_mode<synchronous>, transform_indices = @transform_2, window_bounds = array<i64: 1, 256>}, {pipeline_mode = #tpu.pipeline_mode<synchronous>, transform_indices = @transform_3, window_bounds = array<i64: 768, 128>}, {pipeline_mode = #tpu.pipeline_mode<synchronous>, transform_indices = @transform_4, window_bounds = array<i64: 1, 128>}, {pipeline_mode = #tpu.pipeline_mode<synchronous>, transform_indices = @transform_5, window_bounds = array<i64: 384, 64>}, {pipeline_mode = #tpu.pipeline_mode<synchronous>, transform_indices = @transform_6, window_bounds = array<i64: 1, 64>}, {pipeline_mode = #tpu.pipeline_mode<synchronous>, transform_indices = @transform_7, window_bounds = array<i64: 64, 32>}, {pipeline_mode = #tpu.pipeline_mode<synchronous>, transform_indices = @transform_8, window_bounds = array<i64: 1, 32>}, {pipeline_mode = #tpu.pipeline_mode<synchronous>, transform_indices = @transform_9, window_bounds = array<i64: 32, 128>}, {pipeline_mode = #tpu.pipeline_mode<synchronous>, transform_indices = @transform_10, window_bounds = array<i64: 1, 128>}, {transform_indices = @transform_11, window_bounds = array<i64: 8, 128>}]} {
    %c0 = arith.constant 0 : index
    %c0_0 = arith.constant 0 : index
    %c0_1 = arith.constant 0 : index
    %0 = vector.load %arg1[%c0, %c0_0, %c0_1] : memref<8x7x12xf32, #tpu.memory_space<vmem>>, vector<8x7x12xf32>
    %1 = vector.shape_cast %0 : vector<8x7x12xf32> to vector<56x12xf32>
    %c0_2 = arith.constant 0 : index
    %c0_3 = arith.constant 0 : index
    %2 = vector.load %arg2[%c0_2, %c0_3] : memref<12x256xf32, #tpu.memory_space<vmem>>, vector<12x256xf32>
    %cst = arith.constant dense<0.000000e+00> : vector<56x256xf32>
    %3 = tpu.matmul %1, %2, %cst {dimension_numbers = #tpu.dot_dimension_numbers<[1], [0], [0], [1], [0, 0, 1, 1], [], []>} : vector<56x12xf32>, vector<12x256xf32>, vector<56x256xf32> -> vector<56x256xf32>
    %c0_4 = arith.constant 0 : index
    %c0_5 = arith.constant 0 : index
    %4 = vector.load %arg3[%c0_4, %c0_5] : memref<1x256xf32, #tpu.memory_space<vmem>>, vector<1x256xf32>
    %5 = vector.broadcast %4 : vector<1x256xf32> to vector<56x256xf32>
    %6 = arith.addf %3, %5 : vector<56x256xf32>
    %cst_6 = arith.constant 0.000000e+00 : f32
    %7 = vector.broadcast %cst_6 : f32 to vector<56x256xf32>
    %8 = arith.maximumf %6, %7 : vector<56x256xf32>
    %9 = vector.shape_cast %8 : vector<56x256xf32> to vector<8x7x256xf32>
    %10 = vector.extract_strided_slice %9 {offsets = [0, 0, 0], sizes = [8, 1, 256], strides = [1, 1, 1]} : vector<8x7x256xf32> to vector<8x1x256xf32>
    %11 = vector.shape_cast %10 : vector<8x1x256xf32> to vector<8x256xf32>
    %12 = vector.extract_strided_slice %9 {offsets = [0, 1, 0], sizes = [8, 1, 256], strides = [1, 1, 1]} : vector<8x7x256xf32> to vector<8x1x256xf32>
    %13 = vector.shape_cast %12 : vector<8x1x256xf32> to vector<8x256xf32>
    %14 = vector.extract_strided_slice %9 {offsets = [0, 2, 0], sizes = [8, 1, 256], strides = [1, 1, 1]} : vector<8x7x256xf32> to vector<8x1x256xf32>
    %15 = vector.shape_cast %14 : vector<8x1x256xf32> to vector<8x256xf32>
    %16 = tpu.concatenate %11, %13, %15 in 1 : vector<8x256xf32>, vector<8x256xf32>, vector<8x256xf32> -> vector<8x768xf32>
    %17 = vector.extract_strided_slice %9 {offsets = [0, 2, 0], sizes = [8, 1, 256], strides = [1, 1, 1]} : vector<8x7x256xf32> to vector<8x1x256xf32>
    %18 = vector.shape_cast %17 : vector<8x1x256xf32> to vector<8x256xf32>
    %19 = vector.extract_strided_slice %9 {offsets = [0, 3, 0], sizes = [8, 1, 256], strides = [1, 1, 1]} : vector<8x7x256xf32> to vector<8x1x256xf32>
    %20 = vector.shape_cast %19 : vector<8x1x256xf32> to vector<8x256xf32>
    %21 = vector.extract_strided_slice %9 {offsets = [0, 4, 0], sizes = [8, 1, 256], strides = [1, 1, 1]} : vector<8x7x256xf32> to vector<8x1x256xf32>
    %22 = vector.shape_cast %21 : vector<8x1x256xf32> to vector<8x256xf32>
    %23 = tpu.concatenate %18, %20, %22 in 1 : vector<8x256xf32>, vector<8x256xf32>, vector<8x256xf32> -> vector<8x768xf32>
    %24 = vector.extract_strided_slice %9 {offsets = [0, 4, 0], sizes = [8, 1, 256], strides = [1, 1, 1]} : vector<8x7x256xf32> to vector<8x1x256xf32>
    %25 = vector.shape_cast %24 : vector<8x1x256xf32> to vector<8x256xf32>
    %26 = vector.extract_strided_slice %9 {offsets = [0, 5, 0], sizes = [8, 1, 256], strides = [1, 1, 1]} : vector<8x7x256xf32> to vector<8x1x256xf32>
    %27 = vector.shape_cast %26 : vector<8x1x256xf32> to vector<8x256xf32>
    %28 = vector.extract_strided_slice %9 {offsets = [0, 6, 0], sizes = [8, 1, 256], strides = [1, 1, 1]} : vector<8x7x256xf32> to vector<8x1x256xf32>
    %29 = vector.shape_cast %28 : vector<8x1x256xf32> to vector<8x256xf32>
    %30 = tpu.concatenate %25, %27, %29 in 1 : vector<8x256xf32>, vector<8x256xf32>, vector<8x256xf32> -> vector<8x768xf32>
    %31 = vector.shape_cast %16 : vector<8x768xf32> to vector<8x1x768xf32>
    %32 = vector.shape_cast %23 : vector<8x768xf32> to vector<8x1x768xf32>
    %33 = vector.shape_cast %30 : vector<8x768xf32> to vector<8x1x768xf32>
    %34 = tpu.concatenate %31, %32, %33 in 1 : vector<8x1x768xf32>, vector<8x1x768xf32>, vector<8x1x768xf32> -> vector<8x3x768xf32>
    %35 = vector.shape_cast %34 : vector<8x3x768xf32> to vector<24x768xf32>
    %c0_7 = arith.constant 0 : index
    %c0_8 = arith.constant 0 : index
    %36 = vector.load %arg4[%c0_7, %c0_8] : memref<768x128xf32, #tpu.memory_space<vmem>>, vector<768x128xf32>
    %cst_9 = arith.constant dense<0.000000e+00> : vector<24x128xf32>
    %37 = tpu.matmul %35, %36, %cst_9 {dimension_numbers = #tpu.dot_dimension_numbers<[1], [0], [0], [1], [0, 0, 1, 1], [], []>} : vector<24x768xf32>, vector<768x128xf32>, vector<24x128xf32> -> vector<24x128xf32>
    %c0_10 = arith.constant 0 : index
    %c0_11 = arith.constant 0 : index
    %38 = vector.load %arg5[%c0_10, %c0_11] : memref<1x128xf32, #tpu.memory_space<vmem>>, vector<1x128xf32>
    %39 = vector.broadcast %38 : vector<1x128xf32> to vector<24x128xf32>
    %40 = arith.addf %37, %39 : vector<24x128xf32>
    %cst_12 = arith.constant 0.000000e+00 : f32
    %41 = vector.broadcast %cst_12 : f32 to vector<24x128xf32>
    %42 = arith.maximumf %40, %41 : vector<24x128xf32>
    %43 = vector.shape_cast %42 : vector<24x128xf32> to vector<8x3x128xf32>
    %44 = vector.extract_strided_slice %43 {offsets = [0, 0, 0], sizes = [8, 1, 128], strides = [1, 1, 1]} : vector<8x3x128xf32> to vector<8x1x128xf32>
    %45 = vector.shape_cast %44 : vector<8x1x128xf32> to vector<8x128xf32>
    %46 = vector.extract_strided_slice %43 {offsets = [0, 1, 0], sizes = [8, 1, 128], strides = [1, 1, 1]} : vector<8x3x128xf32> to vector<8x1x128xf32>
    %47 = vector.shape_cast %46 : vector<8x1x128xf32> to vector<8x128xf32>
    %48 = vector.extract_strided_slice %43 {offsets = [0, 2, 0], sizes = [8, 1, 128], strides = [1, 1, 1]} : vector<8x3x128xf32> to vector<8x1x128xf32>
    %49 = vector.shape_cast %48 : vector<8x1x128xf32> to vector<8x128xf32>
    %50 = tpu.concatenate %45, %47, %49 in 1 : vector<8x128xf32>, vector<8x128xf32>, vector<8x128xf32> -> vector<8x384xf32>
    %51 = vector.shape_cast %50 : vector<8x384xf32> to vector<8x1x384xf32>
    %52 = vector.shape_cast %51 : vector<8x1x384xf32> to vector<8x384xf32>
    %c0_13 = arith.constant 0 : index
    %c0_14 = arith.constant 0 : index
    %53 = vector.load %arg6[%c0_13, %c0_14] : memref<384x64xf32, #tpu.memory_space<vmem>>, vector<384x64xf32>
    %cst_15 = arith.constant dense<0.000000e+00> : vector<8x64xf32>
    %54 = tpu.matmul %52, %53, %cst_15 {dimension_numbers = #tpu.dot_dimension_numbers<[1], [0], [0], [1], [0, 0, 1, 1], [], []>} : vector<8x384xf32>, vector<384x64xf32>, vector<8x64xf32> -> vector<8x64xf32>
    %c0_16 = arith.constant 0 : index
    %c0_17 = arith.constant 0 : index
    %55 = vector.load %arg7[%c0_16, %c0_17] : memref<1x64xf32, #tpu.memory_space<vmem>>, vector<1x64xf32>
    %56 = vector.broadcast %55 : vector<1x64xf32> to vector<8x64xf32>
    %57 = arith.addf %54, %56 : vector<8x64xf32>
    %cst_18 = arith.constant 0.000000e+00 : f32
    %58 = vector.broadcast %cst_18 : f32 to vector<8x64xf32>
    %59 = arith.maximumf %57, %58 : vector<8x64xf32>
    %c0_19 = arith.constant 0 : index
    %c0_20 = arith.constant 0 : index
    %60 = vector.load %arg8[%c0_19, %c0_20] : memref<64x32xf32, #tpu.memory_space<vmem>>, vector<64x32xf32>
    %cst_21 = arith.constant dense<0.000000e+00> : vector<8x32xf32>
    %61 = tpu.matmul %59, %60, %cst_21 {dimension_numbers = #tpu.dot_dimension_numbers<[1], [0], [0], [1], [0, 0, 1, 1], [], []>} : vector<8x64xf32>, vector<64x32xf32>, vector<8x32xf32> -> vector<8x32xf32>
    %c0_22 = arith.constant 0 : index
    %c0_23 = arith.constant 0 : index
    %62 = vector.load %arg9[%c0_22, %c0_23] : memref<1x32xf32, #tpu.memory_space<vmem>>, vector<1x32xf32>
    %63 = vector.broadcast %62 : vector<1x32xf32> to vector<8x32xf32>
    %64 = arith.addf %61, %63 : vector<8x32xf32>
    %cst_24 = arith.constant 0.000000e+00 : f32
    %65 = vector.broadcast %cst_24 : f32 to vector<8x32xf32>
    %66 = arith.maximumf %64, %65 : vector<8x32xf32>
    %c0_25 = arith.constant 0 : index
    %c0_26 = arith.constant 0 : index
    %67 = vector.load %arg10[%c0_25, %c0_26] : memref<32x128xf32, #tpu.memory_space<vmem>>, vector<32x128xf32>
    %cst_27 = arith.constant dense<0.000000e+00> : vector<8x128xf32>
    %68 = tpu.matmul %66, %67, %cst_27 {dimension_numbers = #tpu.dot_dimension_numbers<[1], [0], [0], [1], [0, 0, 1, 1], [], []>} : vector<8x32xf32>, vector<32x128xf32>, vector<8x128xf32> -> vector<8x128xf32>
    %c0_28 = arith.constant 0 : index
    %c0_29 = arith.constant 0 : index
    %69 = vector.load %arg11[%c0_28, %c0_29] : memref<1x128xf32, #tpu.memory_space<vmem>>, vector<1x128xf32>
    %70 = vector.broadcast %69 : vector<1x128xf32> to vector<8x128xf32>
    %71 = arith.addf %68, %70 : vector<8x128xf32>
    %c0_30 = arith.constant 0 : index
    %c0_31 = arith.constant 0 : index
    %72 = vector.load %arg12[%c0_30, %c0_31] : memref<8x128xf32, #tpu.memory_space<vmem>>, vector<8x128xf32>
    tpu.vector_store %arg12[%c0_30, %c0_31], %71 {strides = array<i32>} : memref<8x128xf32, #tpu.memory_space<vmem>>, vector<8x128xf32>,
    return
  }
  func.func @transform_0(%arg0: i32) -> (i32, i32, i32) {
    %c0_i32 = arith.constant 0 : i32
    %c0_i32_0 = arith.constant 0 : i32
    %c0_i32_1 = arith.constant 0 : i32
    return %arg0, %c0_i32, %c0_i32_0 : i32, i32, i32
  }
  func.func @transform_1(%arg0: i32) -> (i32, i32) {
    %c0_i32 = arith.constant 0 : i32
    %c0_i32_0 = arith.constant 0 : i32
    %c0_i32_1 = arith.constant 0 : i32
    return %c0_i32, %c0_i32_0 : i32, i32
  }
  func.func @transform_2(%arg0: i32) -> (i32, i32) {
    %c0_i32 = arith.constant 0 : i32
    %c0_i32_0 = arith.constant 0 : i32
    %c0_i32_1 = arith.constant 0 : i32
    return %c0_i32, %c0_i32_0 : i32, i32
  }
  func.func @transform_3(%arg0: i32) -> (i32, i32) {
    %c0_i32 = arith.constant 0 : i32
    %c0_i32_0 = arith.constant 0 : i32
    %c0_i32_1 = arith.constant 0 : i32
    return %c0_i32, %c0_i32_0 : i32, i32
  }
  func.func @transform_4(%arg0: i32) -> (i32, i32) {
    %c0_i32 = arith.constant 0 : i32
    %c0_i32_0 = arith.constant 0 : i32
    %c0_i32_1 = arith.constant 0 : i32
    return %c0_i32, %c0_i32_0 : i32, i32
  }
  func.func @transform_5(%arg0: i32) -> (i32, i32) {
    %c0_i32 = arith.constant 0 : i32
    %c0_i32_0 = arith.constant 0 : i32
    %c0_i32_1 = arith.constant 0 : i32
    return %c0_i32, %c0_i32_0 : i32, i32
  }
  func.func @transform_6(%arg0: i32) -> (i32, i32) {
    %c0_i32 = arith.constant 0 : i32
    %c0_i32_0 = arith.constant 0 : i32
    %c0_i32_1 = arith.constant 0 : i32
    return %c0_i32, %c0_i32_0 : i32, i32
  }
  func.func @transform_7(%arg0: i32) -> (i32, i32) {
    %c0_i32 = arith.constant 0 : i32
    %c0_i32_0 = arith.constant 0 : i32
    %c0_i32_1 = arith.constant 0 : i32
    return %c0_i32, %c0_i32_0 : i32, i32
  }
  func.func @transform_8(%arg0: i32) -> (i32, i32) {
    %c0_i32 = arith.constant 0 : i32
    %c0_i32_0 = arith.constant 0 : i32
    %c0_i32_1 = arith.constant 0 : i32
    return %c0_i32, %c0_i32_0 : i32, i32
  }
  func.func @transform_9(%arg0: i32) -> (i32, i32) {
    %c0_i32 = arith.constant 0 : i32
    %c0_i32_0 = arith.constant 0 : i32
    %c0_i32_1 = arith.constant 0 : i32
    return %c0_i32, %c0_i32_0 : i32, i32
  }
  func.func @transform_10(%arg0: i32) -> (i32, i32) {
    %c0_i32 = arith.constant 0 : i32
    %c0_i32_0 = arith.constant 0 : i32
    %c0_i32_1 = arith.constant 0 : i32
    return %c0_i32, %c0_i32_0 : i32, i32
  }
  func.func @transform_11(%arg0: i32) -> (i32, i32) {
    %c0_i32 = arith.constant 0 : i32
    %c0_i32_0 = arith.constant 0 : i32
    return %arg0, %c0_i32 : i32, i32
  }
}

</mosaic_0001>

<llo_original>
// kernel: softmax_forward.1
$region0: #{softmax_forward.1}
  #allocation0 [shape = 'u32[]', space=smem, size = 0x4, offset = 0x4, fixed_abs, tag = 'smem constant byte address 0x4 - core index']
  #allocation1 [shape = 'u32[144,128]{1,0:T(1,128)}', space=vmem, size = 0x12000, scoped, tag = 'internal scratch']
  %s0 = inlined_call_operand.vmem [shape: f32[8,7,12], index: 0, kind: input, shape index: {}]
  %s1 = inlined_call_operand.vmem [shape: f32[12,256], index: 1, kind: input, shape index: {}]
  %s2 = inlined_call_operand.vmem [shape: f32[1,256], index: 2, kind: input, shape index: {}]
  %s3 = inlined_call_operand.vmem [shape: f32[768,128], index: 3, kind: input, shape index: {}]
  %s4 = inlined_call_operand.vmem [shape: f32[1,128], index: 4, kind: input, shape index: {}]
  %s5 = inlined_call_operand.vmem [shape: f32[384,64], index: 5, kind: input, shape index: {}]
  %s6 = inlined_call_operand.vmem [shape: f32[1,64], index: 6, kind: input, shape index: {}]
  %s7 = inlined_call_operand.vmem [shape: f32[64,32], index: 7, kind: input, shape index: {}]
  %s8 = inlined_call_operand.vmem [shape: f32[1,32], index: 8, kind: input, shape index: {}]
  %s9 = inlined_call_operand.vmem [shape: f32[32,128], index: 9, kind: input, shape index: {}]
  %s10 = inlined_call_operand.vmem [shape: f32[1,128], index: 10, kind: input, shape index: {}]
  %s11 = inlined_call_operand.vmem [shape: f32[8,128], index: 11, kind: output, shape index: {}]
  %s12 = sld [smem:[#allocation0]]
  $region54: #{softmax_forward.1} parent=0
    _
  %s14 = ssub.s32 1, %s12
  %s15 = scalar_select 0, %s14, %s12
  // Predicated region
  $region2: #{softmax_forward.1} parent=0 // pred_check
    _
  $region3: #{softmax_forward.1} parent=0 // pred_check_branch
    %17 = sbr.rel (0) target = $region5
  $region4: #{softmax_forward.1} parent=0 // pred_region
    _
  $region5: #{softmax_forward.1} parent=0 // pred_fallthru
    _
  // Predicated region
  $region6: #{softmax_forward.1} parent=0 // pred_check
    _
  $region7: #{softmax_forward.1} parent=0 // pred_check_branch
    %19 = sbr.rel (0) target = $region9
  $region8: #{softmax_forward.1} parent=0 // pred_region
    _
  $region9: #{softmax_forward.1} parent=0 // pred_fallthru
    _
  // Predicated region
  $region10: #{softmax_forward.1} parent=0 // pred_check
    _
  $region11: #{softmax_forward.1} parent=0 // pred_check_branch
    %21 = sbr.rel (0) target = $region13
  $region12: #{softmax_forward.1} parent=0 // pred_region
    _
  $region13: #{softmax_forward.1} parent=0 // pred_fallthru
    _
  // Predicated region
  $region14: #{softmax_forward.1} parent=0 // pred_check
    _
  $region15: #{softmax_forward.1} parent=0 // pred_check_branch
    %23 = sbr.rel (0) target = $region17
  $region16: #{softmax_forward.1} parent=0 // pred_region
    _
  $region17: #{softmax_forward.1} parent=0 // pred_fallthru
    _
  // Predicated region
  $region18: #{softmax_forward.1} parent=0 // pred_check
    _
  $region19: #{softmax_forward.1} parent=0 // pred_check_branch
    %25 = sbr.rel (0) target = $region21
  $region20: #{softmax_forward.1} parent=0 // pred_region
    _
  $region21: #{softmax_forward.1} parent=0 // pred_fallthru
    _
  // Predicated region
  $region22: #{softmax_forward.1} parent=0 // pred_check
    _
  $region23: #{softmax_forward.1} parent=0 // pred_check_branch
    %27 = sbr.rel (0) target = $region25
  $region24: #{softmax_forward.1} parent=0 // pred_region
    _
  $region25: #{softmax_forward.1} parent=0 // pred_fallthru
    _
  // Predicated region
  $region26: #{softmax_forward.1} parent=0 // pred_check
    _
  $region27: #{softmax_forward.1} parent=0 // pred_check_branch
    %29 = sbr.rel (0) target = $region29
  $region28: #{softmax_forward.1} parent=0 // pred_region
    _
  $region29: #{softmax_forward.1} parent=0 // pred_fallthru
    _
  // Predicated region
  $region30: #{softmax_forward.1} parent=0 // pred_check
    _
  $region31: #{softmax_forward.1} parent=0 // pred_check_branch
    %31 = sbr.rel (0) target = $region33
  $region32: #{softmax_forward.1} parent=0 // pred_region
    _
  $region33: #{softmax_forward.1} parent=0 // pred_fallthru
    _
  // Predicated region
  $region34: #{softmax_forward.1} parent=0 // pred_check
    _
  $region35: #{softmax_forward.1} parent=0 // pred_check_branch
    %33 = sbr.rel (0) target = $region37
  $region36: #{softmax_forward.1} parent=0 // pred_region
    _
  $region37: #{softmax_forward.1} parent=0 // pred_fallthru
    _
  // Predicated region
  $region38: #{softmax_forward.1} parent=0 // pred_check
    _
  $region39: #{softmax_forward.1} parent=0 // pred_check_branch
    %35 = sbr.rel (0) target = $region41
  $region40: #{softmax_forward.1} parent=0 // pred_region
    _
  $region41: #{softmax_forward.1} parent=0 // pred_fallthru
    _
  // Predicated region
  $region42: #{softmax_forward.1} parent=0 // pred_check
    _
  $region43: #{softmax_forward.1} parent=0 // pred_check_branch
    %37 = sbr.rel (0) target = $region45
  $region44: #{softmax_forward.1} parent=0 // pred_region
    _
  $region45: #{softmax_forward.1} parent=0 // pred_fallthru
    _
  %v38 = vld [vmem:[%s0] sm:$0x7f]
  %v39 = vld [vmem:[%s0 + $0x8] sm:$0x7f]
  %v40 = vld [vmem:[%s0 + $0x10] sm:$0x7f]
  %v41 = vld [vmem:[%s0 + $0x18] sm:$0x7f]
  %v42 = vld [vmem:[%s0 + $0x20] sm:$0x7f]
  %v43 = vld [vmem:[%s0 + $0x28] sm:$0x7f]
  %v44 = vld [vmem:[%s0 + $0x30] sm:$0x7f]
  %v45 = vld [vmem:[%s0 + $0x38] sm:$0x7f]
  %v54 = vcombine.high %v38, %v38
  %v56 = vunpack.c.l.s4 1966171168
  %v57 = vunpack.c.0.s8 %v56
  %v58 = vlaneseq
  %v59 = vshrl.u32 %v58, 7
  %v60 = vsub.s32 %v57, %v59
  %v61 = vrot.slane %v38, %v60
  %v63 = vunpack.c.l.s4 1966171168
  %v64 = vunpack.c.0.s8 %v63
  %v65 = vlaneseq
  %v66 = vshrl.u32 %v65, 7
  %v67 = vsub.s32 %v64, %v66
  %v68 = vrot.slane %v54, %v67
  %v69 = vcombine.high %v61, %v61
  %v70 = vcombine.high %v68, %v68
  %v72 = vunpack.c.l.s4 1966171168
  %v73 = vunpack.c.0.s8 %v72
  %v74 = vlaneseq
  %v75 = vshrl.u32 %v74, 7
  %v76 = vsub.s32 %v73, %v75
  %v77 = vrot.slane %v61, %v76
  %v79 = vunpack.c.l.s4 1966171168
  %v80 = vunpack.c.0.s8 %v79
  %v81 = vlaneseq
  %v82 = vshrl.u32 %v81, 7
  %v83 = vsub.s32 %v80, %v82
  %v84 = vrot.slane %v68, %v83
  %v86 = vunpack.c.l.s4 1966171168
  %v87 = vunpack.c.0.s8 %v86
  %v88 = vlaneseq
  %v89 = vshrl.u32 %v88, 7
  %v90 = vsub.s32 %v87, %v89
  %v91 = vrot.slane %v69, %v90
  %v93 = vunpack.c.l.s4 1966171168
  %v94 = vunpack.c.0.s8 %v93
  %v95 = vlaneseq
  %v96 = vshrl.u32 %v95, 7
  %v97 = vsub.s32 %v94, %v96
  %v98 = vrot.slane %v70, %v97
  %v99 = vcombine.high %v77, %v77
  %v100 = vcombine.high %v84, %v84
  %v101 = vcombine.high %v91, %v91
  %v102 = vcombine.high %v39, %v39
  %v104 = vunpack.c.l.s4 1966171168
  %v105 = vunpack.c.0.s8 %v104
  %v106 = vlaneseq
  %v107 = vshrl.u32 %v106, 7
  %v108 = vsub.s32 %v105, %v107
  %v109 = vrot.slane %v39, %v108
  %v111 = vunpack.c.l.s4 1966171168
  %v112 = vunpack.c.0.s8 %v111
  %v113 = vlaneseq
  %v114 = vshrl.u32 %v113, 7
  %v115 = vsub.s32 %v112, %v114
  %v116 = vrot.slane %v102, %v115
  %v117 = vcombine.high %v109, %v109
  %v118 = vcombine.high %v116, %v116
  %v120 = vunpack.c.l.s4 1966171168
  %v121 = vunpack.c.0.s8 %v120
  %v122 = vlaneseq
  %v123 = vshrl.u32 %v122, 7
  %v124 = vsub.s32 %v121, %v123
  %v125 = vrot.slane %v109, %v124
  %v127 = vunpack.c.l.s4 1966171168
  %v128 = vunpack.c.0.s8 %v127
  %v129 = vlaneseq
  %v130 = vshrl.u32 %v129, 7
  %v131 = vsub.s32 %v128, %v130
  %v132 = vrot.slane %v116, %v131
  %v134 = vunpack.c.l.s4 1966171168
  %v135 = vunpack.c.0.s8 %v134
  %v136 = vlaneseq
  %v137 = vshrl.u32 %v136, 7
  %v138 = vsub.s32 %v135, %v137
  %v139 = vrot.slane %v117, %v138
  %v141 = vunpack.c.l.s4 1966171168
  %v142 = vunpack.c.0.s8 %v141
  %v143 = vlaneseq
  %v144 = vshrl.u32 %v143, 7
  %v145 = vsub.s32 %v142, %v144
  %v146 = vrot.slane %v118, %v145
  %v147 = vcombine.high %v125, %v125
  %v148 = vcombine.high %v132, %v132
  %v149 = vcombine.high %v139, %v139
  %v150 = vcombine.high %v40, %v40
  %v152 = vunpack.c.l.s4 1966171168
  %v153 = vunpack.c.0.s8 %v152
  %v154 = vlaneseq
  %v155 = vshrl.u32 %v154, 7
  %v156 = vsub.s32 %v153, %v155
  %v157 = vrot.slane %v40, %v156
  %v159 = vunpack.c.l.s4 1966171168
  %v160 = vunpack.c.0.s8 %v159
  %v161 = vlaneseq
  %v162 = vshrl.u32 %v161, 7
  %v163 = vsub.s32 %v160, %v162
  %v164 = vrot.slane %v150, %v163
  %v165 = vcombine.high %v157, %v157
  %v166 = vcombine.high %v164, %v164
  %v168 = vunpack.c.l.s4 1966171168
  %v169 = vunpack.c.0.s8 %v168
  %v170 = vlaneseq
  %v171 = vshrl.u32 %v170, 7
  %v172 = vsub.s32 %v169, %v171
  %v173 = vrot.slane %v157, %v172
  %v175 = vunpack.c.l.s4 1966171168
  %v176 = vunpack.c.0.s8 %v175
  %v177 = vlaneseq
  %v178 = vshrl.u32 %v177, 7
  %v179 = vsub.s32 %v176, %v178
  %v180 = vrot.slane %v164, %v179
  %v182 = vunpack.c.l.s4 1966171168
  %v183 = vunpack.c.0.s8 %v182
  %v184 = vlaneseq
  %v185 = vshrl.u32 %v184, 7
  %v186 = vsub.s32 %v183, %v185
  %v187 = vrot.slane %v165, %v186
  %v189 = vunpack.c.l.s4 1966171168
  %v190 = vunpack.c.0.s8 %v189
  %v191 = vlaneseq
  %v192 = vshrl.u32 %v191, 7
  %v193 = vsub.s32 %v190, %v192
  %v194 = vrot.slane %v166, %v193
  %v195 = vcombine.high %v173, %v173
  %v196 = vcombine.high %v180, %v180
  %v197 = vcombine.high %v187, %v187
  %v198 = vcombine.high %v41, %v41
  %v200 = vunpack.c.l.s4 1966171168
  %v201 = vunpack.c.0.s8 %v200
  %v202 = vlaneseq
  %v203 = vshrl.u32 %v202, 7
  %v204 = vsub.s32 %v201, %v203
  %v205 = vrot.slane %v41, %v204
  %v207 = vunpack.c.l.s4 1966171168
  %v208 = vunpack.c.0.s8 %v207
  %v209 = vlaneseq
  %v210 = vshrl.u32 %v209, 7
  %v211 = vsub.s32 %v208, %v210
  %v212 = vrot.slane %v198, %v211
  %v213 = vcombine.high %v205, %v205
  %v214 = vcombine.high %v212, %v212
  %v216 = vunpack.c.l.s4 1966171168
  %v217 = vunpack.c.0.s8 %v216
  %v218 = vlaneseq
  %v219 = vshrl.u32 %v218, 7
  %v220 = vsub.s32 %v217, %v219
  %v221 = vrot.slane %v205, %v220
  %v223 = vunpack.c.l.s4 1966171168
  %v224 = vunpack.c.0.s8 %v223
  %v225 = vlaneseq
  %v226 = vshrl.u32 %v225, 7
  %v227 = vsub.s32 %v224, %v226
  %v228 = vrot.slane %v212, %v227
  %v230 = vunpack.c.l.s4 1966171168
  %v231 = vunpack.c.0.s8 %v230
  %v232 = vlaneseq
  %v233 = vshrl.u32 %v232, 7
  %v234 = vsub.s32 %v231, %v233
  %v235 = vrot.slane %v213, %v234
  %v237 = vunpack.c.l.s4 1966171168
  %v238 = vunpack.c.0.s8 %v237
  %v239 = vlaneseq
  %v240 = vshrl.u32 %v239, 7
  %v241 = vsub.s32 %v238, %v240
  %v242 = vrot.slane %v214, %v241
  %v243 = vcombine.high %v221, %v221
  %v244 = vcombine.high %v228, %v228
  %v245 = vcombine.high %v235, %v235
  %v246 = vcombine.high %v42, %v42
  %v248 = vunpack.c.l.s4 1966171168
  %v249 = vunpack.c.0.s8 %v248
  %v250 = vlaneseq
  %v251 = vshrl.u32 %v250, 7
  %v252 = vsub.s32 %v249, %v251
  %v253 = vrot.slane %v42, %v252
  %v255 = vunpack.c.l.s4 1966171168
  %v256 = vunpack.c.0.s8 %v255
  %v257 = vlaneseq
  %v258 = vshrl.u32 %v257, 7
  %v259 = vsub.s32 %v256, %v258
  %v260 = vrot.slane %v246, %v259
  %v261 = vcombine.high %v253, %v253
  %v262 = vcombine.high %v260, %v260
  %v264 = vunpack.c.l.s4 1966171168
  %v265 = vunpack.c.0.s8 %v264
  %v266 = vlaneseq
  %v267 = vshrl.u32 %v266, 7
  %v268 = vsub.s32 %v265, %v267
  %v269 = vrot.slane %v253, %v268
  %v271 = vunpack.c.l.s4 1966171168
  %v272 = vunpack.c.0.s8 %v271
  %v273 = vlaneseq
  %v274 = vshrl.u32 %v273, 7
  %v275 = vsub.s32 %v272, %v274
  %v276 = vrot.slane %v260, %v275
  %v278 = vunpack.c.l.s4 1966171168
  %v279 = vunpack.c.0.s8 %v278
  %v280 = vlaneseq
  %v281 = vshrl.u32 %v280, 7
  %v282 = vsub.s32 %v279, %v281
  %v283 = vrot.slane %v261, %v282
  %v285 = vunpack.c.l.s4 1966171168
  %v286 = vunpack.c.0.s8 %v285
  %v287 = vlaneseq
  %v288 = vshrl.u32 %v287, 7
  %v289 = vsub.s32 %v286, %v288
  %v290 = vrot.slane %v262, %v289
  %v291 = vcombine.high %v269, %v269
  %v292 = vcombine.high %v276, %v276
  %v293 = vcombine.high %v283, %v283
  %v294 = vcombine.high %v43, %v43
  %v296 = vunpack.c.l.s4 1966171168
  %v297 = vunpack.c.0.s8 %v296
  %v298 = vlaneseq
  %v299 = vshrl.u32 %v298, 7
  %v300 = vsub.s32 %v297, %v299
  %v301 = vrot.slane %v43, %v300
  %v303 = vunpack.c.l.s4 1966171168
  %v304 = vunpack.c.0.s8 %v303
  %v305 = vlaneseq
  %v306 = vshrl.u32 %v305, 7
  %v307 = vsub.s32 %v304, %v306
  %v308 = vrot.slane %v294, %v307
  %v309 = vcombine.high %v301, %v301
  %v310 = vcombine.high %v308, %v308
  %v312 = vunpack.c.l.s4 1966171168
  %v313 = vunpack.c.0.s8 %v312
  %v314 = vlaneseq
  %v315 = vshrl.u32 %v314, 7
  %v316 = vsub.s32 %v313, %v315
  %v317 = vrot.slane %v301, %v316
  %v319 = vunpack.c.l.s4 1966171168
  %v320 = vunpack.c.0.s8 %v319
  %v321 = vlaneseq
  %v322 = vshrl.u32 %v321, 7
  %v323 = vsub.s32 %v320, %v322
  %v324 = vrot.slane %v308, %v323
  %v326 = vunpack.c.l.s4 1966171168
  %v327 = vunpack.c.0.s8 %v326
  %v328 = vlaneseq
  %v329 = vshrl.u32 %v328, 7
  %v330 = vsub.s32 %v327, %v329
  %v331 = vrot.slane %v309, %v330
  %v333 = vunpack.c.l.s4 1966171168
  %v334 = vunpack.c.0.s8 %v333
  %v335 = vlaneseq
  %v336 = vshrl.u32 %v335, 7
  %v337 = vsub.s32 %v334, %v336
  %v338 = vrot.slane %v310, %v337
  %v339 = vcombine.high %v317, %v317
  %v340 = vcombine.high %v324, %v324
  %v341 = vcombine.high %v331, %v331
  %v342 = vcombine.high %v44, %v44
  %v344 = vunpack.c.l.s4 1966171168
  %v345 = vunpack.c.0.s8 %v344
  %v346 = vlaneseq
  %v347 = vshrl.u32 %v346, 7
  %v348 = vsub.s32 %v345, %v347
  %v349 = vrot.slane %v44, %v348
  %v351 = vunpack.c.l.s4 1966171168
  %v352 = vunpack.c.0.s8 %v351
  %v353 = vlaneseq
  %v354 = vshrl.u32 %v353, 7
  %v355 = vsub.s32 %v352, %v354
  %v356 = vrot.slane %v342, %v355
  %v357 = vcombine.high %v349, %v349
  %v358 = vcombine.high %v356, %v356
  %v360 = vunpack.c.l.s4 1966171168
  %v361 = vunpack.c.0.s8 %v360
  %v362 = vlaneseq
  %v363 = vshrl.u32 %v362, 7
  %v364 = vsub.s32 %v361, %v363
  %v365 = vrot.slane %v349, %v364
  %v367 = vunpack.c.l.s4 1966171168
  %v368 = vunpack.c.0.s8 %v367
  %v369 = vlaneseq
  %v370 = vshrl.u32 %v369, 7
  %v371 = vsub.s32 %v368, %v370
  %v372 = vrot.slane %v356, %v371
  %v374 = vunpack.c.l.s4 1966171168
  %v375 = vunpack.c.0.s8 %v374
  %v376 = vlaneseq
  %v377 = vshrl.u32 %v376, 7
  %v378 = vsub.s32 %v375, %v377
  %v379 = vrot.slane %v357, %v378
  %v381 = vunpack.c.l.s4 1966171168
  %v382 = vunpack.c.0.s8 %v381
  %v383 = vlaneseq
  %v384 = vshrl.u32 %v383, 7
  %v385 = vsub.s32 %v382, %v384
  %v386 = vrot.slane %v358, %v385
  %v387 = vcombine.high %v365, %v365
  %v388 = vcombine.high %v372, %v372
  %v389 = vcombine.high %v379, %v379
  %v390 = vcombine.high %v45, %v45
  %v392 = vunpack.c.l.s4 1966171168
  %v393 = vunpack.c.0.s8 %v392
  %v394 = vlaneseq
  %v395 = vshrl.u32 %v394, 7
  %v396 = vsub.s32 %v393, %v395
  %v397 = vrot.slane %v45, %v396
  %v399 = vunpack.c.l.s4 1966171168
  %v400 = vunpack.c.0.s8 %v399
  %v401 = vlaneseq
  %v402 = vshrl.u32 %v401, 7
  %v403 = vsub.s32 %v400, %v402
  %v404 = vrot.slane %v390, %v403
  %v405 = vcombine.high %v397, %v397
  %v406 = vcombine.high %v404, %v404
  %v408 = vunpack.c.l.s4 1966171168
  %v409 = vunpack.c.0.s8 %v408
  %v410 = vlaneseq
  %v411 = vshrl.u32 %v410, 7
  %v412 = vsub.s32 %v409, %v411
  %v413 = vrot.slane %v397, %v412
  %v415 = vunpack.c.l.s4 1966171168
  %v416 = vunpack.c.0.s8 %v415
  %v417 = vlaneseq
  %v418 = vshrl.u32 %v417, 7
  %v419 = vsub.s32 %v416, %v418
  %v420 = vrot.slane %v404, %v419
  %v422 = vunpack.c.l.s4 1966171168
  %v423 = vunpack.c.0.s8 %v422
  %v424 = vlaneseq
  %v425 = vshrl.u32 %v424, 7
  %v426 = vsub.s32 %v423, %v425
  %v427 = vrot.slane %v405, %v426
  %v429 = vunpack.c.l.s4 1966171168
  %v430 = vunpack.c.0.s8 %v429
  %v431 = vlaneseq
  %v432 = vshrl.u32 %v431, 7
  %v433 = vsub.s32 %v430, %v432
  %v434 = vrot.slane %v406, %v433
  %v435 = vcombine.high %v413, %v413
  %v436 = vcombine.high %v420, %v420
  %v437 = vcombine.high %v427, %v427
  %v438 = vld [vmem:[%s1] sm:$0xff]
  %v439 = vld [vmem:[%s1 + $0x8] sm:$0xff]
  %v440 = vld [vmem:[%s1 + $0x10] sm:$0xf]
  %v441 = vld [vmem:[%s1 + $0x18] sm:$0xf]
  %v442 = vld [vmem:[%s2] sm:$0x3]
  %v444 = vlaneseq
  %v445 = vshrl.u32 %v444, 7
  %v446 = vsub.s32 0, %v445
  %v447 = vrot.slane %v442, %v446
  %v448 = vlaneseq
  %v449 = vshrl.u32 %v448, 7
  %v450 = vsub.s32 1, %v449
  %v451 = vrot.slane %v442, %v450
  %v454 = vcombine.low %v77, %v91
  %v455 = vcombine.low %v99, %v101
  %v456 = vcombine.low %v84, %v98
  %v457 = vcombine.low %v100, %v125
  %v459 = vunpack.c.l.s4 1966171168
  %v460 = vunpack.c.0.s8 %v459
  %v461 = vlaneseq
  %v462 = vshrl.u32 %v461, 7
  %v463 = vsub.s32 %v460, %v462
  %v464 = vrot.slane %v454, %v463
  %v466 = vunpack.c.l.s4 1966171168
  %v467 = vunpack.c.0.s8 %v466
  %v468 = vlaneseq
  %v469 = vshrl.u32 %v468, 7
  %v470 = vsub.s32 %v467, %v469
  %v471 = vrot.slane %v455, %v470
  %v473 = vunpack.c.l.s4 1966171168
  %v474 = vunpack.c.0.s8 %v473
  %v475 = vlaneseq
  %v476 = vshrl.u32 %v475, 7
  %v477 = vsub.s32 %v474, %v476
  %v478 = vrot.slane %v456, %v477
  %v480 = vunpack.c.l.s4 1966171168
  %v481 = vunpack.c.0.s8 %v480
  %v482 = vlaneseq
  %v483 = vshrl.u32 %v482, 7
  %v484 = vsub.s32 %v481, %v483
  %v485 = vrot.slane %v457, %v484
  %v486 = vcombine.low %v464, %v471
  %v487 = vcombine.low %v478, %v485
  %v489 = vunpack.c.l.s4 1966171168
  %v490 = vunpack.c.0.s8 %v489
  %v491 = vlaneseq
  %v492 = vshrl.u32 %v491, 7
  %v493 = vsub.s32 %v490, %v492
  %v494 = vrot.slane %v486, %v493
  %v496 = vunpack.c.l.s4 1966171168
  %v497 = vunpack.c.0.s8 %v496
  %v498 = vlaneseq
  %v499 = vshrl.u32 %v498, 7
  %v500 = vsub.s32 %v497, %v499
  %v501 = vrot.slane %v487, %v500
  %v502 = vcombine.low %v494, %v501
  %v503 = vcombine.low %v139, %v147
  %v504 = vcombine.low %v149, %v132
  %v505 = vcombine.low %v146, %v148
  %v506 = vcombine.low %v173, %v187
  %v508 = vunpack.c.l.s4 1966171168
  %v509 = vunpack.c.0.s8 %v508
  %v510 = vlaneseq
  %v511 = vshrl.u32 %v510, 7
  %v512 = vsub.s32 %v509, %v511
  %v513 = vrot.slane %v503, %v512
  %v515 = vunpack.c.l.s4 1966171168
  %v516 = vunpack.c.0.s8 %v515
  %v517 = vlaneseq
  %v518 = vshrl.u32 %v517, 7
  %v519 = vsub.s32 %v516, %v518
  %v520 = vrot.slane %v504, %v519
  %v522 = vunpack.c.l.s4 1966171168
  %v523 = vunpack.c.0.s8 %v522
  %v524 = vlaneseq
  %v525 = vshrl.u32 %v524, 7
  %v526 = vsub.s32 %v523, %v525
  %v527 = vrot.slane %v505, %v526
  %v529 = vunpack.c.l.s4 1966171168
  %v530 = vunpack.c.0.s8 %v529
  %v531 = vlaneseq
  %v532 = vshrl.u32 %v531, 7
  %v533 = vsub.s32 %v530, %v532
  %v534 = vrot.slane %v506, %v533
  %v535 = vcombine.low %v513, %v520
  %v536 = vcombine.low %v527, %v534
  %v538 = vunpack.c.l.s4 1966171168
  %v539 = vunpack.c.0.s8 %v538
  %v540 = vlaneseq
  %v541 = vshrl.u32 %v540, 7
  %v542 = vsub.s32 %v539, %v541
  %v543 = vrot.slane %v535, %v542
  %v545 = vunpack.c.l.s4 1966171168
  %v546 = vunpack.c.0.s8 %v545
  %v547 = vlaneseq
  %v548 = vshrl.u32 %v547, 7
  %v549 = vsub.s32 %v546, %v548
  %v550 = vrot.slane %v536, %v549
  %v551 = vcombine.low %v543, %v550
  %v552 = vcombine.low %v195, %v197
  %v553 = vcombine.low %v180, %v194
  %v554 = vcombine.low %v196, %v221
  %v555 = vcombine.low %v235, %v243
  %v557 = vunpack.c.l.s4 1966171168
  %v558 = vunpack.c.0.s8 %v557
  %v559 = vlaneseq
  %v560 = vshrl.u32 %v559, 7
  %v561 = vsub.s32 %v558, %v560
  %v562 = vrot.slane %v552, %v561
  %v564 = vunpack.c.l.s4 1966171168
  %v565 = vunpack.c.0.s8 %v564
  %v566 = vlaneseq
  %v567 = vshrl.u32 %v566, 7
  %v568 = vsub.s32 %v565, %v567
  %v569 = vrot.slane %v553, %v568
  %v571 = vunpack.c.l.s4 1966171168
  %v572 = vunpack.c.0.s8 %v571
  %v573 = vlaneseq
  %v574 = vshrl.u32 %v573, 7
  %v575 = vsub.s32 %v572, %v574
  %v576 = vrot.slane %v554, %v575
  %v578 = vunpack.c.l.s4 1966171168
  %v579 = vunpack.c.0.s8 %v578
  %v580 = vlaneseq
  %v581 = vshrl.u32 %v580, 7
  %v582 = vsub.s32 %v579, %v581
  %v583 = vrot.slane %v555, %v582
  %v584 = vcombine.low %v562, %v569
  %v585 = vcombine.low %v576, %v583
  %v587 = vunpack.c.l.s4 1966171168
  %v588 = vunpack.c.0.s8 %v587
  %v589 = vlaneseq
  %v590 = vshrl.u32 %v589, 7
  %v591 = vsub.s32 %v588, %v590
  %v592 = vrot.slane %v584, %v591
  %v594 = vunpack.c.l.s4 1966171168
  %v595 = vunpack.c.0.s8 %v594
  %v596 = vlaneseq
  %v597 = vshrl.u32 %v596, 7
  %v598 = vsub.s32 %v595, %v597
  %v599 = vrot.slane %v585, %v598
  %v600 = vcombine.low %v592, %v599
  %v601 = vcombine.low %v245, %v228
  %v602 = vcombine.low %v242, %v244
  %v603 = vcombine.low %v269, %v283
  %v604 = vcombine.low %v291, %v293
  %v606 = vunpack.c.l.s4 1966171168
  %v607 = vunpack.c.0.s8 %v606
  %v608 = vlaneseq
  %v609 = vshrl.u32 %v608, 7
  %v610 = vsub.s32 %v607, %v609
  %v611 = vrot.slane %v601, %v610
  %v613 = vunpack.c.l.s4 1966171168
  %v614 = vunpack.c.0.s8 %v613
  %v615 = vlaneseq
  %v616 = vshrl.u32 %v615, 7
  %v617 = vsub.s32 %v614, %v616
  %v618 = vrot.slane %v602, %v617
  %v620 = vunpack.c.l.s4 1966171168
  %v621 = vunpack.c.0.s8 %v620
  %v622 = vlaneseq
  %v623 = vshrl.u32 %v622, 7
  %v624 = vsub.s32 %v621, %v623
  %v625 = vrot.slane %v603, %v624
  %v627 = vunpack.c.l.s4 1966171168
  %v628 = vunpack.c.0.s8 %v627
  %v629 = vlaneseq
  %v630 = vshrl.u32 %v629, 7
  %v631 = vsub.s32 %v628, %v630
  %v632 = vrot.slane %v604, %v631
  %v633 = vcombine.low %v611, %v618
  %v634 = vcombine.low %v625, %v632
  %v636 = vunpack.c.l.s4 1966171168
  %v637 = vunpack.c.0.s8 %v636
  %v638 = vlaneseq
  %v639 = vshrl.u32 %v638, 7
  %v640 = vsub.s32 %v637, %v639
  %v641 = vrot.slane %v633, %v640
  %v643 = vunpack.c.l.s4 1966171168
  %v644 = vunpack.c.0.s8 %v643
  %v645 = vlaneseq
  %v646 = vshrl.u32 %v645, 7
  %v647 = vsub.s32 %v644, %v646
  %v648 = vrot.slane %v634, %v647
  %v649 = vcombine.low %v641, %v648
  %v650 = vcombine.low %v276, %v290
  %v651 = vcombine.low %v292, %v317
  %v652 = vcombine.low %v331, %v339
  %v653 = vcombine.low %v341, %v324
  %v655 = vunpack.c.l.s4 1966171168
  %v656 = vunpack.c.0.s8 %v655
  %v657 = vlaneseq
  %v658 = vshrl.u32 %v657, 7
  %v659 = vsub.s32 %v656, %v658
  %v660 = vrot.slane %v650, %v659
  %v662 = vunpack.c.l.s4 1966171168
  %v663 = vunpack.c.0.s8 %v662
  %v664 = vlaneseq
  %v665 = vshrl.u32 %v664, 7
  %v666 = vsub.s32 %v663, %v665
  %v667 = vrot.slane %v651, %v666
  %v669 = vunpack.c.l.s4 1966171168
  %v670 = vunpack.c.0.s8 %v669
  %v671 = vlaneseq
  %v672 = vshrl.u32 %v671, 7
  %v673 = vsub.s32 %v670, %v672
  %v674 = vrot.slane %v652, %v673
  %v676 = vunpack.c.l.s4 1966171168
  %v677 = vunpack.c.0.s8 %v676
  %v678 = vlaneseq
  %v679 = vshrl.u32 %v678, 7
  %v680 = vsub.s32 %v677, %v679
  %v681 = vrot.slane %v653, %v680
  %v682 = vcombine.low %v660, %v667
  %v683 = vcombine.low %v674, %v681
  %v685 = vunpack.c.l.s4 1966171168
  %v686 = vunpack.c.0.s8 %v685
  %v687 = vlaneseq
  %v688 = vshrl.u32 %v687, 7
  %v689 = vsub.s32 %v686, %v688
  %v690 = vrot.slane %v682, %v689
  %v692 = vunpack.c.l.s4 1966171168
  %v693 = vunpack.c.0.s8 %v692
  %v694 = vlaneseq
  %v695 = vshrl.u32 %v694, 7
  %v696 = vsub.s32 %v693, %v695
  %v697 = vrot.slane %v683, %v696
  %v698 = vcombine.low %v690, %v697
  %v699 = vcombine.low %v338, %v340
  %v700 = vcombine.low %v365, %v379
  %v701 = vcombine.low %v387, %v389
  %v702 = vcombine.low %v372, %v386
  %v704 = vunpack.c.l.s4 1966171168
  %v705 = vunpack.c.0.s8 %v704
  %v706 = vlaneseq
  %v707 = vshrl.u32 %v706, 7
  %v708 = vsub.s32 %v705, %v707
  %v709 = vrot.slane %v699, %v708
  %v711 = vunpack.c.l.s4 1966171168
  %v712 = vunpack.c.0.s8 %v711
  %v713 = vlaneseq
  %v714 = vshrl.u32 %v713, 7
  %v715 = vsub.s32 %v712, %v714
  %v716 = vrot.slane %v700, %v715
  %v718 = vunpack.c.l.s4 1966171168
  %v719 = vunpack.c.0.s8 %v718
  %v720 = vlaneseq
  %v721 = vshrl.u32 %v720, 7
  %v722 = vsub.s32 %v719, %v721
  %v723 = vrot.slane %v701, %v722
  %v725 = vunpack.c.l.s4 1966171168
  %v726 = vunpack.c.0.s8 %v725
  %v727 = vlaneseq
  %v728 = vshrl.u32 %v727, 7
  %v729 = vsub.s32 %v726, %v728
  %v730 = vrot.slane %v702, %v729
  %v731 = vcombine.low %v709, %v716
  %v732 = vcombine.low %v723, %v730
  %v734 = vunpack.c.l.s4 1966171168
  %v735 = vunpack.c.0.s8 %v734
  %v736 = vlaneseq
  %v737 = vshrl.u32 %v736, 7
  %v738 = vsub.s32 %v735, %v737
  %v739 = vrot.slane %v731, %v738
  %v741 = vunpack.c.l.s4 1966171168
  %v742 = vunpack.c.0.s8 %v741
  %v743 = vlaneseq
  %v744 = vshrl.u32 %v743, 7
  %v745 = vsub.s32 %v742, %v744
  %v746 = vrot.slane %v732, %v745
  %v747 = vcombine.low %v739, %v746
  %v748 = vcombine.low %v388, %v413
  %v749 = vcombine.low %v427, %v435
  %v750 = vcombine.low %v437, %v420
  %v751 = vcombine.low %v434, %v436
  %v753 = vunpack.c.l.s4 1966171168
  %v754 = vunpack.c.0.s8 %v753
  %v755 = vlaneseq
  %v756 = vshrl.u32 %v755, 7
  %v757 = vsub.s32 %v754, %v756
  %v758 = vrot.slane %v748, %v757
  %v760 = vunpack.c.l.s4 1966171168
  %v761 = vunpack.c.0.s8 %v760
  %v762 = vlaneseq
  %v763 = vshrl.u32 %v762, 7
  %v764 = vsub.s32 %v761, %v763
  %v765 = vrot.slane %v749, %v764
  %v767 = vunpack.c.l.s4 1966171168
  %v768 = vunpack.c.0.s8 %v767
  %v769 = vlaneseq
  %v770 = vshrl.u32 %v769, 7
  %v771 = vsub.s32 %v768, %v770
  %v772 = vrot.slane %v750, %v771
  %v774 = vunpack.c.l.s4 1966171168
  %v775 = vunpack.c.0.s8 %v774
  %v776 = vlaneseq
  %v777 = vshrl.u32 %v776, 7
  %v778 = vsub.s32 %v775, %v777
  %v779 = vrot.slane %v751, %v778
  %v780 = vcombine.low %v758, %v765
  %v781 = vcombine.low %v772, %v779
  %v783 = vunpack.c.l.s4 1966171168
  %v784 = vunpack.c.0.s8 %v783
  %v785 = vlaneseq
  %v786 = vshrl.u32 %v785, 7
  %v787 = vsub.s32 %v784, %v786
  %v788 = vrot.slane %v780, %v787
  %v790 = vunpack.c.l.s4 1966171168
  %v791 = vunpack.c.0.s8 %v790
  %v792 = vlaneseq
  %v793 = vshrl.u32 %v792, 7
  %v794 = vsub.s32 %v791, %v793
  %v795 = vrot.slane %v781, %v794
  %v796 = vcombine.low %v788, %v795
  %vm797 = vcmask 97280
  %v798 = vsel %vm797, %v502, 0
  %v800 = vsel %vm797, %v551, 0
  %v802 = vsel %vm797, %v600, 0
  %v804 = vsel %vm797, %v649, 0
  %v806 = vsel %vm797, %v698, 0
  %v808 = vsel %vm797, %v747, 0
  %v810 = vsel %vm797, %v796, 0
  %vm812 = vcmask 1043456
  %v814 = vsel %vm812, %v440, 0
  %v817 = vsel %vm812, %v441, 0
  %819 = vmatprep.subr.mxu0 %v439
  %820 = vmatpush1.msra.mxu0 %v438
  %821 = vmatprep.subr.mxu0 %v817
  %822 = vmatpush1.msra.mxu0 %v814
  %823 = vmatprep.subr.mxu0 0.0
  %824 = vmatpush1.msra.mxu0 0.0
  %825 = vmatprep.subr.mxu0 0.0
  %826 = vmatpush1.msra.mxu0 0.0
  %827 = vmatprep.subr.mxu0 0.0
  %828 = vmatpush1.msra.mxu0 0.0
  %829 = vmatprep.subr.mxu0 0.0
  %830 = vmatpush1.msra.mxu0 0.0
  %831 = vmatprep.subr.mxu0 0.0
  %832 = vmatpush1.msra.mxu0 0.0
  %833 = vmatprep.subr.mxu0 0.0
  %834 = vmatpush1.msra.mxu0 0.0
  %835 = vmatprep.subr.mxu0 0.0
  %836 = vmatpush1.msra.mxu0 0.0
  %837 = vmatprep.subr.mxu0 0.0
  %838 = vmatpush1.msra.mxu0 0.0
  %839 = vmatprep.subr.mxu0 0.0
  %840 = vmatpush1.msra.mxu0 0.0
  %841 = vmatprep.subr.mxu0 0.0
  %842 = vmatpush1.msra.mxu0 0.0
  %843 = vmatprep.subr.mxu0 0.0
  %844 = vmatpush1.msra.mxu0 0.0
  %845 = vmatprep.subr.mxu0 0.0
  %846 = vmatpush1.msra.mxu0 0.0
  %847 = vmatprep.subr.mxu0 0.0
  %848 = vmatpush1.msra.mxu0 0.0
  %849 = vmatprep.subr.mxu0 0.0
  %850 = vmatpush1.msra.mxu0 0.0
  %851 = vmatprep.subr.mxu0 0.0
  %852 = vmatpush1.msra.mxu0 0.0
  %853 = vmatprep.subr.mxu0 0.0
  %854 = vmatpush1.msra.mxu0 0.0
  %855 = vmatprep.subr.mxu0 0.0
  %856 = vmatpush1.msra.mxu0 0.0
  %857 = vmatprep.subr.mxu0 0.0
  %858 = vmatpush1.msra.mxu0 0.0
  %859 = vmatprep.subr.mxu0 0.0
  %860 = vmatpush1.msra.mxu0 0.0
  %861 = vmatprep.subr.mxu0 0.0
  %862 = vmatpush1.msra.mxu0 0.0
  %863 = vmatprep.subr.mxu0 0.0
  %864 = vmatpush1.msra.mxu0 0.0
  %865 = vmatprep.subr.mxu0 0.0
  %866 = vmatpush1.msra.mxu0 0.0
  %867 = vmatprep.subr.mxu0 0.0
  %868 = vmatpush1.msra.mxu0 0.0
  %869 = vmatprep.subr.mxu0 0.0
  %870 = vmatpush1.msra.mxu0 0.0
  %871 = vmatprep.subr.mxu0 0.0
  %872 = vmatpush1.msra.mxu0 0.0
  %873 = vmatprep.subr.mxu0 0.0
  %874 = vmatpush1.msra.mxu0 0.0
  %875 = vmatprep.subr.mxu0 0.0
  %876 = vmatpush1.msra.mxu0 0.0
  %877 = vmatprep.subr.mxu0 0.0
  %878 = vmatpush1.msra.mxu0 0.0
  %879 = vmatprep.subr.mxu0 0.0
  %880 = vmatpush1.msra.mxu0 0.0
  %881 = vmatprep.subr.mxu0 0.0
  %882 = vmatpush1.msra.mxu0 0.0
  %883 = vmatprep.mubr.f32.mxu0 0.0
  %884 = vmatmul.mubr.f32.gmra.mrb[0].mxu0 %v798
  %v885 = vpop.f32.mrb[0].mxu0
  %v886 = vadd.f32 %v447, %v885
  %v887 = vpop.f32.mrb[0].mxu0
  %v888 = vadd.f32 %v451, %v887
  %889 = vmatprep.mubr.f32.mxu0 0.0
  %890 = vmatmul.mubr.f32.gmra.mrb[0].mxu0 %v800
  %v891 = vpop.f32.mrb[0].mxu0
  %v892 = vadd.f32 %v447, %v891
  %v893 = vpop.f32.mrb[0].mxu0
  %v894 = vadd.f32 %v451, %v893
  %895 = vmatprep.mubr.f32.mxu0 0.0
  %896 = vmatmul.mubr.f32.gmra.mrb[0].mxu0 %v802
  %v897 = vpop.f32.mrb[0].mxu0
  %v898 = vadd.f32 %v447, %v897
  %v899 = vpop.f32.mrb[0].mxu0
  %v900 = vadd.f32 %v451, %v899
  %901 = vmatprep.mubr.f32.mxu0 0.0
  %902 = vmatmul.mubr.f32.gmra.mrb[0].mxu0 %v804
  %v903 = vpop.f32.mrb[0].mxu0
  %v904 = vadd.f32 %v447, %v903
  %v905 = vpop.f32.mrb[0].mxu0
  %v906 = vadd.f32 %v451, %v905
  %907 = vmatprep.mubr.f32.mxu0 0.0
  %908 = vmatmul.mubr.f32.gmra.mrb[0].mxu0 %v806
  %v909 = vpop.f32.mrb[0].mxu0
  %v910 = vadd.f32 %v447, %v909
  %v911 = vpop.f32.mrb[0].mxu0
  %v912 = vadd.f32 %v451, %v911
  %913 = vmatprep.mubr.f32.mxu0 0.0
  %914 = vmatmul.mubr.f32.gmra.mrb[0].mxu0 %v808
  %v915 = vpop.f32.mrb[0].mxu0
  %v916 = vadd.f32 %v447, %v915
  %v917 = vpop.f32.mrb[0].mxu0
  %v918 = vadd.f32 %v451, %v917
  %919 = vmatprep.mubr.f32.mxu0 0.0
  %920 = vmatmul.mubr.f32.gmra.mrb[0].mxu0 %v810
  %v921 = vpop.f32.mrb[0].mxu0
  %v922 = vadd.f32 %v447, %v921
  %v923 = vpop.f32.mrb[0].mxu0
  %v924 = vadd.f32 %v451, %v923
  %925 = vdwg.mxu0
  %v926 = vmax.f32 %v886, 0.0
  %v927 = vmax.f32 %v888, 0.0
  %v928 = vmax.f32 %v892, 0.0
  %v929 = vmax.f32 %v894, 0.0
  %v930 = vmax.f32 %v898, 0.0
  %v931 = vmax.f32 %v900, 0.0
  %v932 = vmax.f32 %v904, 0.0
  %v933 = vmax.f32 %v906, 0.0
  %v934 = vmax.f32 %v910, 0.0
  %v935 = vmax.f32 %v912, 0.0
  %v936 = vmax.f32 %v916, 0.0
  %v937 = vmax.f32 %v918, 0.0
  %v938 = vmax.f32 %v922, 0.0
  %v939 = vmax.f32 %v924, 0.0
  %v954 = vcombine.low %v926, %v927
  %v955 = vcombine.high %v926, %v927
  %v957 = vunpack.c.l.s4 1966171168
  %v958 = vunpack.c.0.s8 %v957
  %v959 = vlaneseq
  %v960 = vshrl.u32 %v959, 7
  %v961 = vsub.s32 %v958, %v960
  %v962 = vrot.slane %v954, %v961
  %v964 = vunpack.c.l.s4 1966171168
  %v965 = vunpack.c.0.s8 %v964
  %v966 = vlaneseq
  %v967 = vshrl.u32 %v966, 7
  %v968 = vsub.s32 %v965, %v967
  %v969 = vrot.slane %v955, %v968
  %v970 = vcombine.high %v962, %v962
  %v971 = vcombine.high %v969, %v969
  %v973 = vunpack.c.l.s4 1966171168
  %v974 = vunpack.c.0.s8 %v973
  %v975 = vlaneseq
  %v976 = vshrl.u32 %v975, 7
  %v977 = vsub.s32 %v974, %v976
  %v978 = vrot.slane %v962, %v977
  %v980 = vunpack.c.l.s4 1966171168
  %v981 = vunpack.c.0.s8 %v980
  %v982 = vlaneseq
  %v983 = vshrl.u32 %v982, 7
  %v984 = vsub.s32 %v981, %v983
  %v985 = vrot.slane %v969, %v984
  %v987 = vunpack.c.l.s4 1966171168
  %v988 = vunpack.c.0.s8 %v987
  %v989 = vlaneseq
  %v990 = vshrl.u32 %v989, 7
  %v991 = vsub.s32 %v988, %v990
  %v992 = vrot.slane %v970, %v991
  %v994 = vunpack.c.l.s4 1966171168
  %v995 = vunpack.c.0.s8 %v994
  %v996 = vlaneseq
  %v997 = vshrl.u32 %v996, 7
  %v998 = vsub.s32 %v995, %v997
  %v999 = vrot.slane %v971, %v998
  %v1000 = vcombine.high %v978, %v978
  %v1001 = vcombine.high %v985, %v985
  %v1002 = vcombine.high %v992, %v992
  %v1003 = vcombine.high %v999, %v999
  %v1004 = vcombine.low %v928, %v929
  %v1005 = vcombine.high %v928, %v929
  %v1007 = vunpack.c.l.s4 1966171168
  %v1008 = vunpack.c.0.s8 %v1007
  %v1009 = vlaneseq
  %v1010 = vshrl.u32 %v1009, 7
  %v1011 = vsub.s32 %v1008, %v1010
  %v1012 = vrot.slane %v1004, %v1011
  %v1014 = vunpack.c.l.s4 1966171168
  %v1015 = vunpack.c.0.s8 %v1014
  %v1016 = vlaneseq
  %v1017 = vshrl.u32 %v1016, 7
  %v1018 = vsub.s32 %v1015, %v1017
  %v1019 = vrot.slane %v1005, %v1018
  %v1020 = vcombine.high %v1012, %v1012
  %v1021 = vcombine.high %v1019, %v1019
  %v1023 = vunpack.c.l.s4 1966171168
  %v1024 = vunpack.c.0.s8 %v1023
  %v1025 = vlaneseq
  %v1026 = vshrl.u32 %v1025, 7
  %v1027 = vsub.s32 %v1024, %v1026
  %v1028 = vrot.slane %v1012, %v1027
  %v1030 = vunpack.c.l.s4 1966171168
  %v1031 = vunpack.c.0.s8 %v1030
  %v1032 = vlaneseq
  %v1033 = vshrl.u32 %v1032, 7
  %v1034 = vsub.s32 %v1031, %v1033
  %v1035 = vrot.slane %v1019, %v1034
  %v1037 = vunpack.c.l.s4 1966171168
  %v1038 = vunpack.c.0.s8 %v1037
  %v1039 = vlaneseq
  %v1040 = vshrl.u32 %v1039, 7
  %v1041 = vsub.s32 %v1038, %v1040
  %v1042 = vrot.slane %v1020, %v1041
  %v1044 = vunpack.c.l.s4 1966171168
  %v1045 = vunpack.c.0.s8 %v1044
  %v1046 = vlaneseq
  %v1047 = vshrl.u32 %v1046, 7
  %v1048 = vsub.s32 %v1045, %v1047
  %v1049 = vrot.slane %v1021, %v1048
  %v1050 = vcombine.high %v1028, %v1028
  %v1051 = vcombine.high %v1035, %v1035
  %v1052 = vcombine.high %v1042, %v1042
  %v1053 = vcombine.high %v1049, %v1049
  %v1054 = vcombine.low %v930, %v931
  %v1055 = vcombine.high %v930, %v931
  %v1057 = vunpack.c.l.s4 1966171168
  %v1058 = vunpack.c.0.s8 %v1057
  %v1059 = vlaneseq
  %v1060 = vshrl.u32 %v1059, 7
  %v1061 = vsub.s32 %v1058, %v1060
  %v1062 = vrot.slane %v1054, %v1061
  %v1064 = vunpack.c.l.s4 1966171168
  %v1065 = vunpack.c.0.s8 %v1064
  %v1066 = vlaneseq
  %v1067 = vshrl.u32 %v1066, 7
  %v1068 = vsub.s32 %v1065, %v1067
  %v1069 = vrot.slane %v1055, %v1068
  %v1070 = vcombine.high %v1062, %v1062
  %v1071 = vcombine.high %v1069, %v1069
  %v1073 = vunpack.c.l.s4 1966171168
  %v1074 = vunpack.c.0.s8 %v1073
  %v1075 = vlaneseq
  %v1076 = vshrl.u32 %v1075, 7
  %v1077 = vsub.s32 %v1074, %v1076
  %v1078 = vrot.slane %v1062, %v1077
  %v1080 = vunpack.c.l.s4 1966171168
  %v1081 = vunpack.c.0.s8 %v1080
  %v1082 = vlaneseq
  %v1083 = vshrl.u32 %v1082, 7
  %v1084 = vsub.s32 %v1081, %v1083
  %v1085 = vrot.slane %v1069, %v1084
  %v1087 = vunpack.c.l.s4 1966171168
  %v1088 = vunpack.c.0.s8 %v1087
  %v1089 = vlaneseq
  %v1090 = vshrl.u32 %v1089, 7
  %v1091 = vsub.s32 %v1088, %v1090
  %v1092 = vrot.slane %v1070, %v1091
  %v1094 = vunpack.c.l.s4 1966171168
  %v1095 = vunpack.c.0.s8 %v1094
  %v1096 = vlaneseq
  %v1097 = vshrl.u32 %v1096, 7
  %v1098 = vsub.s32 %v1095, %v1097
  %v1099 = vrot.slane %v1071, %v1098
  %v1100 = vcombine.high %v1078, %v1078
  %v1101 = vcombine.high %v1085, %v1085
  %v1102 = vcombine.high %v1092, %v1092
  %v1103 = vcombine.high %v1099, %v1099
  %v1104 = vcombine.low %v932, %v933
  %v1105 = vcombine.high %v932, %v933
  %v1107 = vunpack.c.l.s4 1966171168
  %v1108 = vunpack.c.0.s8 %v1107
  %v1109 = vlaneseq
  %v1110 = vshrl.u32 %v1109, 7
  %v1111 = vsub.s32 %v1108, %v1110
  %v1112 = vrot.slane %v1104, %v1111
  %v1114 = vunpack.c.l.s4 1966171168
  %v1115 = vunpack.c.0.s8 %v1114
  %v1116 = vlaneseq
  %v1117 = vshrl.u32 %v1116, 7
  %v1118 = vsub.s32 %v1115, %v1117
  %v1119 = vrot.slane %v1105, %v1118
  %v1120 = vcombine.high %v1112, %v1112
  %v1121 = vcombine.high %v1119, %v1119
  %v1123 = vunpack.c.l.s4 1966171168
  %v1124 = vunpack.c.0.s8 %v1123
  %v1125 = vlaneseq
  %v1126 = vshrl.u32 %v1125, 7
  %v1127 = vsub.s32 %v1124, %v1126
  %v1128 = vrot.slane %v1112, %v1127
  %v1130 = vunpack.c.l.s4 1966171168
  %v1131 = vunpack.c.0.s8 %v1130
  %v1132 = vlaneseq
  %v1133 = vshrl.u32 %v1132, 7
  %v1134 = vsub.s32 %v1131, %v1133
  %v1135 = vrot.slane %v1119, %v1134
  %v1137 = vunpack.c.l.s4 1966171168
  %v1138 = vunpack.c.0.s8 %v1137
  %v1139 = vlaneseq
  %v1140 = vshrl.u32 %v1139, 7
  %v1141 = vsub.s32 %v1138, %v1140
  %v1142 = vrot.slane %v1120, %v1141
  %v1144 = vunpack.c.l.s4 1966171168
  %v1145 = vunpack.c.0.s8 %v1144
  %v1146 = vlaneseq
  %v1147 = vshrl.u32 %v1146, 7
  %v1148 = vsub.s32 %v1145, %v1147
  %v1149 = vrot.slane %v1121, %v1148
  %v1150 = vcombine.high %v1128, %v1128
  %v1151 = vcombine.high %v1135, %v1135
  %v1152 = vcombine.high %v1142, %v1142
  %v1153 = vcombine.high %v1149, %v1149
  %v1154 = vcombine.low %v934, %v935
  %v1155 = vcombine.high %v934, %v935
  %v1157 = vunpack.c.l.s4 1966171168
  %v1158 = vunpack.c.0.s8 %v1157
  %v1159 = vlaneseq
  %v1160 = vshrl.u32 %v1159, 7
  %v1161 = vsub.s32 %v1158, %v1160
  %v1162 = vrot.slane %v1154, %v1161
  %v1164 = vunpack.c.l.s4 1966171168
  %v1165 = vunpack.c.0.s8 %v1164
  %v1166 = vlaneseq
  %v1167 = vshrl.u32 %v1166, 7
  %v1168 = vsub.s32 %v1165, %v1167
  %v1169 = vrot.slane %v1155, %v1168
  %v1170 = vcombine.high %v1162, %v1162
  %v1171 = vcombine.high %v1169, %v1169
  %v1173 = vunpack.c.l.s4 1966171168
  %v1174 = vunpack.c.0.s8 %v1173
  %v1175 = vlaneseq
  %v1176 = vshrl.u32 %v1175, 7
  %v1177 = vsub.s32 %v1174, %v1176
  %v1178 = vrot.slane %v1162, %v1177
  %v1180 = vunpack.c.l.s4 1966171168
  %v1181 = vunpack.c.0.s8 %v1180
  %v1182 = vlaneseq
  %v1183 = vshrl.u32 %v1182, 7
  %v1184 = vsub.s32 %v1181, %v1183
  %v1185 = vrot.slane %v1169, %v1184
  %v1187 = vunpack.c.l.s4 1966171168
  %v1188 = vunpack.c.0.s8 %v1187
  %v1189 = vlaneseq
  %v1190 = vshrl.u32 %v1189, 7
  %v1191 = vsub.s32 %v1188, %v1190
  %v1192 = vrot.slane %v1170, %v1191
  %v1194 = vunpack.c.l.s4 1966171168
  %v1195 = vunpack.c.0.s8 %v1194
  %v1196 = vlaneseq
  %v1197 = vshrl.u32 %v1196, 7
  %v1198 = vsub.s32 %v1195, %v1197
  %v1199 = vrot.slane %v1171, %v1198
  %v1200 = vcombine.high %v1178, %v1178
  %v1201 = vcombine.high %v1185, %v1185
  %v1202 = vcombine.high %v1192, %v1192
  %v1203 = vcombine.high %v1199, %v1199
  %v1204 = vcombine.low %v936, %v937
  %v1205 = vcombine.high %v936, %v937
  %v1207 = vunpack.c.l.s4 1966171168
  %v1208 = vunpack.c.0.s8 %v1207
  %v1209 = vlaneseq
  %v1210 = vshrl.u32 %v1209, 7
  %v1211 = vsub.s32 %v1208, %v1210
  %v1212 = vrot.slane %v1204, %v1211
  %v1214 = vunpack.c.l.s4 1966171168
  %v1215 = vunpack.c.0.s8 %v1214
  %v1216 = vlaneseq
  %v1217 = vshrl.u32 %v1216, 7
  %v1218 = vsub.s32 %v1215, %v1217
  %v1219 = vrot.slane %v1205, %v1218
  %v1220 = vcombine.high %v1212, %v1212
  %v1221 = vcombine.high %v1219, %v1219
  %v1223 = vunpack.c.l.s4 1966171168
  %v1224 = vunpack.c.0.s8 %v1223
  %v1225 = vlaneseq
  %v1226 = vshrl.u32 %v1225, 7
  %v1227 = vsub.s32 %v1224, %v1226
  %v1228 = vrot.slane %v1212, %v1227
  %v1230 = vunpack.c.l.s4 1966171168
  %v1231 = vunpack.c.0.s8 %v1230
  %v1232 = vlaneseq
  %v1233 = vshrl.u32 %v1232, 7
  %v1234 = vsub.s32 %v1231, %v1233
  %v1235 = vrot.slane %v1219, %v1234
  %v1237 = vunpack.c.l.s4 1966171168
  %v1238 = vunpack.c.0.s8 %v1237
  %v1239 = vlaneseq
  %v1240 = vshrl.u32 %v1239, 7
  %v1241 = vsub.s32 %v1238, %v1240
  %v1242 = vrot.slane %v1220, %v1241
  %v1244 = vunpack.c.l.s4 1966171168
  %v1245 = vunpack.c.0.s8 %v1244
  %v1246 = vlaneseq
  %v1247 = vshrl.u32 %v1246, 7
  %v1248 = vsub.s32 %v1245, %v1247
  %v1249 = vrot.slane %v1221, %v1248
  %v1250 = vcombine.high %v1228, %v1228
  %v1251 = vcombine.high %v1235, %v1235
  %v1252 = vcombine.high %v1242, %v1242
  %v1253 = vcombine.high %v1249, %v1249
  %v1254 = vcombine.low %v938, %v939
  %v1255 = vcombine.high %v938, %v939
  %v1257 = vunpack.c.l.s4 1966171168
  %v1258 = vunpack.c.0.s8 %v1257
  %v1259 = vlaneseq
  %v1260 = vshrl.u32 %v1259, 7
  %v1261 = vsub.s32 %v1258, %v1260
  %v1262 = vrot.slane %v1254, %v1261
  %v1264 = vunpack.c.l.s4 1966171168
  %v1265 = vunpack.c.0.s8 %v1264
  %v1266 = vlaneseq
  %v1267 = vshrl.u32 %v1266, 7
  %v1268 = vsub.s32 %v1265, %v1267
  %v1269 = vrot.slane %v1255, %v1268
  %v1270 = vcombine.high %v1262, %v1262
  %v1271 = vcombine.high %v1269, %v1269
  %v1273 = vunpack.c.l.s4 1966171168
  %v1274 = vunpack.c.0.s8 %v1273
  %v1275 = vlaneseq
  %v1276 = vshrl.u32 %v1275, 7
  %v1277 = vsub.s32 %v1274, %v1276
  %v1278 = vrot.slane %v1262, %v1277
  %v1280 = vunpack.c.l.s4 1966171168
  %v1281 = vunpack.c.0.s8 %v1280
  %v1282 = vlaneseq
  %v1283 = vshrl.u32 %v1282, 7
  %v1284 = vsub.s32 %v1281, %v1283
  %v1285 = vrot.slane %v1269, %v1284
  %v1287 = vunpack.c.l.s4 1966171168
  %v1288 = vunpack.c.0.s8 %v1287
  %v1289 = vlaneseq
  %v1290 = vshrl.u32 %v1289, 7
  %v1291 = vsub.s32 %v1288, %v1290
  %v1292 = vrot.slane %v1270, %v1291
  %v1294 = vunpack.c.l.s4 1966171168
  %v1295 = vunpack.c.0.s8 %v1294
  %v1296 = vlaneseq
  %v1297 = vshrl.u32 %v1296, 7
  %v1298 = vsub.s32 %v1295, %v1297
  %v1299 = vrot.slane %v1271, %v1298
  %v1300 = vcombine.high %v1278, %v1278
  %v1301 = vcombine.high %v1285, %v1285
  %v1302 = vcombine.high %v1292, %v1292
  %v1303 = vcombine.high %v1299, %v1299
  %v1304 = vcombine.low %v978, %v1003
  %v1305 = vcombine.low %v1051, %v1099
  %v1306 = vcombine.low %v1135, %v1202
  %v1307 = vcombine.low %v1250, %v1292
  %v1309 = vunpack.c.l.s4 1966171168
  %v1310 = vunpack.c.0.s8 %v1309
  %v1311 = vlaneseq
  %v1312 = vshrl.u32 %v1311, 7
  %v1313 = vsub.s32 %v1310, %v1312
  %v1314 = vrot.slane %v1304, %v1313
  %v1316 = vunpack.c.l.s4 1966171168
  %v1317 = vunpack.c.0.s8 %v1316
  %v1318 = vlaneseq
  %v1319 = vshrl.u32 %v1318, 7
  %v1320 = vsub.s32 %v1317, %v1319
  %v1321 = vrot.slane %v1305, %v1320
  %v1323 = vunpack.c.l.s4 1966171168
  %v1324 = vunpack.c.0.s8 %v1323
  %v1325 = vlaneseq
  %v1326 = vshrl.u32 %v1325, 7
  %v1327 = vsub.s32 %v1324, %v1326
  %v1328 = vrot.slane %v1306, %v1327
  %v1330 = vunpack.c.l.s4 1966171168
  %v1331 = vunpack.c.0.s8 %v1330
  %v1332 = vlaneseq
  %v1333 = vshrl.u32 %v1332, 7
  %v1334 = vsub.s32 %v1331, %v1333
  %v1335 = vrot.slane %v1307, %v1334
  %v1336 = vcombine.low %v1314, %v1321
  %v1337 = vcombine.high %v1314, %v1321
  %v1338 = vcombine.low %v1328, %v1335
  %v1339 = vcombine.high %v1328, %v1335
  %v1341 = vunpack.c.l.s4 1966171168
  %v1342 = vunpack.c.0.s8 %v1341
  %v1343 = vlaneseq
  %v1344 = vshrl.u32 %v1343, 7
  %v1345 = vsub.s32 %v1342, %v1344
  %v1346 = vrot.slane %v1336, %v1345
  %v1348 = vunpack.c.l.s4 1966171168
  %v1349 = vunpack.c.0.s8 %v1348
  %v1350 = vlaneseq
  %v1351 = vshrl.u32 %v1350, 7
  %v1352 = vsub.s32 %v1349, %v1351
  %v1353 = vrot.slane %v1337, %v1352
  %v1355 = vunpack.c.l.s4 1966171168
  %v1356 = vunpack.c.0.s8 %v1355
  %v1357 = vlaneseq
  %v1358 = vshrl.u32 %v1357, 7
  %v1359 = vsub.s32 %v1356, %v1358
  %v1360 = vrot.slane %v1338, %v1359
  %v1362 = vunpack.c.l.s4 1966171168
  %v1363 = vunpack.c.0.s8 %v1362
  %v1364 = vlaneseq
  %v1365 = vshrl.u32 %v1364, 7
  %v1366 = vsub.s32 %v1363, %v1365
  %v1367 = vrot.slane %v1339, %v1366
  %v1368 = vcombine.low %v1346, %v1360
  %v1369 = vcombine.low %v1353, %v1367
  %v1370 = vcombine.low %v992, %v1028
  %v1371 = vcombine.low %v1053, %v1101
  %v1372 = vcombine.low %v1149, %v1185
  %v1373 = vcombine.low %v1252, %v1300
  %v1375 = vunpack.c.l.s4 1966171168
  %v1376 = vunpack.c.0.s8 %v1375
  %v1377 = vlaneseq
  %v1378 = vshrl.u32 %v1377, 7
  %v1379 = vsub.s32 %v1376, %v1378
  %v1380 = vrot.slane %v1370, %v1379
  %v1382 = vunpack.c.l.s4 1966171168
  %v1383 = vunpack.c.0.s8 %v1382
  %v1384 = vlaneseq
  %v1385 = vshrl.u32 %v1384, 7
  %v1386 = vsub.s32 %v1383, %v1385
  %v1387 = vrot.slane %v1371, %v1386
  %v1389 = vunpack.c.l.s4 1966171168
  %v1390 = vunpack.c.0.s8 %v1389
  %v1391 = vlaneseq
  %v1392 = vshrl.u32 %v1391, 7
  %v1393 = vsub.s32 %v1390, %v1392
  %v1394 = vrot.slane %v1372, %v1393
  %v1396 = vunpack.c.l.s4 1966171168
  %v1397 = vunpack.c.0.s8 %v1396
  %v1398 = vlaneseq
  %v1399 = vshrl.u32 %v1398, 7
  %v1400 = vsub.s32 %v1397, %v1399
  %v1401 = vrot.slane %v1373, %v1400
  %v1402 = vcombine.low %v1380, %v1387
  %v1403 = vcombine.high %v1380, %v1387
  %v1404 = vcombine.low %v1394, %v1401
  %v1405 = vcombine.high %v1394, %v1401
  %v1407 = vunpack.c.l.s4 1966171168
  %v1408 = vunpack.c.0.s8 %v1407
  %v1409 = vlaneseq
  %v1410 = vshrl.u32 %v1409, 7
  %v1411 = vsub.s32 %v1408, %v1410
  %v1412 = vrot.slane %v1402, %v1411
  %v1414 = vunpack.c.l.s4 1966171168
  %v1415 = vunpack.c.0.s8 %v1414
  %v1416 = vlaneseq
  %v1417 = vshrl.u32 %v1416, 7
  %v1418 = vsub.s32 %v1415, %v1417
  %v1419 = vrot.slane %v1403, %v1418
  %v1421 = vunpack.c.l.s4 1966171168
  %v1422 = vunpack.c.0.s8 %v1421
  %v1423 = vlaneseq
  %v1424 = vshrl.u32 %v1423, 7
  %v1425 = vsub.s32 %v1422, %v1424
  %v1426 = vrot.slane %v1404, %v1425
  %v1428 = vunpack.c.l.s4 1966171168
  %v1429 = vunpack.c.0.s8 %v1428
  %v1430 = vlaneseq
  %v1431 = vshrl.u32 %v1430, 7
  %v1432 = vsub.s32 %v1429, %v1431
  %v1433 = vrot.slane %v1405, %v1432
  %v1434 = vcombine.low %v1412, %v1426
  %v1435 = vcombine.low %v1419, %v1433
  %v1436 = vcombine.low %v1000, %v1042
  %v1437 = vcombine.low %v1078, %v1103
  %v1438 = vcombine.low %v1151, %v1199
  %v1439 = vcombine.low %v1235, %v1302
  %v1441 = vunpack.c.l.s4 1966171168
  %v1442 = vunpack.c.0.s8 %v1441
  %v1443 = vlaneseq
  %v1444 = vshrl.u32 %v1443, 7
  %v1445 = vsub.s32 %v1442, %v1444
  %v1446 = vrot.slane %v1436, %v1445
  %v1448 = vunpack.c.l.s4 1966171168
  %v1449 = vunpack.c.0.s8 %v1448
  %v1450 = vlaneseq
  %v1451 = vshrl.u32 %v1450, 7
  %v1452 = vsub.s32 %v1449, %v1451
  %v1453 = vrot.slane %v1437, %v1452
  %v1455 = vunpack.c.l.s4 1966171168
  %v1456 = vunpack.c.0.s8 %v1455
  %v1457 = vlaneseq
  %v1458 = vshrl.u32 %v1457, 7
  %v1459 = vsub.s32 %v1456, %v1458
  %v1460 = vrot.slane %v1438, %v1459
  %v1462 = vunpack.c.l.s4 1966171168
  %v1463 = vunpack.c.0.s8 %v1462
  %v1464 = vlaneseq
  %v1465 = vshrl.u32 %v1464, 7
  %v1466 = vsub.s32 %v1463, %v1465
  %v1467 = vrot.slane %v1439, %v1466
  %v1468 = vcombine.low %v1446, %v1453
  %v1469 = vcombine.high %v1446, %v1453
  %v1470 = vcombine.low %v1460, %v1467
  %v1471 = vcombine.high %v1460, %v1467
  %v1473 = vunpack.c.l.s4 1966171168
  %v1474 = vunpack.c.0.s8 %v1473
  %v1475 = vlaneseq
  %v1476 = vshrl.u32 %v1475, 7
  %v1477 = vsub.s32 %v1474, %v1476
  %v1478 = vrot.slane %v1468, %v1477
  %v1480 = vunpack.c.l.s4 1966171168
  %v1481 = vunpack.c.0.s8 %v1480
  %v1482 = vlaneseq
  %v1483 = vshrl.u32 %v1482, 7
  %v1484 = vsub.s32 %v1481, %v1483
  %v1485 = vrot.slane %v1469, %v1484
  %v1487 = vunpack.c.l.s4 1966171168
  %v1488 = vunpack.c.0.s8 %v1487
  %v1489 = vlaneseq
  %v1490 = vshrl.u32 %v1489, 7
  %v1491 = vsub.s32 %v1488, %v1490
  %v1492 = vrot.slane %v1470, %v1491
  %v1494 = vunpack.c.l.s4 1966171168
  %v1495 = vunpack.c.0.s8 %v1494
  %v1496 = vlaneseq
  %v1497 = vshrl.u32 %v1496, 7
  %v1498 = vsub.s32 %v1495, %v1497
  %v1499 = vrot.slane %v1471, %v1498
  %v1500 = vcombine.low %v1478, %v1492
  %v1501 = vcombine.low %v1485, %v1499
  %v1502 = vcombine.low %v1002, %v1050
  %v1503 = vcombine.low %v1092, %v1128
  %v1504 = vcombine.low %v1153, %v1201
  %v1505 = vcombine.low %v1249, %v1285
  %v1507 = vunpack.c.l.s4 1966171168
  %v1508 = vunpack.c.0.s8 %v1507
  %v1509 = vlaneseq
  %v1510 = vshrl.u32 %v1509, 7
  %v1511 = vsub.s32 %v1508, %v1510
  %v1512 = vrot.slane %v1502, %v1511
  %v1514 = vunpack.c.l.s4 1966171168
  %v1515 = vunpack.c.0.s8 %v1514
  %v1516 = vlaneseq
  %v1517 = vshrl.u32 %v1516, 7
  %v1518 = vsub.s32 %v1515, %v1517
  %v1519 = vrot.slane %v1503, %v1518
  %v1521 = vunpack.c.l.s4 1966171168
  %v1522 = vunpack.c.0.s8 %v1521
  %v1523 = vlaneseq
  %v1524 = vshrl.u32 %v1523, 7
  %v1525 = vsub.s32 %v1522, %v1524
  %v1526 = vrot.slane %v1504, %v1525
  %v1528 = vunpack.c.l.s4 1966171168
  %v1529 = vunpack.c.0.s8 %v1528
  %v1530 = vlaneseq
  %v1531 = vshrl.u32 %v1530, 7
  %v1532 = vsub.s32 %v1529, %v1531
  %v1533 = vrot.slane %v1505, %v1532
  %v1534 = vcombine.low %v1512, %v1519
  %v1535 = vcombine.high %v1512, %v1519
  %v1536 = vcombine.low %v1526, %v1533
  %v1537 = vcombine.high %v1526, %v1533
  %v1539 = vunpack.c.l.s4 1966171168
  %v1540 = vunpack.c.0.s8 %v1539
  %v1541 = vlaneseq
  %v1542 = vshrl.u32 %v1541, 7
  %v1543 = vsub.s32 %v1540, %v1542
  %v1544 = vrot.slane %v1534, %v1543
  %v1546 = vunpack.c.l.s4 1966171168
  %v1547 = vunpack.c.0.s8 %v1546
  %v1548 = vlaneseq
  %v1549 = vshrl.u32 %v1548, 7
  %v1550 = vsub.s32 %v1547, %v1549
  %v1551 = vrot.slane %v1535, %v1550
  %v1553 = vunpack.c.l.s4 1966171168
  %v1554 = vunpack.c.0.s8 %v1553
  %v1555 = vlaneseq
  %v1556 = vshrl.u32 %v1555, 7
  %v1557 = vsub.s32 %v1554, %v1556
  %v1558 = vrot.slane %v1536, %v1557
  %v1560 = vunpack.c.l.s4 1966171168
  %v1561 = vunpack.c.0.s8 %v1560
  %v1562 = vlaneseq
  %v1563 = vshrl.u32 %v1562, 7
  %v1564 = vsub.s32 %v1561, %v1563
  %v1565 = vrot.slane %v1537, %v1564
  %v1566 = vcombine.low %v1544, %v1558
  %v1567 = vcombine.low %v1551, %v1565
  %v1568 = vcombine.low %v985, %v1052
  %v1569 = vcombine.low %v1100, %v1142
  %v1570 = vcombine.low %v1178, %v1203
  %v1571 = vcombine.low %v1251, %v1299
  %v1573 = vunpack.c.l.s4 1966171168
  %v1574 = vunpack.c.0.s8 %v1573
  %v1575 = vlaneseq
  %v1576 = vshrl.u32 %v1575, 7
  %v1577 = vsub.s32 %v1574, %v1576
  %v1578 = vrot.slane %v1568, %v1577
  %v1580 = vunpack.c.l.s4 1966171168
  %v1581 = vunpack.c.0.s8 %v1580
  %v1582 = vlaneseq
  %v1583 = vshrl.u32 %v1582, 7
  %v1584 = vsub.s32 %v1581, %v1583
  %v1585 = vrot.slane %v1569, %v1584
  %v1587 = vunpack.c.l.s4 1966171168
  %v1588 = vunpack.c.0.s8 %v1587
  %v1589 = vlaneseq
  %v1590 = vshrl.u32 %v1589, 7
  %v1591 = vsub.s32 %v1588, %v1590
  %v1592 = vrot.slane %v1570, %v1591
  %v1594 = vunpack.c.l.s4 1966171168
  %v1595 = vunpack.c.0.s8 %v1594
  %v1596 = vlaneseq
  %v1597 = vshrl.u32 %v1596, 7
  %v1598 = vsub.s32 %v1595, %v1597
  %v1599 = vrot.slane %v1571, %v1598
  %v1600 = vcombine.low %v1578, %v1585
  %v1601 = vcombine.high %v1578, %v1585
  %v1602 = vcombine.low %v1592, %v1599
  %v1603 = vcombine.high %v1592, %v1599
  %v1605 = vunpack.c.l.s4 1966171168
  %v1606 = vunpack.c.0.s8 %v1605
  %v1607 = vlaneseq
  %v1608 = vshrl.u32 %v1607, 7
  %v1609 = vsub.s32 %v1606, %v1608
  %v1610 = vrot.slane %v1600, %v1609
  %v1612 = vunpack.c.l.s4 1966171168
  %v1613 = vunpack.c.0.s8 %v1612
  %v1614 = vlaneseq
  %v1615 = vshrl.u32 %v1614, 7
  %v1616 = vsub.s32 %v1613, %v1615
  %v1617 = vrot.slane %v1601, %v1616
  %v1619 = vunpack.c.l.s4 1966171168
  %v1620 = vunpack.c.0.s8 %v1619
  %v1621 = vlaneseq
  %v1622 = vshrl.u32 %v1621, 7
  %v1623 = vsub.s32 %v1620, %v1622
  %v1624 = vrot.slane %v1602, %v1623
  %v1626 = vunpack.c.l.s4 1966171168
  %v1627 = vunpack.c.0.s8 %v1626
  %v1628 = vlaneseq
  %v1629 = vshrl.u32 %v1628, 7
  %v1630 = vsub.s32 %v1627, %v1629
  %v1631 = vrot.slane %v1603, %v1630
  %v1632 = vcombine.low %v1610, %v1624
  %v1633 = vcombine.low %v1617, %v1631
  %v1634 = vcombine.low %v999, %v1035
  %v1635 = vcombine.low %v1102, %v1150
  %v1636 = vcombine.low %v1192, %v1228
  %v1637 = vcombine.low %v1253, %v1301
  %v1639 = vunpack.c.l.s4 1966171168
  %v1640 = vunpack.c.0.s8 %v1639
  %v1641 = vlaneseq
  %v1642 = vshrl.u32 %v1641, 7
  %v1643 = vsub.s32 %v1640, %v1642
  %v1644 = vrot.slane %v1634, %v1643
  %v1646 = vunpack.c.l.s4 1966171168
  %v1647 = vunpack.c.0.s8 %v1646
  %v1648 = vlaneseq
  %v1649 = vshrl.u32 %v1648, 7
  %v1650 = vsub.s32 %v1647, %v1649
  %v1651 = vrot.slane %v1635, %v1650
  %v1653 = vunpack.c.l.s4 1966171168
  %v1654 = vunpack.c.0.s8 %v1653
  %v1655 = vlaneseq
  %v1656 = vshrl.u32 %v1655, 7
  %v1657 = vsub.s32 %v1654, %v1656
  %v1658 = vrot.slane %v1636, %v1657
  %v1660 = vunpack.c.l.s4 1966171168
  %v1661 = vunpack.c.0.s8 %v1660
  %v1662 = vlaneseq
  %v1663 = vshrl.u32 %v1662, 7
  %v1664 = vsub.s32 %v1661, %v1663
  %v1665 = vrot.slane %v1637, %v1664
  %v1666 = vcombine.low %v1644, %v1651
  %v1667 = vcombine.high %v1644, %v1651
  %v1668 = vcombine.low %v1658, %v1665
  %v1669 = vcombine.high %v1658, %v1665
  %v1671 = vunpack.c.l.s4 1966171168
  %v1672 = vunpack.c.0.s8 %v1671
  %v1673 = vlaneseq
  %v1674 = vshrl.u32 %v1673, 7
  %v1675 = vsub.s32 %v1672, %v1674
  %v1676 = vrot.slane %v1666, %v1675
  %v1678 = vunpack.c.l.s4 1966171168
  %v1679 = vunpack.c.0.s8 %v1678
  %v1680 = vlaneseq
  %v1681 = vshrl.u32 %v1680, 7
  %v1682 = vsub.s32 %v1679, %v1681
  %v1683 = vrot.slane %v1667, %v1682
  %v1685 = vunpack.c.l.s4 1966171168
  %v1686 = vunpack.c.0.s8 %v1685
  %v1687 = vlaneseq
  %v1688 = vshrl.u32 %v1687, 7
  %v1689 = vsub.s32 %v1686, %v1688
  %v1690 = vrot.slane %v1668, %v1689
  %v1692 = vunpack.c.l.s4 1966171168
  %v1693 = vunpack.c.0.s8 %v1692
  %v1694 = vlaneseq
  %v1695 = vshrl.u32 %v1694, 7
  %v1696 = vsub.s32 %v1693, %v1695
  %v1697 = vrot.slane %v1669, %v1696
  %v1698 = vcombine.low %v1676, %v1690
  %v1699 = vcombine.low %v1683, %v1697
  %v1700 = vcombine.low %v1001, %v1049
  %v1701 = vcombine.low %v1085, %v1152
  %v1702 = vcombine.low %v1200, %v1242
  %v1703 = vcombine.low %v1278, %v1303
  %v1705 = vunpack.c.l.s4 1966171168
  %v1706 = vunpack.c.0.s8 %v1705
  %v1707 = vlaneseq
  %v1708 = vshrl.u32 %v1707, 7
  %v1709 = vsub.s32 %v1706, %v1708
  %v1710 = vrot.slane %v1700, %v1709
  %v1712 = vunpack.c.l.s4 1966171168
  %v1713 = vunpack.c.0.s8 %v1712
  %v1714 = vlaneseq
  %v1715 = vshrl.u32 %v1714, 7
  %v1716 = vsub.s32 %v1713, %v1715
  %v1717 = vrot.slane %v1701, %v1716
  %v1719 = vunpack.c.l.s4 1966171168
  %v1720 = vunpack.c.0.s8 %v1719
  %v1721 = vlaneseq
  %v1722 = vshrl.u32 %v1721, 7
  %v1723 = vsub.s32 %v1720, %v1722
  %v1724 = vrot.slane %v1702, %v1723
  %v1726 = vunpack.c.l.s4 1966171168
  %v1727 = vunpack.c.0.s8 %v1726
  %v1728 = vlaneseq
  %v1729 = vshrl.u32 %v1728, 7
  %v1730 = vsub.s32 %v1727, %v1729
  %v1731 = vrot.slane %v1703, %v1730
  %v1732 = vcombine.low %v1710, %v1717
  %v1733 = vcombine.high %v1710, %v1717
  %v1734 = vcombine.low %v1724, %v1731
  %v1735 = vcombine.high %v1724, %v1731
  %v1737 = vunpack.c.l.s4 1966171168
  %v1738 = vunpack.c.0.s8 %v1737
  %v1739 = vlaneseq
  %v1740 = vshrl.u32 %v1739, 7
  %v1741 = vsub.s32 %v1738, %v1740
  %v1742 = vrot.slane %v1732, %v1741
  %v1744 = vunpack.c.l.s4 1966171168
  %v1745 = vunpack.c.0.s8 %v1744
  %v1746 = vlaneseq
  %v1747 = vshrl.u32 %v1746, 7
  %v1748 = vsub.s32 %v1745, %v1747
  %v1749 = vrot.slane %v1733, %v1748
  %v1751 = vunpack.c.l.s4 1966171168
  %v1752 = vunpack.c.0.s8 %v1751
  %v1753 = vlaneseq
  %v1754 = vshrl.u32 %v1753, 7
  %v1755 = vsub.s32 %v1752, %v1754
  %v1756 = vrot.slane %v1734, %v1755
  %v1758 = vunpack.c.l.s4 1966171168
  %v1759 = vunpack.c.0.s8 %v1758
  %v1760 = vlaneseq
  %v1761 = vshrl.u32 %v1760, 7
  %v1762 = vsub.s32 %v1759, %v1761
  %v1763 = vrot.slane %v1735, %v1762
  %v1764 = vcombine.low %v1742, %v1756
  %v1765 = vcombine.low %v1749, %v1763
  %v1766 = vcombine.low %v1368, %v1369
  %v1767 = vcombine.high %v1368, %v1369
  %v1768 = vcombine.low %v1434, %v1435
  %v1769 = vcombine.high %v1434, %v1435
  %v1770 = vcombine.low %v1500, %v1501
  %v1771 = vcombine.high %v1500, %v1501
  %v1773 = vunpack.c.l.s4 1966171168
  %v1774 = vunpack.c.0.s8 %v1773
  %v1775 = vlaneseq
  %v1776 = vshrl.u32 %v1775, 7
  %v1777 = vsub.s32 %v1774, %v1776
  %v1778 = vrot.slane %v1766, %v1777
  %v1780 = vunpack.c.l.s4 1966171168
  %v1781 = vunpack.c.0.s8 %v1780
  %v1782 = vlaneseq
  %v1783 = vshrl.u32 %v1782, 7
  %v1784 = vsub.s32 %v1781, %v1783
  %v1785 = vrot.slane %v1767, %v1784
  %v1787 = vunpack.c.l.s4 1966171168
  %v1788 = vunpack.c.0.s8 %v1787
  %v1789 = vlaneseq
  %v1790 = vshrl.u32 %v1789, 7
  %v1791 = vsub.s32 %v1788, %v1790
  %v1792 = vrot.slane %v1768, %v1791
  %v1794 = vunpack.c.l.s4 1966171168
  %v1795 = vunpack.c.0.s8 %v1794
  %v1796 = vlaneseq
  %v1797 = vshrl.u32 %v1796, 7
  %v1798 = vsub.s32 %v1795, %v1797
  %v1799 = vrot.slane %v1769, %v1798
  %v1801 = vunpack.c.l.s4 1966171168
  %v1802 = vunpack.c.0.s8 %v1801
  %v1803 = vlaneseq
  %v1804 = vshrl.u32 %v1803, 7
  %v1805 = vsub.s32 %v1802, %v1804
  %v1806 = vrot.slane %v1770, %v1805
  %v1808 = vunpack.c.l.s4 1966171168
  %v1809 = vunpack.c.0.s8 %v1808
  %v1810 = vlaneseq
  %v1811 = vshrl.u32 %v1810, 7
  %v1812 = vsub.s32 %v1809, %v1811
  %v1813 = vrot.slane %v1771, %v1812
  %v1814 = vcombine.low %v1778, %v1792
  %v1815 = vcombine.high %v1778, %v1792
  %v1816 = vcombine.low %v1785, %v1799
  %v1817 = vcombine.high %v1785, %v1799
  %v1818 = vcombine.high %v1806, %v1806
  %v1819 = vcombine.high %v1813, %v1813
  %v1821 = vunpack.c.l.s4 1966171168
  %v1822 = vunpack.c.0.s8 %v1821
  %v1823 = vlaneseq
  %v1824 = vshrl.u32 %v1823, 7
  %v1825 = vsub.s32 %v1822, %v1824
  %v1826 = vrot.slane %v1814, %v1825
  %v1828 = vunpack.c.l.s4 1966171168
  %v1829 = vunpack.c.0.s8 %v1828
  %v1830 = vlaneseq
  %v1831 = vshrl.u32 %v1830, 7
  %v1832 = vsub.s32 %v1829, %v1831
  %v1833 = vrot.slane %v1816, %v1832
  %v1835 = vunpack.c.l.s4 1966171168
  %v1836 = vunpack.c.0.s8 %v1835
  %v1837 = vlaneseq
  %v1838 = vshrl.u32 %v1837, 7
  %v1839 = vsub.s32 %v1836, %v1838
  %v1840 = vrot.slane %v1815, %v1839
  %v1842 = vunpack.c.l.s4 1966171168
  %v1843 = vunpack.c.0.s8 %v1842
  %v1844 = vlaneseq
  %v1845 = vshrl.u32 %v1844, 7
  %v1846 = vsub.s32 %v1843, %v1845
  %v1847 = vrot.slane %v1817, %v1846
  %v1849 = vunpack.c.l.s4 1966171168
  %v1850 = vunpack.c.0.s8 %v1849
  %v1851 = vlaneseq
  %v1852 = vshrl.u32 %v1851, 7
  %v1853 = vsub.s32 %v1850, %v1852
  %v1854 = vrot.slane %v1806, %v1853
  %v1856 = vunpack.c.l.s4 1966171168
  %v1857 = vunpack.c.0.s8 %v1856
  %v1858 = vlaneseq
  %v1859 = vshrl.u32 %v1858, 7
  %v1860 = vsub.s32 %v1857, %v1859
  %v1861 = vrot.slane %v1813, %v1860
  %v1863 = vunpack.c.l.s4 1966171168
  %v1864 = vunpack.c.0.s8 %v1863
  %v1865 = vlaneseq
  %v1866 = vshrl.u32 %v1865, 7
  %v1867 = vsub.s32 %v1864, %v1866
  %v1868 = vrot.slane %v1818, %v1867
  %v1870 = vunpack.c.l.s4 1966171168
  %v1871 = vunpack.c.0.s8 %v1870
  %v1872 = vlaneseq
  %v1873 = vshrl.u32 %v1872, 7
  %v1874 = vsub.s32 %v1871, %v1873
  %v1875 = vrot.slane %v1819, %v1874
  %v1876 = vcombine.low %v1826, %v1854
  %v1877 = vcombine.high %v1826, %v1854
  %v1878 = vcombine.low %v1833, %v1861
  %v1879 = vcombine.high %v1833, %v1861
  %v1880 = vcombine.low %v1840, %v1868
  %v1881 = vcombine.high %v1840, %v1868
  %v1882 = vcombine.low %v1847, %v1875
  %v1883 = vcombine.high %v1847, %v1875
  %v1884 = vcombine.low %v1566, %v1567
  %v1885 = vcombine.high %v1566, %v1567
  %v1886 = vcombine.low %v1632, %v1633
  %v1887 = vcombine.high %v1632, %v1633
  %v1889 = vunpack.c.l.s4 1966171168
  %v1890 = vunpack.c.0.s8 %v1889
  %v1891 = vlaneseq
  %v1892 = vshrl.u32 %v1891, 7
  %v1893 = vsub.s32 %v1890, %v1892
  %v1894 = vrot.slane %v1884, %v1893
  %v1896 = vunpack.c.l.s4 1966171168
  %v1897 = vunpack.c.0.s8 %v1896
  %v1898 = vlaneseq
  %v1899 = vshrl.u32 %v1898, 7
  %v1900 = vsub.s32 %v1897, %v1899
  %v1901 = vrot.slane %v1885, %v1900
  %v1903 = vunpack.c.l.s4 1966171168
  %v1904 = vunpack.c.0.s8 %v1903
  %v1905 = vlaneseq
  %v1906 = vshrl.u32 %v1905, 7
  %v1907 = vsub.s32 %v1904, %v1906
  %v1908 = vrot.slane %v1886, %v1907
  %v1910 = vunpack.c.l.s4 1966171168
  %v1911 = vunpack.c.0.s8 %v1910
  %v1912 = vlaneseq
  %v1913 = vshrl.u32 %v1912, 7
  %v1914 = vsub.s32 %v1911, %v1913
  %v1915 = vrot.slane %v1887, %v1914
  %v1916 = vcombine.low %v1806, %v1894
  %v1917 = vcombine.high %v1806, %v1894
  %v1918 = vcombine.low %v1813, %v1901
  %v1919 = vcombine.high %v1813, %v1901
  %v1920 = vcombine.high %v1908, %v1908
  %v1921 = vcombine.high %v1915, %v1915
  %v1923 = vunpack.c.l.s4 1966171168
  %v1924 = vunpack.c.0.s8 %v1923
  %v1925 = vlaneseq
  %v1926 = vshrl.u32 %v1925, 7
  %v1927 = vsub.s32 %v1924, %v1926
  %v1928 = vrot.slane %v1916, %v1927
  %v1930 = vunpack.c.l.s4 1966171168
  %v1931 = vunpack.c.0.s8 %v1930
  %v1932 = vlaneseq
  %v1933 = vshrl.u32 %v1932, 7
  %v1934 = vsub.s32 %v1931, %v1933
  %v1935 = vrot.slane %v1918, %v1934
  %v1937 = vunpack.c.l.s4 1966171168
  %v1938 = vunpack.c.0.s8 %v1937
  %v1939 = vlaneseq
  %v1940 = vshrl.u32 %v1939, 7
  %v1941 = vsub.s32 %v1938, %v1940
  %v1942 = vrot.slane %v1917, %v1941
  %v1944 = vunpack.c.l.s4 1966171168
  %v1945 = vunpack.c.0.s8 %v1944
  %v1946 = vlaneseq
  %v1947 = vshrl.u32 %v1946, 7
  %v1948 = vsub.s32 %v1945, %v1947
  %v1949 = vrot.slane %v1919, %v1948
  %v1951 = vunpack.c.l.s4 1966171168
  %v1952 = vunpack.c.0.s8 %v1951
  %v1953 = vlaneseq
  %v1954 = vshrl.u32 %v1953, 7
  %v1955 = vsub.s32 %v1952, %v1954
  %v1956 = vrot.slane %v1908, %v1955
  %v1958 = vunpack.c.l.s4 1966171168
  %v1959 = vunpack.c.0.s8 %v1958
  %v1960 = vlaneseq
  %v1961 = vshrl.u32 %v1960, 7
  %v1962 = vsub.s32 %v1959, %v1961
  %v1963 = vrot.slane %v1915, %v1962
  %v1965 = vunpack.c.l.s4 1966171168
  %v1966 = vunpack.c.0.s8 %v1965
  %v1967 = vlaneseq
  %v1968 = vshrl.u32 %v1967, 7
  %v1969 = vsub.s32 %v1966, %v1968
  %v1970 = vrot.slane %v1920, %v1969
  %v1972 = vunpack.c.l.s4 1966171168
  %v1973 = vunpack.c.0.s8 %v1972
  %v1974 = vlaneseq
  %v1975 = vshrl.u32 %v1974, 7
  %v1976 = vsub.s32 %v1973, %v1975
  %v1977 = vrot.slane %v1921, %v1976
  %v1978 = vcombine.low %v1928, %v1956
  %v1979 = vcombine.high %v1928, %v1956
  %v1980 = vcombine.low %v1935, %v1963
  %v1981 = vcombine.high %v1935, %v1963
  %v1982 = vcombine.low %v1942, %v1970
  %v1983 = vcombine.high %v1942, %v1970
  %v1984 = vcombine.low %v1949, %v1977
  %v1985 = vcombine.high %v1949, %v1977
  %v1986 = vcombine.low %v1698, %v1699
  %v1987 = vcombine.high %v1698, %v1699
  %v1988 = vcombine.low %v1764, %v1765
  %v1989 = vcombine.high %v1764, %v1765
  %v1991 = vunpack.c.l.s4 1966171168
  %v1992 = vunpack.c.0.s8 %v1991
  %v1993 = vlaneseq
  %v1994 = vshrl.u32 %v1993, 7
  %v1995 = vsub.s32 %v1992, %v1994
  %v1996 = vrot.slane %v1986, %v1995
  %v1998 = vunpack.c.l.s4 1966171168
  %v1999 = vunpack.c.0.s8 %v1998
  %v2000 = vlaneseq
  %v2001 = vshrl.u32 %v2000, 7
  %v2002 = vsub.s32 %v1999, %v2001
  %v2003 = vrot.slane %v1987, %v2002
  %v2005 = vunpack.c.l.s4 1966171168
  %v2006 = vunpack.c.0.s8 %v2005
  %v2007 = vlaneseq
  %v2008 = vshrl.u32 %v2007, 7
  %v2009 = vsub.s32 %v2006, %v2008
  %v2010 = vrot.slane %v1988, %v2009
  %v2012 = vunpack.c.l.s4 1966171168
  %v2013 = vunpack.c.0.s8 %v2012
  %v2014 = vlaneseq
  %v2015 = vshrl.u32 %v2014, 7
  %v2016 = vsub.s32 %v2013, %v2015
  %v2017 = vrot.slane %v1989, %v2016
  %v2018 = vcombine.low %v1908, %v1996
  %v2019 = vcombine.high %v1908, %v1996
  %v2020 = vcombine.low %v1915, %v2003
  %v2021 = vcombine.high %v1915, %v2003
  %v2022 = vcombine.high %v2010, %v2010
  %v2023 = vcombine.high %v2017, %v2017
  %v2025 = vunpack.c.l.s4 1966171168
  %v2026 = vunpack.c.0.s8 %v2025
  %v2027 = vlaneseq
  %v2028 = vshrl.u32 %v2027, 7
  %v2029 = vsub.s32 %v2026, %v2028
  %v2030 = vrot.slane %v2018, %v2029
  %v2032 = vunpack.c.l.s4 1966171168
  %v2033 = vunpack.c.0.s8 %v2032
  %v2034 = vlaneseq
  %v2035 = vshrl.u32 %v2034, 7
  %v2036 = vsub.s32 %v2033, %v2035
  %v2037 = vrot.slane %v2020, %v2036
  %v2039 = vunpack.c.l.s4 1966171168
  %v2040 = vunpack.c.0.s8 %v2039
  %v2041 = vlaneseq
  %v2042 = vshrl.u32 %v2041, 7
  %v2043 = vsub.s32 %v2040, %v2042
  %v2044 = vrot.slane %v2019, %v2043
  %v2046 = vunpack.c.l.s4 1966171168
  %v2047 = vunpack.c.0.s8 %v2046
  %v2048 = vlaneseq
  %v2049 = vshrl.u32 %v2048, 7
  %v2050 = vsub.s32 %v2047, %v2049
  %v2051 = vrot.slane %v2021, %v2050
  %v2053 = vunpack.c.l.s4 1966171168
  %v2054 = vunpack.c.0.s8 %v2053
  %v2055 = vlaneseq
  %v2056 = vshrl.u32 %v2055, 7
  %v2057 = vsub.s32 %v2054, %v2056
  %v2058 = vrot.slane %v2010, %v2057
  %v2060 = vunpack.c.l.s4 1966171168
  %v2061 = vunpack.c.0.s8 %v2060
  %v2062 = vlaneseq
  %v2063 = vshrl.u32 %v2062, 7
  %v2064 = vsub.s32 %v2061, %v2063
  %v2065 = vrot.slane %v2017, %v2064
  %v2067 = vunpack.c.l.s4 1966171168
  %v2068 = vunpack.c.0.s8 %v2067
  %v2069 = vlaneseq
  %v2070 = vshrl.u32 %v2069, 7
  %v2071 = vsub.s32 %v2068, %v2070
  %v2072 = vrot.slane %v2022, %v2071
  %v2074 = vunpack.c.l.s4 1966171168
  %v2075 = vunpack.c.0.s8 %v2074
  %v2076 = vlaneseq
  %v2077 = vshrl.u32 %v2076, 7
  %v2078 = vsub.s32 %v2075, %v2077
  %v2079 = vrot.slane %v2023, %v2078
  %v2080 = vcombine.low %v2030, %v2058
  %v2081 = vcombine.high %v2030, %v2058
  %v2082 = vcombine.low %v2037, %v2065
  %v2083 = vcombine.high %v2037, %v2065
  %v2084 = vcombine.low %v2044, %v2072
  %v2085 = vcombine.high %v2044, %v2072
  %v2086 = vcombine.low %v2051, %v2079
  %v2087 = vcombine.high %v2051, %v2079
  %v2088 = vlaneseq
  %v2089 = vshrl.u32 %v2088, 7
  %v2090 = vsub.s32 0, %v2089
  %v2091 = vrot.slane %v1876, %v2090
  %v2092 = vlaneseq
  %v2093 = vshrl.u32 %v2092, 7
  %v2094 = vsub.s32 1, %v2093
  %v2095 = vrot.slane %v1876, %v2094
  %v2096 = vlaneseq
  %v2097 = vshrl.u32 %v2096, 7
  %v2098 = vsub.s32 2, %v2097
  %v2099 = vrot.slane %v1876, %v2098
  %v2100 = vlaneseq
  %v2101 = vshrl.u32 %v2100, 7
  %v2102 = vsub.s32 3, %v2101
  %v2103 = vrot.slane %v1876, %v2102
  %v2104 = vlaneseq
  %v2105 = vshrl.u32 %v2104, 7
  %v2106 = vsub.s32 4, %v2105
  %v2107 = vrot.slane %v1876, %v2106
  %v2108 = vlaneseq
  %v2109 = vshrl.u32 %v2108, 7
  %v2110 = vsub.s32 5, %v2109
  %v2111 = vrot.slane %v1876, %v2110
  %v2112 = vlaneseq
  %v2113 = vshrl.u32 %v2112, 7
  %v2114 = vsub.s32 0, %v2113
  %v2115 = vrot.slane %v1880, %v2114
  %v2116 = vlaneseq
  %v2117 = vshrl.u32 %v2116, 7
  %v2118 = vsub.s32 1, %v2117
  %v2119 = vrot.slane %v1880, %v2118
  %v2120 = vlaneseq
  %v2121 = vshrl.u32 %v2120, 7
  %v2122 = vsub.s32 2, %v2121
  %v2123 = vrot.slane %v1880, %v2122
  %v2124 = vlaneseq
  %v2125 = vshrl.u32 %v2124, 7
  %v2126 = vsub.s32 3, %v2125
  %v2127 = vrot.slane %v1880, %v2126
  %v2128 = vlaneseq
  %v2129 = vshrl.u32 %v2128, 7
  %v2130 = vsub.s32 4, %v2129
  %v2131 = vrot.slane %v1880, %v2130
  %v2132 = vlaneseq
  %v2133 = vshrl.u32 %v2132, 7
  %v2134 = vsub.s32 5, %v2133
  %v2135 = vrot.slane %v1880, %v2134
  %v2136 = vlaneseq
  %v2137 = vshrl.u32 %v2136, 7
  %v2138 = vsub.s32 0, %v2137
  %v2139 = vrot.slane %v1877, %v2138
  %v2140 = vlaneseq
  %v2141 = vshrl.u32 %v2140, 7
  %v2142 = vsub.s32 1, %v2141
  %v2143 = vrot.slane %v1877, %v2142
  %v2144 = vlaneseq
  %v2145 = vshrl.u32 %v2144, 7
  %v2146 = vsub.s32 2, %v2145
  %v2147 = vrot.slane %v1877, %v2146
  %v2148 = vlaneseq
  %v2149 = vshrl.u32 %v2148, 7
  %v2150 = vsub.s32 3, %v2149
  %v2151 = vrot.slane %v1877, %v2150
  %v2152 = vlaneseq
  %v2153 = vshrl.u32 %v2152, 7
  %v2154 = vsub.s32 4, %v2153
  %v2155 = vrot.slane %v1877, %v2154
  %v2156 = vlaneseq
  %v2157 = vshrl.u32 %v2156, 7
  %v2158 = vsub.s32 5, %v2157
  %v2159 = vrot.slane %v1877, %v2158
  %v2160 = vlaneseq
  %v2161 = vshrl.u32 %v2160, 7
  %v2162 = vsub.s32 0, %v2161
  %v2163 = vrot.slane %v1881, %v2162
  %v2164 = vlaneseq
  %v2165 = vshrl.u32 %v2164, 7
  %v2166 = vsub.s32 1, %v2165
  %v2167 = vrot.slane %v1881, %v2166
  %v2168 = vlaneseq
  %v2169 = vshrl.u32 %v2168, 7
  %v2170 = vsub.s32 2, %v2169
  %v2171 = vrot.slane %v1881, %v2170
  %v2172 = vlaneseq
  %v2173 = vshrl.u32 %v2172, 7
  %v2174 = vsub.s32 3, %v2173
  %v2175 = vrot.slane %v1881, %v2174
  %v2176 = vlaneseq
  %v2177 = vshrl.u32 %v2176, 7
  %v2178 = vsub.s32 4, %v2177
  %v2179 = vrot.slane %v1881, %v2178
  %v2180 = vlaneseq
  %v2181 = vshrl.u32 %v2180, 7
  %v2182 = vsub.s32 5, %v2181
  %v2183 = vrot.slane %v1881, %v2182
  %v2184 = vlaneseq
  %v2185 = vshrl.u32 %v2184, 7
  %v2186 = vsub.s32 0, %v2185
  %v2187 = vrot.slane %v1878, %v2186
  %v2188 = vlaneseq
  %v2189 = vshrl.u32 %v2188, 7
  %v2190 = vsub.s32 1, %v2189
  %v2191 = vrot.slane %v1878, %v2190
  %v2192 = vlaneseq
  %v2193 = vshrl.u32 %v2192, 7
  %v2194 = vsub.s32 2, %v2193
  %v2195 = vrot.slane %v1878, %v2194
  %v2196 = vlaneseq
  %v2197 = vshrl.u32 %v2196, 7
  %v2198 = vsub.s32 3, %v2197
  %v2199 = vrot.slane %v1878, %v2198
  %v2200 = vlaneseq
  %v2201 = vshrl.u32 %v2200, 7
  %v2202 = vsub.s32 4, %v2201
  %v2203 = vrot.slane %v1878, %v2202
  %v2204 = vlaneseq
  %v2205 = vshrl.u32 %v2204, 7
  %v2206 = vsub.s32 5, %v2205
  %v2207 = vrot.slane %v1878, %v2206
  %v2208 = vlaneseq
  %v2209 = vshrl.u32 %v2208, 7
  %v2210 = vsub.s32 0, %v2209
  %v2211 = vrot.slane %v1882, %v2210
  %v2212 = vlaneseq
  %v2213 = vshrl.u32 %v2212, 7
  %v2214 = vsub.s32 1, %v2213
  %v2215 = vrot.slane %v1882, %v2214
  %v2216 = vlaneseq
  %v2217 = vshrl.u32 %v2216, 7
  %v2218 = vsub.s32 2, %v2217
  %v2219 = vrot.slane %v1882, %v2218
  %v2220 = vlaneseq
  %v2221 = vshrl.u32 %v2220, 7
  %v2222 = vsub.s32 3, %v2221
  %v2223 = vrot.slane %v1882, %v2222
  %v2224 = vlaneseq
  %v2225 = vshrl.u32 %v2224, 7
  %v2226 = vsub.s32 4, %v2225
  %v2227 = vrot.slane %v1882, %v2226
  %v2228 = vlaneseq
  %v2229 = vshrl.u32 %v2228, 7
  %v2230 = vsub.s32 5, %v2229
  %v2231 = vrot.slane %v1882, %v2230
  %v2232 = vlaneseq
  %v2233 = vshrl.u32 %v2232, 7
  %v2234 = vsub.s32 0, %v2233
  %v2235 = vrot.slane %v1879, %v2234
  %v2236 = vlaneseq
  %v2237 = vshrl.u32 %v2236, 7
  %v2238 = vsub.s32 1, %v2237
  %v2239 = vrot.slane %v1879, %v2238
  %v2240 = vlaneseq
  %v2241 = vshrl.u32 %v2240, 7
  %v2242 = vsub.s32 2, %v2241
  %v2243 = vrot.slane %v1879, %v2242
  %v2244 = vlaneseq
  %v2245 = vshrl.u32 %v2244, 7
  %v2246 = vsub.s32 3, %v2245
  %v2247 = vrot.slane %v1879, %v2246
  %v2248 = vlaneseq
  %v2249 = vshrl.u32 %v2248, 7
  %v2250 = vsub.s32 4, %v2249
  %v2251 = vrot.slane %v1879, %v2250
  %v2252 = vlaneseq
  %v2253 = vshrl.u32 %v2252, 7
  %v2254 = vsub.s32 5, %v2253
  %v2255 = vrot.slane %v1879, %v2254
  %v2256 = vlaneseq
  %v2257 = vshrl.u32 %v2256, 7
  %v2258 = vsub.s32 0, %v2257
  %v2259 = vrot.slane %v1883, %v2258
  %v2260 = vlaneseq
  %v2261 = vshrl.u32 %v2260, 7
  %v2262 = vsub.s32 1, %v2261
  %v2263 = vrot.slane %v1883, %v2262
  %v2264 = vlaneseq
  %v2265 = vshrl.u32 %v2264, 7
  %v2266 = vsub.s32 2, %v2265
  %v2267 = vrot.slane %v1883, %v2266
  %v2268 = vlaneseq
  %v2269 = vshrl.u32 %v2268, 7
  %v2270 = vsub.s32 3, %v2269
  %v2271 = vrot.slane %v1883, %v2270
  %v2272 = vlaneseq
  %v2273 = vshrl.u32 %v2272, 7
  %v2274 = vsub.s32 4, %v2273
  %v2275 = vrot.slane %v1883, %v2274
  %v2276 = vlaneseq
  %v2277 = vshrl.u32 %v2276, 7
  %v2278 = vsub.s32 5, %v2277
  %v2279 = vrot.slane %v1883, %v2278
  %v2328 = vlaneseq
  %v2329 = vshrl.u32 %v2328, 7
  %v2330 = vsub.s32 0, %v2329
  %v2331 = vrot.slane %v1978, %v2330
  %v2332 = vlaneseq
  %v2333 = vshrl.u32 %v2332, 7
  %v2334 = vsub.s32 1, %v2333
  %v2335 = vrot.slane %v1978, %v2334
  %v2336 = vlaneseq
  %v2337 = vshrl.u32 %v2336, 7
  %v2338 = vsub.s32 2, %v2337
  %v2339 = vrot.slane %v1978, %v2338
  %v2340 = vlaneseq
  %v2341 = vshrl.u32 %v2340, 7
  %v2342 = vsub.s32 3, %v2341
  %v2343 = vrot.slane %v1978, %v2342
  %v2344 = vlaneseq
  %v2345 = vshrl.u32 %v2344, 7
  %v2346 = vsub.s32 4, %v2345
  %v2347 = vrot.slane %v1978, %v2346
  %v2348 = vlaneseq
  %v2349 = vshrl.u32 %v2348, 7
  %v2350 = vsub.s32 5, %v2349
  %v2351 = vrot.slane %v1978, %v2350
  %v2352 = vlaneseq
  %v2353 = vshrl.u32 %v2352, 7
  %v2354 = vsub.s32 0, %v2353
  %v2355 = vrot.slane %v1982, %v2354
  %v2356 = vlaneseq
  %v2357 = vshrl.u32 %v2356, 7
  %v2358 = vsub.s32 1, %v2357
  %v2359 = vrot.slane %v1982, %v2358
  %v2360 = vlaneseq
  %v2361 = vshrl.u32 %v2360, 7
  %v2362 = vsub.s32 2, %v2361
  %v2363 = vrot.slane %v1982, %v2362
  %v2364 = vlaneseq
  %v2365 = vshrl.u32 %v2364, 7
  %v2366 = vsub.s32 3, %v2365
  %v2367 = vrot.slane %v1982, %v2366
  %v2368 = vlaneseq
  %v2369 = vshrl.u32 %v2368, 7
  %v2370 = vsub.s32 4, %v2369
  %v2371 = vrot.slane %v1982, %v2370
  %v2372 = vlaneseq
  %v2373 = vshrl.u32 %v2372, 7
  %v2374 = vsub.s32 5, %v2373
  %v2375 = vrot.slane %v1982, %v2374
  %v2376 = vlaneseq
  %v2377 = vshrl.u32 %v2376, 7
  %v2378 = vsub.s32 0, %v2377
  %v2379 = vrot.slane %v1979, %v2378
  %v2380 = vlaneseq
  %v2381 = vshrl.u32 %v2380, 7
  %v2382 = vsub.s32 1, %v2381
  %v2383 = vrot.slane %v1979, %v2382
  %v2384 = vlaneseq
  %v2385 = vshrl.u32 %v2384, 7
  %v2386 = vsub.s32 2, %v2385
  %v2387 = vrot.slane %v1979, %v2386
  %v2388 = vlaneseq
  %v2389 = vshrl.u32 %v2388, 7
  %v2390 = vsub.s32 3, %v2389
  %v2391 = vrot.slane %v1979, %v2390
  %v2392 = vlaneseq
  %v2393 = vshrl.u32 %v2392, 7
  %v2394 = vsub.s32 4, %v2393
  %v2395 = vrot.slane %v1979, %v2394
  %v2396 = vlaneseq
  %v2397 = vshrl.u32 %v2396, 7
  %v2398 = vsub.s32 5, %v2397
  %v2399 = vrot.slane %v1979, %v2398
  %v2400 = vlaneseq
  %v2401 = vshrl.u32 %v2400, 7
  %v2402 = vsub.s32 0, %v2401
  %v2403 = vrot.slane %v1983, %v2402
  %v2404 = vlaneseq
  %v2405 = vshrl.u32 %v2404, 7
  %v2406 = vsub.s32 1, %v2405
  %v2407 = vrot.slane %v1983, %v2406
  %v2408 = vlaneseq
  %v2409 = vshrl.u32 %v2408, 7
  %v2410 = vsub.s32 2, %v2409
  %v2411 = vrot.slane %v1983, %v2410
  %v2412 = vlaneseq
  %v2413 = vshrl.u32 %v2412, 7
  %v2414 = vsub.s32 3, %v2413
  %v2415 = vrot.slane %v1983, %v2414
  %v2416 = vlaneseq
  %v2417 = vshrl.u32 %v2416, 7
  %v2418 = vsub.s32 4, %v2417
  %v2419 = vrot.slane %v1983, %v2418
  %v2420 = vlaneseq
  %v2421 = vshrl.u32 %v2420, 7
  %v2422 = vsub.s32 5, %v2421
  %v2423 = vrot.slane %v1983, %v2422
  %v2424 = vlaneseq
  %v2425 = vshrl.u32 %v2424, 7
  %v2426 = vsub.s32 0, %v2425
  %v2427 = vrot.slane %v1980, %v2426
  %v2428 = vlaneseq
  %v2429 = vshrl.u32 %v2428, 7
  %v2430 = vsub.s32 1, %v2429
  %v2431 = vrot.slane %v1980, %v2430
  %v2432 = vlaneseq
  %v2433 = vshrl.u32 %v2432, 7
  %v2434 = vsub.s32 2, %v2433
  %v2435 = vrot.slane %v1980, %v2434
  %v2436 = vlaneseq
  %v2437 = vshrl.u32 %v2436, 7
  %v2438 = vsub.s32 3, %v2437
  %v2439 = vrot.slane %v1980, %v2438
  %v2440 = vlaneseq
  %v2441 = vshrl.u32 %v2440, 7
  %v2442 = vsub.s32 4, %v2441
  %v2443 = vrot.slane %v1980, %v2442
  %v2444 = vlaneseq
  %v2445 = vshrl.u32 %v2444, 7
  %v2446 = vsub.s32 5, %v2445
  %v2447 = vrot.slane %v1980, %v2446
  %v2448 = vlaneseq
  %v2449 = vshrl.u32 %v2448, 7
  %v2450 = vsub.s32 0, %v2449
  %v2451 = vrot.slane %v1984, %v2450
  %v2452 = vlaneseq
  %v2453 = vshrl.u32 %v2452, 7
  %v2454 = vsub.s32 1, %v2453
  %v2455 = vrot.slane %v1984, %v2454
  %v2456 = vlaneseq
  %v2457 = vshrl.u32 %v2456, 7
  %v2458 = vsub.s32 2, %v2457
  %v2459 = vrot.slane %v1984, %v2458
  %v2460 = vlaneseq
  %v2461 = vshrl.u32 %v2460, 7
  %v2462 = vsub.s32 3, %v2461
  %v2463 = vrot.slane %v1984, %v2462
  %v2464 = vlaneseq
  %v2465 = vshrl.u32 %v2464, 7
  %v2466 = vsub.s32 4, %v2465
  %v2467 = vrot.slane %v1984, %v2466
  %v2468 = vlaneseq
  %v2469 = vshrl.u32 %v2468, 7
  %v2470 = vsub.s32 5, %v2469
  %v2471 = vrot.slane %v1984, %v2470
  %v2472 = vlaneseq
  %v2473 = vshrl.u32 %v2472, 7
  %v2474 = vsub.s32 0, %v2473
  %v2475 = vrot.slane %v1981, %v2474
  %v2476 = vlaneseq
  %v2477 = vshrl.u32 %v2476, 7
  %v2478 = vsub.s32 1, %v2477
  %v2479 = vrot.slane %v1981, %v2478
  %v2480 = vlaneseq
  %v2481 = vshrl.u32 %v2480, 7
  %v2482 = vsub.s32 2, %v2481
  %v2483 = vrot.slane %v1981, %v2482
  %v2484 = vlaneseq
  %v2485 = vshrl.u32 %v2484, 7
  %v2486 = vsub.s32 3, %v2485
  %v2487 = vrot.slane %v1981, %v2486
  %v2488 = vlaneseq
  %v2489 = vshrl.u32 %v2488, 7
  %v2490 = vsub.s32 4, %v2489
  %v2491 = vrot.slane %v1981, %v2490
  %v2492 = vlaneseq
  %v2493 = vshrl.u32 %v2492, 7
  %v2494 = vsub.s32 5, %v2493
  %v2495 = vrot.slane %v1981, %v2494
  %v2496 = vlaneseq
  %v2497 = vshrl.u32 %v2496, 7
  %v2498 = vsub.s32 0, %v2497
  %v2499 = vrot.slane %v1985, %v2498
  %v2500 = vlaneseq
  %v2501 = vshrl.u32 %v2500, 7
  %v2502 = vsub.s32 1, %v2501
  %v2503 = vrot.slane %v1985, %v2502
  %v2504 = vlaneseq
  %v2505 = vshrl.u32 %v2504, 7
  %v2506 = vsub.s32 2, %v2505
  %v2507 = vrot.slane %v1985, %v2506
  %v2508 = vlaneseq
  %v2509 = vshrl.u32 %v2508, 7
  %v2510 = vsub.s32 3, %v2509
  %v2511 = vrot.slane %v1985, %v2510
  %v2512 = vlaneseq
  %v2513 = vshrl.u32 %v2512, 7
  %v2514 = vsub.s32 4, %v2513
  %v2515 = vrot.slane %v1985, %v2514
  %v2516 = vlaneseq
  %v2517 = vshrl.u32 %v2516, 7
  %v2518 = vsub.s32 5, %v2517
  %v2519 = vrot.slane %v1985, %v2518
  %v2568 = vlaneseq
  %v2569 = vshrl.u32 %v2568, 7
  %v2570 = vsub.s32 0, %v2569
  %v2571 = vrot.slane %v2080, %v2570
  %v2572 = vlaneseq
  %v2573 = vshrl.u32 %v2572, 7
  %v2574 = vsub.s32 1, %v2573
  %v2575 = vrot.slane %v2080, %v2574
  %v2576 = vlaneseq
  %v2577 = vshrl.u32 %v2576, 7
  %v2578 = vsub.s32 2, %v2577
  %v2579 = vrot.slane %v2080, %v2578
  %v2580 = vlaneseq
  %v2581 = vshrl.u32 %v2580, 7
  %v2582 = vsub.s32 3, %v2581
  %v2583 = vrot.slane %v2080, %v2582
  %v2584 = vlaneseq
  %v2585 = vshrl.u32 %v2584, 7
  %v2586 = vsub.s32 4, %v2585
  %v2587 = vrot.slane %v2080, %v2586
  %v2588 = vlaneseq
  %v2589 = vshrl.u32 %v2588, 7
  %v2590 = vsub.s32 5, %v2589
  %v2591 = vrot.slane %v2080, %v2590
  %v2592 = vlaneseq
  %v2593 = vshrl.u32 %v2592, 7
  %v2594 = vsub.s32 0, %v2593
  %v2595 = vrot.slane %v2084, %v2594
  %v2596 = vlaneseq
  %v2597 = vshrl.u32 %v2596, 7
  %v2598 = vsub.s32 1, %v2597
  %v2599 = vrot.slane %v2084, %v2598
  %v2600 = vlaneseq
  %v2601 = vshrl.u32 %v2600, 7
  %v2602 = vsub.s32 2, %v2601
  %v2603 = vrot.slane %v2084, %v2602
  %v2604 = vlaneseq
  %v2605 = vshrl.u32 %v2604, 7
  %v2606 = vsub.s32 3, %v2605
  %v2607 = vrot.slane %v2084, %v2606
  %v2608 = vlaneseq
  %v2609 = vshrl.u32 %v2608, 7
  %v2610 = vsub.s32 4, %v2609
  %v2611 = vrot.slane %v2084, %v2610
  %v2612 = vlaneseq
  %v2613 = vshrl.u32 %v2612, 7
  %v2614 = vsub.s32 5, %v2613
  %v2615 = vrot.slane %v2084, %v2614
  %v2616 = vlaneseq
  %v2617 = vshrl.u32 %v2616, 7
  %v2618 = vsub.s32 0, %v2617
  %v2619 = vrot.slane %v2081, %v2618
  %v2620 = vlaneseq
  %v2621 = vshrl.u32 %v2620, 7
  %v2622 = vsub.s32 1, %v2621
  %v2623 = vrot.slane %v2081, %v2622
  %v2624 = vlaneseq
  %v2625 = vshrl.u32 %v2624, 7
  %v2626 = vsub.s32 2, %v2625
  %v2627 = vrot.slane %v2081, %v2626
  %v2628 = vlaneseq
  %v2629 = vshrl.u32 %v2628, 7
  %v2630 = vsub.s32 3, %v2629
  %v2631 = vrot.slane %v2081, %v2630
  %v2632 = vlaneseq
  %v2633 = vshrl.u32 %v2632, 7
  %v2634 = vsub.s32 4, %v2633
  %v2635 = vrot.slane %v2081, %v2634
  %v2636 = vlaneseq
  %v2637 = vshrl.u32 %v2636, 7
  %v2638 = vsub.s32 5, %v2637
  %v2639 = vrot.slane %v2081, %v2638
  %v2640 = vlaneseq
  %v2641 = vshrl.u32 %v2640, 7
  %v2642 = vsub.s32 0, %v2641
  %v2643 = vrot.slane %v2085, %v2642
  %v2644 = vlaneseq
  %v2645 = vshrl.u32 %v2644, 7
  %v2646 = vsub.s32 1, %v2645
  %v2647 = vrot.slane %v2085, %v2646
  %v2648 = vlaneseq
  %v2649 = vshrl.u32 %v2648, 7
  %v2650 = vsub.s32 2, %v2649
  %v2651 = vrot.slane %v2085, %v2650
  %v2652 = vlaneseq
  %v2653 = vshrl.u32 %v2652, 7
  %v2654 = vsub.s32 3, %v2653
  %v2655 = vrot.slane %v2085, %v2654
  %v2656 = vlaneseq
  %v2657 = vshrl.u32 %v2656, 7
  %v2658 = vsub.s32 4, %v2657
  %v2659 = vrot.slane %v2085, %v2658
  %v2660 = vlaneseq
  %v2661 = vshrl.u32 %v2660, 7
  %v2662 = vsub.s32 5, %v2661
  %v2663 = vrot.slane %v2085, %v2662
  %v2664 = vlaneseq
  %v2665 = vshrl.u32 %v2664, 7
  %v2666 = vsub.s32 0, %v2665
  %v2667 = vrot.slane %v2082, %v2666
  %v2668 = vlaneseq
  %v2669 = vshrl.u32 %v2668, 7
  %v2670 = vsub.s32 1, %v2669
  %v2671 = vrot.slane %v2082, %v2670
  %v2672 = vlaneseq
  %v2673 = vshrl.u32 %v2672, 7
  %v2674 = vsub.s32 2, %v2673
  %v2675 = vrot.slane %v2082, %v2674
  %v2676 = vlaneseq
  %v2677 = vshrl.u32 %v2676, 7
  %v2678 = vsub.s32 3, %v2677
  %v2679 = vrot.slane %v2082, %v2678
  %v2680 = vlaneseq
  %v2681 = vshrl.u32 %v2680, 7
  %v2682 = vsub.s32 4, %v2681
  %v2683 = vrot.slane %v2082, %v2682
  %v2684 = vlaneseq
  %v2685 = vshrl.u32 %v2684, 7
  %v2686 = vsub.s32 5, %v2685
  %v2687 = vrot.slane %v2082, %v2686
  %v2688 = vlaneseq
  %v2689 = vshrl.u32 %v2688, 7
  %v2690 = vsub.s32 0, %v2689
  %v2691 = vrot.slane %v2086, %v2690
  %v2692 = vlaneseq
  %v2693 = vshrl.u32 %v2692, 7
  %v2694 = vsub.s32 1, %v2693
  %v2695 = vrot.slane %v2086, %v2694
  %v2696 = vlaneseq
  %v2697 = vshrl.u32 %v2696, 7
  %v2698 = vsub.s32 2, %v2697
  %v2699 = vrot.slane %v2086, %v2698
  %v2700 = vlaneseq
  %v2701 = vshrl.u32 %v2700, 7
  %v2702 = vsub.s32 3, %v2701
  %v2703 = vrot.slane %v2086, %v2702
  %v2704 = vlaneseq
  %v2705 = vshrl.u32 %v2704, 7
  %v2706 = vsub.s32 4, %v2705
  %v2707 = vrot.slane %v2086, %v2706
  %v2708 = vlaneseq
  %v2709 = vshrl.u32 %v2708, 7
  %v2710 = vsub.s32 5, %v2709
  %v2711 = vrot.slane %v2086, %v2710
  %v2712 = vlaneseq
  %v2713 = vshrl.u32 %v2712, 7
  %v2714 = vsub.s32 0, %v2713
  %v2715 = vrot.slane %v2083, %v2714
  %v2716 = vlaneseq
  %v2717 = vshrl.u32 %v2716, 7
  %v2718 = vsub.s32 1, %v2717
  %v2719 = vrot.slane %v2083, %v2718
  %v2720 = vlaneseq
  %v2721 = vshrl.u32 %v2720, 7
  %v2722 = vsub.s32 2, %v2721
  %v2723 = vrot.slane %v2083, %v2722
  %v2724 = vlaneseq
  %v2725 = vshrl.u32 %v2724, 7
  %v2726 = vsub.s32 3, %v2725
  %v2727 = vrot.slane %v2083, %v2726
  %v2728 = vlaneseq
  %v2729 = vshrl.u32 %v2728, 7
  %v2730 = vsub.s32 4, %v2729
  %v2731 = vrot.slane %v2083, %v2730
  %v2732 = vlaneseq
  %v2733 = vshrl.u32 %v2732, 7
  %v2734 = vsub.s32 5, %v2733
  %v2735 = vrot.slane %v2083, %v2734
  %v2736 = vlaneseq
  %v2737 = vshrl.u32 %v2736, 7
  %v2738 = vsub.s32 0, %v2737
  %v2739 = vrot.slane %v2087, %v2738
  %v2740 = vlaneseq
  %v2741 = vshrl.u32 %v2740, 7
  %v2742 = vsub.s32 1, %v2741
  %v2743 = vrot.slane %v2087, %v2742
  %v2744 = vlaneseq
  %v2745 = vshrl.u32 %v2744, 7
  %v2746 = vsub.s32 2, %v2745
  %v2747 = vrot.slane %v2087, %v2746
  %v2748 = vlaneseq
  %v2749 = vshrl.u32 %v2748, 7
  %v2750 = vsub.s32 3, %v2749
  %v2751 = vrot.slane %v2087, %v2750
  %v2752 = vlaneseq
  %v2753 = vshrl.u32 %v2752, 7
  %v2754 = vsub.s32 4, %v2753
  %v2755 = vrot.slane %v2087, %v2754
  %v2756 = vlaneseq
  %v2757 = vshrl.u32 %v2756, 7
  %v2758 = vsub.s32 5, %v2757
  %v2759 = vrot.slane %v2087, %v2758
  %vm2808 = vcmask 1040384
  %v2809 = vsel %vm2808, %v2091, %v2331
  %v2810 = vsel %vm2808, %v2095, %v2335
  %v2811 = vsel %vm2808, %v2099, %v2339
  %v2812 = vsel %vm2808, %v2103, %v2343
  %v2813 = vsel %vm2808, %v2107, %v2347
  %v2814 = vsel %vm2808, %v2111, %v2351
  %v2815 = vsel %vm2808, %v2115, %v2355
  %v2816 = vsel %vm2808, %v2119, %v2359
  %v2817 = vsel %vm2808, %v2123, %v2363
  %v2818 = vsel %vm2808, %v2127, %v2367
  %v2819 = vsel %vm2808, %v2131, %v2371
  %v2820 = vsel %vm2808, %v2135, %v2375
  %v2821 = vsel %vm2808, %v2139, %v2379
  %v2822 = vsel %vm2808, %v2143, %v2383
  %v2823 = vsel %vm2808, %v2147, %v2387
  %v2824 = vsel %vm2808, %v2151, %v2391
  %v2825 = vsel %vm2808, %v2155, %v2395
  %v2826 = vsel %vm2808, %v2159, %v2399
  %v2827 = vsel %vm2808, %v2163, %v2403
  %v2828 = vsel %vm2808, %v2167, %v2407
  %v2829 = vsel %vm2808, %v2171, %v2411
  %v2830 = vsel %vm2808, %v2175, %v2415
  %v2831 = vsel %vm2808, %v2179, %v2419
  %v2832 = vsel %vm2808, %v2183, %v2423
  %v2833 = vsel %vm2808, %v2187, %v2427
  %v2834 = vsel %vm2808, %v2191, %v2431
  %v2835 = vsel %vm2808, %v2195, %v2435
  %v2836 = vsel %vm2808, %v2199, %v2439
  %v2837 = vsel %vm2808, %v2203, %v2443
  %v2838 = vsel %vm2808, %v2207, %v2447
  %v2839 = vsel %vm2808, %v2211, %v2451
  %v2840 = vsel %vm2808, %v2215, %v2455
  %v2841 = vsel %vm2808, %v2219, %v2459
  %v2842 = vsel %vm2808, %v2223, %v2463
  %v2843 = vsel %vm2808, %v2227, %v2467
  %v2844 = vsel %vm2808, %v2231, %v2471
  %v2845 = vsel %vm2808, %v2235, %v2475
  %v2846 = vsel %vm2808, %v2239, %v2479
  %v2847 = vsel %vm2808, %v2243, %v2483
  %v2848 = vsel %vm2808, %v2247, %v2487
  %v2849 = vsel %vm2808, %v2251, %v2491
  %v2850 = vsel %vm2808, %v2255, %v2495
  %v2851 = vsel %vm2808, %v2259, %v2499
  %v2852 = vsel %vm2808, %v2263, %v2503
  %v2853 = vsel %vm2808, %v2267, %v2507
  %v2854 = vsel %vm2808, %v2271, %v2511
  %v2855 = vsel %vm2808, %v2275, %v2515
  %v2856 = vsel %vm2808, %v2279, %v2519
  %vm2857 = vcmask 1041408
  %v2858 = vsel %vm2857, %v2809, %v2571
  %v2859 = vsel %vm2857, %v2810, %v2575
  %v2860 = vsel %vm2857, %v2811, %v2579
  %v2861 = vsel %vm2857, %v2812, %v2583
  %v2862 = vsel %vm2857, %v2813, %v2587
  %v2863 = vsel %vm2857, %v2814, %v2591
  %v2864 = vsel %vm2857, %v2815, %v2595
  %v2865 = vsel %vm2857, %v2816, %v2599
  %v2866 = vsel %vm2857, %v2817, %v2603
  %v2867 = vsel %vm2857, %v2818, %v2607
  %v2868 = vsel %vm2857, %v2819, %v2611
  %v2869 = vsel %vm2857, %v2820, %v2615
  %v2870 = vsel %vm2857, %v2821, %v2619
  %v2871 = vsel %vm2857, %v2822, %v2623
  %v2872 = vsel %vm2857, %v2823, %v2627
  %v2873 = vsel %vm2857, %v2824, %v2631
  %v2874 = vsel %vm2857, %v2825, %v2635
  %v2875 = vsel %vm2857, %v2826, %v2639
  %v2876 = vsel %vm2857, %v2827, %v2643
  %v2877 = vsel %vm2857, %v2828, %v2647
  %v2878 = vsel %vm2857, %v2829, %v2651
  %v2879 = vsel %vm2857, %v2830, %v2655
  %v2880 = vsel %vm2857, %v2831, %v2659
  %v2881 = vsel %vm2857, %v2832, %v2663
  %v2882 = vsel %vm2857, %v2833, %v2667
  %v2883 = vsel %vm2857, %v2834, %v2671
  %v2884 = vsel %vm2857, %v2835, %v2675
  %v2885 = vsel %vm2857, %v2836, %v2679
  %v2886 = vsel %vm2857, %v2837, %v2683
  %v2887 = vsel %vm2857, %v2838, %v2687
  %v2888 = vsel %vm2857, %v2839, %v2691
  %v2889 = vsel %vm2857, %v2840, %v2695
  %v2890 = vsel %vm2857, %v2841, %v2699
  %v2891 = vsel %vm2857, %v2842, %v2703
  %v2892 = vsel %vm2857, %v2843, %v2707
  %v2893 = vsel %vm2857, %v2844, %v2711
  %v2894 = vsel %vm2857, %v2845, %v2715
  %v2895 = vsel %vm2857, %v2846, %v2719
  %v2896 = vsel %vm2857, %v2847, %v2723
  %v2897 = vsel %vm2857, %v2848, %v2727
  %v2898 = vsel %vm2857, %v2849, %v2731
  %v2899 = vsel %vm2857, %v2850, %v2735
  %v2900 = vsel %vm2857, %v2851, %v2739
  %v2901 = vsel %vm2857, %v2852, %v2743
  %v2902 = vsel %vm2857, %v2853, %v2747
  %v2903 = vsel %vm2857, %v2854, %v2751
  %v2904 = vsel %vm2857, %v2855, %v2755
  %v2905 = vsel %vm2857, %v2856, %v2759
  %v2954 = vcombine.low %v2858, %v2859
  %v2955 = vcombine.low %v2860, %v2861
  %v2956 = vcombine.low %v2862, %v2863
  %v2958 = vunpack.c.l.s4 1966171168
  %v2959 = vunpack.c.0.s8 %v2958
  %v2960 = vlaneseq
  %v2961 = vshrl.u32 %v2960, 7
  %v2962 = vsub.s32 %v2959, %v2961
  %v2963 = vrot.slane %v2954, %v2962
  %v2965 = vunpack.c.l.s4 1966171168
  %v2966 = vunpack.c.0.s8 %v2965
  %v2967 = vlaneseq
  %v2968 = vshrl.u32 %v2967, 7
  %v2969 = vsub.s32 %v2966, %v2968
  %v2970 = vrot.slane %v2955, %v2969
  %v2972 = vunpack.c.l.s4 1966171168
  %v2973 = vunpack.c.0.s8 %v2972
  %v2974 = vlaneseq
  %v2975 = vshrl.u32 %v2974, 7
  %v2976 = vsub.s32 %v2973, %v2975
  %v2977 = vrot.slane %v2956, %v2976
  %v2978 = vcombine.low %v2963, %v2970
  %v2979 = vcombine.high %v2963, %v2970
  %v2980 = vcombine.high %v2977, %v2977
  %v2982 = vunpack.c.l.s4 1966171168
  %v2983 = vunpack.c.0.s8 %v2982
  %v2984 = vlaneseq
  %v2985 = vshrl.u32 %v2984, 7
  %v2986 = vsub.s32 %v2983, %v2985
  %v2987 = vrot.slane %v2978, %v2986
  %v2989 = vunpack.c.l.s4 1966171168
  %v2990 = vunpack.c.0.s8 %v2989
  %v2991 = vlaneseq
  %v2992 = vshrl.u32 %v2991, 7
  %v2993 = vsub.s32 %v2990, %v2992
  %v2994 = vrot.slane %v2979, %v2993
  %v2996 = vunpack.c.l.s4 1966171168
  %v2997 = vunpack.c.0.s8 %v2996
  %v2998 = vlaneseq
  %v2999 = vshrl.u32 %v2998, 7
  %v3000 = vsub.s32 %v2997, %v2999
  %v3001 = vrot.slane %v2977, %v3000
  %v3003 = vunpack.c.l.s4 1966171168
  %v3004 = vunpack.c.0.s8 %v3003
  %v3005 = vlaneseq
  %v3006 = vshrl.u32 %v3005, 7
  %v3007 = vsub.s32 %v3004, %v3006
  %v3008 = vrot.slane %v2980, %v3007
  %v3009 = vcombine.low %v2987, %v3001
  %v3010 = vcombine.high %v2987, %v3001
  %v3011 = vcombine.low %v2994, %v3008
  %v3012 = vcombine.low %v2864, %v2865
  %v3013 = vcombine.low %v2866, %v2867
  %v3014 = vcombine.low %v2868, %v2869
  %v3016 = vunpack.c.l.s4 1966171168
  %v3017 = vunpack.c.0.s8 %v3016
  %v3018 = vlaneseq
  %v3019 = vshrl.u32 %v3018, 7
  %v3020 = vsub.s32 %v3017, %v3019
  %v3021 = vrot.slane %v3012, %v3020
  %v3023 = vunpack.c.l.s4 1966171168
  %v3024 = vunpack.c.0.s8 %v3023
  %v3025 = vlaneseq
  %v3026 = vshrl.u32 %v3025, 7
  %v3027 = vsub.s32 %v3024, %v3026
  %v3028 = vrot.slane %v3013, %v3027
  %v3030 = vunpack.c.l.s4 1966171168
  %v3031 = vunpack.c.0.s8 %v3030
  %v3032 = vlaneseq
  %v3033 = vshrl.u32 %v3032, 7
  %v3034 = vsub.s32 %v3031, %v3033
  %v3035 = vrot.slane %v3014, %v3034
  %v3036 = vcombine.low %v3021, %v3028
  %v3037 = vcombine.high %v3021, %v3028
  %v3038 = vcombine.high %v3035, %v3035
  %v3040 = vunpack.c.l.s4 1966171168
  %v3041 = vunpack.c.0.s8 %v3040
  %v3042 = vlaneseq
  %v3043 = vshrl.u32 %v3042, 7
  %v3044 = vsub.s32 %v3041, %v3043
  %v3045 = vrot.slane %v3036, %v3044
  %v3047 = vunpack.c.l.s4 1966171168
  %v3048 = vunpack.c.0.s8 %v3047
  %v3049 = vlaneseq
  %v3050 = vshrl.u32 %v3049, 7
  %v3051 = vsub.s32 %v3048, %v3050
  %v3052 = vrot.slane %v3037, %v3051
  %v3054 = vunpack.c.l.s4 1966171168
  %v3055 = vunpack.c.0.s8 %v3054
  %v3056 = vlaneseq
  %v3057 = vshrl.u32 %v3056, 7
  %v3058 = vsub.s32 %v3055, %v3057
  %v3059 = vrot.slane %v3035, %v3058
  %v3061 = vunpack.c.l.s4 1966171168
  %v3062 = vunpack.c.0.s8 %v3061
  %v3063 = vlaneseq
  %v3064 = vshrl.u32 %v3063, 7
  %v3065 = vsub.s32 %v3062, %v3064
  %v3066 = vrot.slane %v3038, %v3065
  %v3067 = vcombine.low %v3045, %v3059
  %v3068 = vcombine.high %v3045, %v3059
  %v3069 = vcombine.low %v3052, %v3066
  %v3070 = vcombine.low %v2870, %v2871
  %v3071 = vcombine.low %v2872, %v2873
  %v3072 = vcombine.low %v2874, %v2875
  %v3074 = vunpack.c.l.s4 1966171168
  %v3075 = vunpack.c.0.s8 %v3074
  %v3076 = vlaneseq
  %v3077 = vshrl.u32 %v3076, 7
  %v3078 = vsub.s32 %v3075, %v3077
  %v3079 = vrot.slane %v3070, %v3078
  %v3081 = vunpack.c.l.s4 1966171168
  %v3082 = vunpack.c.0.s8 %v3081
  %v3083 = vlaneseq
  %v3084 = vshrl.u32 %v3083, 7
  %v3085 = vsub.s32 %v3082, %v3084
  %v3086 = vrot.slane %v3071, %v3085
  %v3088 = vunpack.c.l.s4 1966171168
  %v3089 = vunpack.c.0.s8 %v3088
  %v3090 = vlaneseq
  %v3091 = vshrl.u32 %v3090, 7
  %v3092 = vsub.s32 %v3089, %v3091
  %v3093 = vrot.slane %v3072, %v3092
  %v3094 = vcombine.low %v3079, %v3086
  %v3095 = vcombine.high %v3079, %v3086
  %v3096 = vcombine.high %v3093, %v3093
  %v3098 = vunpack.c.l.s4 1966171168
  %v3099 = vunpack.c.0.s8 %v3098
  %v3100 = vlaneseq
  %v3101 = vshrl.u32 %v3100, 7
  %v3102 = vsub.s32 %v3099, %v3101
  %v3103 = vrot.slane %v3094, %v3102
  %v3105 = vunpack.c.l.s4 1966171168
  %v3106 = vunpack.c.0.s8 %v3105
  %v3107 = vlaneseq
  %v3108 = vshrl.u32 %v3107, 7
  %v3109 = vsub.s32 %v3106, %v3108
  %v3110 = vrot.slane %v3095, %v3109
  %v3112 = vunpack.c.l.s4 1966171168
  %v3113 = vunpack.c.0.s8 %v3112
  %v3114 = vlaneseq
  %v3115 = vshrl.u32 %v3114, 7
  %v3116 = vsub.s32 %v3113, %v3115
  %v3117 = vrot.slane %v3093, %v3116
  %v3119 = vunpack.c.l.s4 1966171168
  %v3120 = vunpack.c.0.s8 %v3119
  %v3121 = vlaneseq
  %v3122 = vshrl.u32 %v3121, 7
  %v3123 = vsub.s32 %v3120, %v3122
  %v3124 = vrot.slane %v3096, %v3123
  %v3125 = vcombine.low %v3103, %v3117
  %v3126 = vcombine.high %v3103, %v3117
  %v3127 = vcombine.low %v3110, %v3124
  %v3128 = vcombine.low %v2876, %v2877
  %v3129 = vcombine.low %v2878, %v2879
  %v3130 = vcombine.low %v2880, %v2881
  %v3132 = vunpack.c.l.s4 1966171168
  %v3133 = vunpack.c.0.s8 %v3132
  %v3134 = vlaneseq
  %v3135 = vshrl.u32 %v3134, 7
  %v3136 = vsub.s32 %v3133, %v3135
  %v3137 = vrot.slane %v3128, %v3136
  %v3139 = vunpack.c.l.s4 1966171168
  %v3140 = vunpack.c.0.s8 %v3139
  %v3141 = vlaneseq
  %v3142 = vshrl.u32 %v3141, 7
  %v3143 = vsub.s32 %v3140, %v3142
  %v3144 = vrot.slane %v3129, %v3143
  %v3146 = vunpack.c.l.s4 1966171168
  %v3147 = vunpack.c.0.s8 %v3146
  %v3148 = vlaneseq
  %v3149 = vshrl.u32 %v3148, 7
  %v3150 = vsub.s32 %v3147, %v3149
  %v3151 = vrot.slane %v3130, %v3150
  %v3152 = vcombine.low %v3137, %v3144
  %v3153 = vcombine.high %v3137, %v3144
  %v3154 = vcombine.high %v3151, %v3151
  %v3156 = vunpack.c.l.s4 1966171168
  %v3157 = vunpack.c.0.s8 %v3156
  %v3158 = vlaneseq
  %v3159 = vshrl.u32 %v3158, 7
  %v3160 = vsub.s32 %v3157, %v3159
  %v3161 = vrot.slane %v3152, %v3160
  %v3163 = vunpack.c.l.s4 1966171168
  %v3164 = vunpack.c.0.s8 %v3163
  %v3165 = vlaneseq
  %v3166 = vshrl.u32 %v3165, 7
  %v3167 = vsub.s32 %v3164, %v3166
  %v3168 = vrot.slane %v3153, %v3167
  %v3170 = vunpack.c.l.s4 1966171168
  %v3171 = vunpack.c.0.s8 %v3170
  %v3172 = vlaneseq
  %v3173 = vshrl.u32 %v3172, 7
  %v3174 = vsub.s32 %v3171, %v3173
  %v3175 = vrot.slane %v3151, %v3174
  %v3177 = vunpack.c.l.s4 1966171168
  %v3178 = vunpack.c.0.s8 %v3177
  %v3179 = vlaneseq
  %v3180 = vshrl.u32 %v3179, 7
  %v3181 = vsub.s32 %v3178, %v3180
  %v3182 = vrot.slane %v3154, %v3181
  %v3183 = vcombine.low %v3161, %v3175
  %v3184 = vcombine.high %v3161, %v3175
  %v3185 = vcombine.low %v3168, %v3182
  %v3186 = vcombine.low %v2882, %v2883
  %v3187 = vcombine.low %v2884, %v2885
  %v3188 = vcombine.low %v2886, %v2887
  %v3190 = vunpack.c.l.s4 1966171168
  %v3191 = vunpack.c.0.s8 %v3190
  %v3192 = vlaneseq
  %v3193 = vshrl.u32 %v3192, 7
  %v3194 = vsub.s32 %v3191, %v3193
  %v3195 = vrot.slane %v3186, %v3194
  %v3197 = vunpack.c.l.s4 1966171168
  %v3198 = vunpack.c.0.s8 %v3197
  %v3199 = vlaneseq
  %v3200 = vshrl.u32 %v3199, 7
  %v3201 = vsub.s32 %v3198, %v3200
  %v3202 = vrot.slane %v3187, %v3201
  %v3204 = vunpack.c.l.s4 1966171168
  %v3205 = vunpack.c.0.s8 %v3204
  %v3206 = vlaneseq
  %v3207 = vshrl.u32 %v3206, 7
  %v3208 = vsub.s32 %v3205, %v3207
  %v3209 = vrot.slane %v3188, %v3208
  %v3210 = vcombine.low %v3195, %v3202
  %v3211 = vcombine.high %v3195, %v3202
  %v3212 = vcombine.high %v3209, %v3209
  %v3214 = vunpack.c.l.s4 1966171168
  %v3215 = vunpack.c.0.s8 %v3214
  %v3216 = vlaneseq
  %v3217 = vshrl.u32 %v3216, 7
  %v3218 = vsub.s32 %v3215, %v3217
  %v3219 = vrot.slane %v3210, %v3218
  %v3221 = vunpack.c.l.s4 1966171168
  %v3222 = vunpack.c.0.s8 %v3221
  %v3223 = vlaneseq
  %v3224 = vshrl.u32 %v3223, 7
  %v3225 = vsub.s32 %v3222, %v3224
  %v3226 = vrot.slane %v3211, %v3225
  %v3228 = vunpack.c.l.s4 1966171168
  %v3229 = vunpack.c.0.s8 %v3228
  %v3230 = vlaneseq
  %v3231 = vshrl.u32 %v3230, 7
  %v3232 = vsub.s32 %v3229, %v3231
  %v3233 = vrot.slane %v3209, %v3232
  %v3235 = vunpack.c.l.s4 1966171168
  %v3236 = vunpack.c.0.s8 %v3235
  %v3237 = vlaneseq
  %v3238 = vshrl.u32 %v3237, 7
  %v3239 = vsub.s32 %v3236, %v3238
  %v3240 = vrot.slane %v3212, %v3239
  %v3241 = vcombine.low %v3219, %v3233
  %v3242 = vcombine.high %v3219, %v3233
  %v3243 = vcombine.low %v3226, %v3240
  %v3244 = vcombine.low %v2888, %v2889
  %v3245 = vcombine.low %v2890, %v2891
  %v3246 = vcombine.low %v2892, %v2893
  %v3248 = vunpack.c.l.s4 1966171168
  %v3249 = vunpack.c.0.s8 %v3248
  %v3250 = vlaneseq
  %v3251 = vshrl.u32 %v3250, 7
  %v3252 = vsub.s32 %v3249, %v3251
  %v3253 = vrot.slane %v3244, %v3252
  %v3255 = vunpack.c.l.s4 1966171168
  %v3256 = vunpack.c.0.s8 %v3255
  %v3257 = vlaneseq
  %v3258 = vshrl.u32 %v3257, 7
  %v3259 = vsub.s32 %v3256, %v3258
  %v3260 = vrot.slane %v3245, %v3259
  %v3262 = vunpack.c.l.s4 1966171168
  %v3263 = vunpack.c.0.s8 %v3262
  %v3264 = vlaneseq
  %v3265 = vshrl.u32 %v3264, 7
  %v3266 = vsub.s32 %v3263, %v3265
  %v3267 = vrot.slane %v3246, %v3266
  %v3268 = vcombine.low %v3253, %v3260
  %v3269 = vcombine.high %v3253, %v3260
  %v3270 = vcombine.high %v3267, %v3267
  %v3272 = vunpack.c.l.s4 1966171168
  %v3273 = vunpack.c.0.s8 %v3272
  %v3274 = vlaneseq
  %v3275 = vshrl.u32 %v3274, 7
  %v3276 = vsub.s32 %v3273, %v3275
  %v3277 = vrot.slane %v3268, %v3276
  %v3279 = vunpack.c.l.s4 1966171168
  %v3280 = vunpack.c.0.s8 %v3279
  %v3281 = vlaneseq
  %v3282 = vshrl.u32 %v3281, 7
  %v3283 = vsub.s32 %v3280, %v3282
  %v3284 = vrot.slane %v3269, %v3283
  %v3286 = vunpack.c.l.s4 1966171168
  %v3287 = vunpack.c.0.s8 %v3286
  %v3288 = vlaneseq
  %v3289 = vshrl.u32 %v3288, 7
  %v3290 = vsub.s32 %v3287, %v3289
  %v3291 = vrot.slane %v3267, %v3290
  %v3293 = vunpack.c.l.s4 1966171168
  %v3294 = vunpack.c.0.s8 %v3293
  %v3295 = vlaneseq
  %v3296 = vshrl.u32 %v3295, 7
  %v3297 = vsub.s32 %v3294, %v3296
  %v3298 = vrot.slane %v3270, %v3297
  %v3299 = vcombine.low %v3277, %v3291
  %v3300 = vcombine.high %v3277, %v3291
  %v3301 = vcombine.low %v3284, %v3298
  %v3302 = vcombine.low %v2894, %v2895
  %v3303 = vcombine.low %v2896, %v2897
  %v3304 = vcombine.low %v2898, %v2899
  %v3306 = vunpack.c.l.s4 1966171168
  %v3307 = vunpack.c.0.s8 %v3306
  %v3308 = vlaneseq
  %v3309 = vshrl.u32 %v3308, 7
  %v3310 = vsub.s32 %v3307, %v3309
  %v3311 = vrot.slane %v3302, %v3310
  %v3313 = vunpack.c.l.s4 1966171168
  %v3314 = vunpack.c.0.s8 %v3313
  %v3315 = vlaneseq
  %v3316 = vshrl.u32 %v3315, 7
  %v3317 = vsub.s32 %v3314, %v3316
  %v3318 = vrot.slane %v3303, %v3317
  %v3320 = vunpack.c.l.s4 1966171168
  %v3321 = vunpack.c.0.s8 %v3320
  %v3322 = vlaneseq
  %v3323 = vshrl.u32 %v3322, 7
  %v3324 = vsub.s32 %v3321, %v3323
  %v3325 = vrot.slane %v3304, %v3324
  %v3326 = vcombine.low %v3311, %v3318
  %v3327 = vcombine.high %v3311, %v3318
  %v3328 = vcombine.high %v3325, %v3325
  %v3330 = vunpack.c.l.s4 1966171168
  %v3331 = vunpack.c.0.s8 %v3330
  %v3332 = vlaneseq
  %v3333 = vshrl.u32 %v3332, 7
  %v3334 = vsub.s32 %v3331, %v3333
  %v3335 = vrot.slane %v3326, %v3334
  %v3337 = vunpack.c.l.s4 1966171168
  %v3338 = vunpack.c.0.s8 %v3337
  %v3339 = vlaneseq
  %v3340 = vshrl.u32 %v3339, 7
  %v3341 = vsub.s32 %v3338, %v3340
  %v3342 = vrot.slane %v3327, %v3341
  %v3344 = vunpack.c.l.s4 1966171168
  %v3345 = vunpack.c.0.s8 %v3344
  %v3346 = vlaneseq
  %v3347 = vshrl.u32 %v3346, 7
  %v3348 = vsub.s32 %v3345, %v3347
  %v3349 = vrot.slane %v3325, %v3348
  %v3351 = vunpack.c.l.s4 1966171168
  %v3352 = vunpack.c.0.s8 %v3351
  %v3353 = vlaneseq
  %v3354 = vshrl.u32 %v3353, 7
  %v3355 = vsub.s32 %v3352, %v3354
  %v3356 = vrot.slane %v3328, %v3355
  %v3357 = vcombine.low %v3335, %v3349
  %v3358 = vcombine.high %v3335, %v3349
  %v3359 = vcombine.low %v3342, %v3356
  %v3360 = vcombine.low %v2900, %v2901
  %v3361 = vcombine.low %v2902, %v2903
  %v3362 = vcombine.low %v2904, %v2905
  %v3364 = vunpack.c.l.s4 1966171168
  %v3365 = vunpack.c.0.s8 %v3364
  %v3366 = vlaneseq
  %v3367 = vshrl.u32 %v3366, 7
  %v3368 = vsub.s32 %v3365, %v3367
  %v3369 = vrot.slane %v3360, %v3368
  %v3371 = vunpack.c.l.s4 1966171168
  %v3372 = vunpack.c.0.s8 %v3371
  %v3373 = vlaneseq
  %v3374 = vshrl.u32 %v3373, 7
  %v3375 = vsub.s32 %v3372, %v3374
  %v3376 = vrot.slane %v3361, %v3375
  %v3378 = vunpack.c.l.s4 1966171168
  %v3379 = vunpack.c.0.s8 %v3378
  %v3380 = vlaneseq
  %v3381 = vshrl.u32 %v3380, 7
  %v3382 = vsub.s32 %v3379, %v3381
  %v3383 = vrot.slane %v3362, %v3382
  %v3384 = vcombine.low %v3369, %v3376
  %v3385 = vcombine.high %v3369, %v3376
  %v3386 = vcombine.high %v3383, %v3383
  %v3388 = vunpack.c.l.s4 1966171168
  %v3389 = vunpack.c.0.s8 %v3388
  %v3390 = vlaneseq
  %v3391 = vshrl.u32 %v3390, 7
  %v3392 = vsub.s32 %v3389, %v3391
  %v3393 = vrot.slane %v3384, %v3392
  %v3395 = vunpack.c.l.s4 1966171168
  %v3396 = vunpack.c.0.s8 %v3395
  %v3397 = vlaneseq
  %v3398 = vshrl.u32 %v3397, 7
  %v3399 = vsub.s32 %v3396, %v3398
  %v3400 = vrot.slane %v3385, %v3399
  %v3402 = vunpack.c.l.s4 1966171168
  %v3403 = vunpack.c.0.s8 %v3402
  %v3404 = vlaneseq
  %v3405 = vshrl.u32 %v3404, 7
  %v3406 = vsub.s32 %v3403, %v3405
  %v3407 = vrot.slane %v3383, %v3406
  %v3409 = vunpack.c.l.s4 1966171168
  %v3410 = vunpack.c.0.s8 %v3409
  %v3411 = vlaneseq
  %v3412 = vshrl.u32 %v3411, 7
  %v3413 = vsub.s32 %v3410, %v3412
  %v3414 = vrot.slane %v3386, %v3413
  %v3415 = vcombine.low %v3393, %v3407
  %v3416 = vcombine.high %v3393, %v3407
  %v3417 = vcombine.low %v3400, %v3414
  %v3418 = vld [vmem:[%s3] sm:$0xff]
  %v3419 = vld [vmem:[%s3 + $0x8] sm:$0xff]
  %v3420 = vld [vmem:[%s3 + $0x10] sm:$0xff]
  %v3421 = vld [vmem:[%s3 + $0x18] sm:$0xff]
  %v3422 = vld [vmem:[%s3 + $0x20] sm:$0xff]
  %v3423 = vld [vmem:[%s3 + $0x28] sm:$0xff]
  %v3424 = vld [vmem:[%s3 + $0x30] sm:$0xff]
  %v3425 = vld [vmem:[%s3 + $0x38] sm:$0xff]
  %v3426 = vld [vmem:[%s3 + $0x40] sm:$0xff]
  %v3427 = vld [vmem:[%s3 + $0x48] sm:$0xff]
  %v3428 = vld [vmem:[%s3 + $0x50] sm:$0xff]
  %v3429 = vld [vmem:[%s3 + $0x58] sm:$0xff]
  %v3430 = vld [vmem:[%s3 + $0x60] sm:$0xff]
  %v3431 = vld [vmem:[%s3 + $0x68] sm:$0xff]
  %v3432 = vld [vmem:[%s3 + $0x70] sm:$0xff]
  %v3433 = vld [vmem:[%s3 + $0x78] sm:$0xff]
  %v3434 = vld [vmem:[%s3 + $0x80] sm:$0xff]
  %v3435 = vld [vmem:[%s3 + $0x88] sm:$0xff]
  %v3436 = vld [vmem:[%s3 + $0x90] sm:$0xff]
  %v3437 = vld [vmem:[%s3 + $0x98] sm:$0xff]
  %v3438 = vld [vmem:[%s3 + $0xa0] sm:$0xff]
  %v3439 = vld [vmem:[%s3 + $0xa8] sm:$0xff]
  %v3440 = vld [vmem:[%s3 + $0xb0] sm:$0xff]
  %v3441 = vld [vmem:[%s3 + $0xb8] sm:$0xff]
  %v3442 = vld [vmem:[%s3 + $0xc0] sm:$0xff]
  %v3443 = vld [vmem:[%s3 + $0xc8] sm:$0xff]
  %v3444 = vld [vmem:[%s3 + $0xd0] sm:$0xff]
  %v3445 = vld [vmem:[%s3 + $0xd8] sm:$0xff]
  %v3446 = vld [vmem:[%s3 + $0xe0] sm:$0xff]
  %v3447 = vld [vmem:[%s3 + $0xe8] sm:$0xff]
  %v3448 = vld [vmem:[%s3 + $0xf0] sm:$0xff]
  %v3449 = vld [vmem:[%s3 + $0xf8] sm:$0xff]
  %v3450 = vld [vmem:[%s3 + $0x100] sm:$0xff]
  %v3451 = vld [vmem:[%s3 + $0x108] sm:$0xff]
  %v3452 = vld [vmem:[%s3 + $0x110] sm:$0xff]
  %v3453 = vld [vmem:[%s3 + $0x118] sm:$0xff]
  %v3454 = vld [vmem:[%s3 + $0x120] sm:$0xff]
  %v3455 = vld [vmem:[%s3 + $0x128] sm:$0xff]
  %v3456 = vld [vmem:[%s3 + $0x130] sm:$0xff]
  %v3457 = vld [vmem:[%s3 + $0x138] sm:$0xff]
  %v3458 = vld [vmem:[%s3 + $0x140] sm:$0xff]
  %v3459 = vld [vmem:[%s3 + $0x148] sm:$0xff]
  %v3460 = vld [vmem:[%s3 + $0x150] sm:$0xff]
  %v3461 = vld [vmem:[%s3 + $0x158] sm:$0xff]
  %v3462 = vld [vmem:[%s3 + $0x160] sm:$0xff]
  %v3463 = vld [vmem:[%s3 + $0x168] sm:$0xff]
  %v3464 = vld [vmem:[%s3 + $0x170] sm:$0xff]
  %v3465 = vld [vmem:[%s3 + $0x178] sm:$0xff]
  %v3466 = vld [vmem:[%s3 + $0x180] sm:$0xff]
  %v3467 = vld [vmem:[%s3 + $0x188] sm:$0xff]
  %v3468 = vld [vmem:[%s3 + $0x190] sm:$0xff]
  %v3469 = vld [vmem:[%s3 + $0x198] sm:$0xff]
  %v3470 = vld [vmem:[%s3 + $0x1a0] sm:$0xff]
  %v3471 = vld [vmem:[%s3 + $0x1a8] sm:$0xff]
  %v3472 = vld [vmem:[%s3 + $0x1b0] sm:$0xff]
  %v3473 = vld [vmem:[%s3 + $0x1b8] sm:$0xff]
  %v3474 = vld [vmem:[%s3 + $0x1c0] sm:$0xff]
  %v3475 = vld [vmem:[%s3 + $0x1c8] sm:$0xff]
  %v3476 = vld [vmem:[%s3 + $0x1d0] sm:$0xff]
  %v3477 = vld [vmem:[%s3 + $0x1d8] sm:$0xff]
  %v3478 = vld [vmem:[%s3 + $0x1e0] sm:$0xff]
  %v3479 = vld [vmem:[%s3 + $0x1e8] sm:$0xff]
  %v3480 = vld [vmem:[%s3 + $0x1f0] sm:$0xff]
  %v3481 = vld [vmem:[%s3 + $0x1f8] sm:$0xff]
  %v3482 = vld [vmem:[%s3 + $0x200] sm:$0xff]
  %v3483 = vld [vmem:[%s3 + $0x208] sm:$0xff]
  %v3484 = vld [vmem:[%s3 + $0x210] sm:$0xff]
  %v3485 = vld [vmem:[%s3 + $0x218] sm:$0xff]
  %v3486 = vld [vmem:[%s3 + $0x220] sm:$0xff]
  %v3487 = vld [vmem:[%s3 + $0x228] sm:$0xff]
  %v3488 = vld [vmem:[%s3 + $0x230] sm:$0xff]
  %v3489 = vld [vmem:[%s3 + $0x238] sm:$0xff]
  %v3490 = vld [vmem:[%s3 + $0x240] sm:$0xff]
  %v3491 = vld [vmem:[%s3 + $0x248] sm:$0xff]
  %v3492 = vld [vmem:[%s3 + $0x250] sm:$0xff]
  %v3493 = vld [vmem:[%s3 + $0x258] sm:$0xff]
  %v3494 = vld [vmem:[%s3 + $0x260] sm:$0xff]
  %v3495 = vld [vmem:[%s3 + $0x268] sm:$0xff]
  %v3496 = vld [vmem:[%s3 + $0x270] sm:$0xff]
  %v3497 = vld [vmem:[%s3 + $0x278] sm:$0xff]
  %v3498 = vld [vmem:[%s3 + $0x280] sm:$0xff]
  %v3499 = vld [vmem:[%s3 + $0x288] sm:$0xff]
  %v3500 = vld [vmem:[%s3 + $0x290] sm:$0xff]
  %v3501 = vld [vmem:[%s3 + $0x298] sm:$0xff]
  %v3502 = vld [vmem:[%s3 + $0x2a0] sm:$0xff]
  %v3503 = vld [vmem:[%s3 + $0x2a8] sm:$0xff]
  %v3504 = vld [vmem:[%s3 + $0x2b0] sm:$0xff]
  %v3505 = vld [vmem:[%s3 + $0x2b8] sm:$0xff]
  %v3506 = vld [vmem:[%s3 + $0x2c0] sm:$0xff]
  %v3507 = vld [vmem:[%s3 + $0x2c8] sm:$0xff]
  %v3508 = vld [vmem:[%s3 + $0x2d0] sm:$0xff]
  %v3509 = vld [vmem:[%s3 + $0x2d8] sm:$0xff]
  %v3510 = vld [vmem:[%s3 + $0x2e0] sm:$0xff]
  %v3511 = vld [vmem:[%s3 + $0x2e8] sm:$0xff]
  %v3512 = vld [vmem:[%s3 + $0x2f0] sm:$0xff]
  %v3513 = vld [vmem:[%s3 + $0x2f8] sm:$0xff]
  %v3514 = vld [vmem:[%s4] sm:$0x1]
  %v3516 = vlaneseq
  %v3517 = vshrl.u32 %v3516, 7
  %v3518 = vsub.s32 0, %v3517
  %v3519 = vrot.slane %v3514, %v3518
  %v3521 = vcombine.low %v3009, %v3011
  %v3522 = vcombine.high %v3009, %v3011
  %v3523 = vcombine.low %v3010, %v3067
  %v3524 = vcombine.high %v3010, %v3067
  %v3525 = vcombine.low %v3069, %v3068
  %v3526 = vcombine.high %v3069, %v3068
  %v3527 = vcombine.low %v3125, %v3127
  %v3528 = vcombine.high %v3125, %v3127
  %v3530 = vunpack.c.l.s4 1966171168
  %v3531 = vunpack.c.0.s8 %v3530
  %v3532 = vlaneseq
  %v3533 = vshrl.u32 %v3532, 7
  %v3534 = vsub.s32 %v3531, %v3533
  %v3535 = vrot.slane %v3521, %v3534
  %v3537 = vunpack.c.l.s4 1966171168
  %v3538 = vunpack.c.0.s8 %v3537
  %v3539 = vlaneseq
  %v3540 = vshrl.u32 %v3539, 7
  %v3541 = vsub.s32 %v3538, %v3540
  %v3542 = vrot.slane %v3522, %v3541
  %v3544 = vunpack.c.l.s4 1966171168
  %v3545 = vunpack.c.0.s8 %v3544
  %v3546 = vlaneseq
  %v3547 = vshrl.u32 %v3546, 7
  %v3548 = vsub.s32 %v3545, %v3547
  %v3549 = vrot.slane %v3523, %v3548
  %v3551 = vunpack.c.l.s4 1966171168
  %v3552 = vunpack.c.0.s8 %v3551
  %v3553 = vlaneseq
  %v3554 = vshrl.u32 %v3553, 7
  %v3555 = vsub.s32 %v3552, %v3554
  %v3556 = vrot.slane %v3524, %v3555
  %v3558 = vunpack.c.l.s4 1966171168
  %v3559 = vunpack.c.0.s8 %v3558
  %v3560 = vlaneseq
  %v3561 = vshrl.u32 %v3560, 7
  %v3562 = vsub.s32 %v3559, %v3561
  %v3563 = vrot.slane %v3525, %v3562
  %v3565 = vunpack.c.l.s4 1966171168
  %v3566 = vunpack.c.0.s8 %v3565
  %v3567 = vlaneseq
  %v3568 = vshrl.u32 %v3567, 7
  %v3569 = vsub.s32 %v3566, %v3568
  %v3570 = vrot.slane %v3526, %v3569
  %v3572 = vunpack.c.l.s4 1966171168
  %v3573 = vunpack.c.0.s8 %v3572
  %v3574 = vlaneseq
  %v3575 = vshrl.u32 %v3574, 7
  %v3576 = vsub.s32 %v3573, %v3575
  %v3577 = vrot.slane %v3527, %v3576
  %v3579 = vunpack.c.l.s4 1966171168
  %v3580 = vunpack.c.0.s8 %v3579
  %v3581 = vlaneseq
  %v3582 = vshrl.u32 %v3581, 7
  %v3583 = vsub.s32 %v3580, %v3582
  %v3584 = vrot.slane %v3528, %v3583
  %v3585 = vcombine.low %v3535, %v3549
  %v3586 = vcombine.high %v3535, %v3549
  %v3587 = vcombine.low %v3542, %v3556
  %v3588 = vcombine.high %v3542, %v3556
  %v3589 = vcombine.low %v3563, %v3577
  %v3590 = vcombine.high %v3563, %v3577
  %v3591 = vcombine.low %v3570, %v3584
  %v3592 = vcombine.high %v3570, %v3584
  %v3594 = vunpack.c.l.s4 1966171168
  %v3595 = vunpack.c.0.s8 %v3594
  %v3596 = vlaneseq
  %v3597 = vshrl.u32 %v3596, 7
  %v3598 = vsub.s32 %v3595, %v3597
  %v3599 = vrot.slane %v3585, %v3598
  %v3601 = vunpack.c.l.s4 1966171168
  %v3602 = vunpack.c.0.s8 %v3601
  %v3603 = vlaneseq
  %v3604 = vshrl.u32 %v3603, 7
  %v3605 = vsub.s32 %v3602, %v3604
  %v3606 = vrot.slane %v3587, %v3605
  %v3608 = vunpack.c.l.s4 1966171168
  %v3609 = vunpack.c.0.s8 %v3608
  %v3610 = vlaneseq
  %v3611 = vshrl.u32 %v3610, 7
  %v3612 = vsub.s32 %v3609, %v3611
  %v3613 = vrot.slane %v3586, %v3612
  %v3615 = vunpack.c.l.s4 1966171168
  %v3616 = vunpack.c.0.s8 %v3615
  %v3617 = vlaneseq
  %v3618 = vshrl.u32 %v3617, 7
  %v3619 = vsub.s32 %v3616, %v3618
  %v3620 = vrot.slane %v3588, %v3619
  %v3622 = vunpack.c.l.s4 1966171168
  %v3623 = vunpack.c.0.s8 %v3622
  %v3624 = vlaneseq
  %v3625 = vshrl.u32 %v3624, 7
  %v3626 = vsub.s32 %v3623, %v3625
  %v3627 = vrot.slane %v3589, %v3626
  %v3629 = vunpack.c.l.s4 1966171168
  %v3630 = vunpack.c.0.s8 %v3629
  %v3631 = vlaneseq
  %v3632 = vshrl.u32 %v3631, 7
  %v3633 = vsub.s32 %v3630, %v3632
  %v3634 = vrot.slane %v3591, %v3633
  %v3636 = vunpack.c.l.s4 1966171168
  %v3637 = vunpack.c.0.s8 %v3636
  %v3638 = vlaneseq
  %v3639 = vshrl.u32 %v3638, 7
  %v3640 = vsub.s32 %v3637, %v3639
  %v3641 = vrot.slane %v3590, %v3640
  %v3643 = vunpack.c.l.s4 1966171168
  %v3644 = vunpack.c.0.s8 %v3643
  %v3645 = vlaneseq
  %v3646 = vshrl.u32 %v3645, 7
  %v3647 = vsub.s32 %v3644, %v3646
  %v3648 = vrot.slane %v3592, %v3647
  %v3649 = vcombine.low %v3599, %v3627
  %v3650 = vcombine.high %v3599, %v3627
  %v3651 = vcombine.low %v3606, %v3634
  %v3652 = vcombine.low %v3613, %v3641
  %v3653 = vcombine.high %v3613, %v3641
  %v3654 = vcombine.low %v3620, %v3648
  %v3655 = vcombine.low %v3126, %v3183
  %v3656 = vcombine.high %v3126, %v3183
  %v3657 = vcombine.low %v3185, %v3184
  %v3658 = vcombine.high %v3185, %v3184
  %v3659 = vcombine.low %v3241, %v3243
  %v3660 = vcombine.high %v3241, %v3243
  %v3661 = vcombine.low %v3242, %v3299
  %v3662 = vcombine.high %v3242, %v3299
  %v3664 = vunpack.c.l.s4 1966171168
  %v3665 = vunpack.c.0.s8 %v3664
  %v3666 = vlaneseq
  %v3667 = vshrl.u32 %v3666, 7
  %v3668 = vsub.s32 %v3665, %v3667
  %v3669 = vrot.slane %v3655, %v3668
  %v3671 = vunpack.c.l.s4 1966171168
  %v3672 = vunpack.c.0.s8 %v3671
  %v3673 = vlaneseq
  %v3674 = vshrl.u32 %v3673, 7
  %v3675 = vsub.s32 %v3672, %v3674
  %v3676 = vrot.slane %v3656, %v3675
  %v3678 = vunpack.c.l.s4 1966171168
  %v3679 = vunpack.c.0.s8 %v3678
  %v3680 = vlaneseq
  %v3681 = vshrl.u32 %v3680, 7
  %v3682 = vsub.s32 %v3679, %v3681
  %v3683 = vrot.slane %v3657, %v3682
  %v3685 = vunpack.c.l.s4 1966171168
  %v3686 = vunpack.c.0.s8 %v3685
  %v3687 = vlaneseq
  %v3688 = vshrl.u32 %v3687, 7
  %v3689 = vsub.s32 %v3686, %v3688
  %v3690 = vrot.slane %v3658, %v3689
  %v3692 = vunpack.c.l.s4 1966171168
  %v3693 = vunpack.c.0.s8 %v3692
  %v3694 = vlaneseq
  %v3695 = vshrl.u32 %v3694, 7
  %v3696 = vsub.s32 %v3693, %v3695
  %v3697 = vrot.slane %v3659, %v3696
  %v3699 = vunpack.c.l.s4 1966171168
  %v3700 = vunpack.c.0.s8 %v3699
  %v3701 = vlaneseq
  %v3702 = vshrl.u32 %v3701, 7
  %v3703 = vsub.s32 %v3700, %v3702
  %v3704 = vrot.slane %v3660, %v3703
  %v3706 = vunpack.c.l.s4 1966171168
  %v3707 = vunpack.c.0.s8 %v3706
  %v3708 = vlaneseq
  %v3709 = vshrl.u32 %v3708, 7
  %v3710 = vsub.s32 %v3707, %v3709
  %v3711 = vrot.slane %v3661, %v3710
  %v3713 = vunpack.c.l.s4 1966171168
  %v3714 = vunpack.c.0.s8 %v3713
  %v3715 = vlaneseq
  %v3716 = vshrl.u32 %v3715, 7
  %v3717 = vsub.s32 %v3714, %v3716
  %v3718 = vrot.slane %v3662, %v3717
  %v3719 = vcombine.low %v3669, %v3683
  %v3720 = vcombine.high %v3669, %v3683
  %v3721 = vcombine.low %v3676, %v3690
  %v3722 = vcombine.high %v3676, %v3690
  %v3723 = vcombine.low %v3697, %v3711
  %v3724 = vcombine.high %v3697, %v3711
  %v3725 = vcombine.low %v3704, %v3718
  %v3726 = vcombine.high %v3704, %v3718
  %v3728 = vunpack.c.l.s4 1966171168
  %v3729 = vunpack.c.0.s8 %v3728
  %v3730 = vlaneseq
  %v3731 = vshrl.u32 %v3730, 7
  %v3732 = vsub.s32 %v3729, %v3731
  %v3733 = vrot.slane %v3719, %v3732
  %v3735 = vunpack.c.l.s4 1966171168
  %v3736 = vunpack.c.0.s8 %v3735
  %v3737 = vlaneseq
  %v3738 = vshrl.u32 %v3737, 7
  %v3739 = vsub.s32 %v3736, %v3738
  %v3740 = vrot.slane %v3721, %v3739
  %v3742 = vunpack.c.l.s4 1966171168
  %v3743 = vunpack.c.0.s8 %v3742
  %v3744 = vlaneseq
  %v3745 = vshrl.u32 %v3744, 7
  %v3746 = vsub.s32 %v3743, %v3745
  %v3747 = vrot.slane %v3720, %v3746
  %v3749 = vunpack.c.l.s4 1966171168
  %v3750 = vunpack.c.0.s8 %v3749
  %v3751 = vlaneseq
  %v3752 = vshrl.u32 %v3751, 7
  %v3753 = vsub.s32 %v3750, %v3752
  %v3754 = vrot.slane %v3722, %v3753
  %v3756 = vunpack.c.l.s4 1966171168
  %v3757 = vunpack.c.0.s8 %v3756
  %v3758 = vlaneseq
  %v3759 = vshrl.u32 %v3758, 7
  %v3760 = vsub.s32 %v3757, %v3759
  %v3761 = vrot.slane %v3723, %v3760
  %v3763 = vunpack.c.l.s4 1966171168
  %v3764 = vunpack.c.0.s8 %v3763
  %v3765 = vlaneseq
  %v3766 = vshrl.u32 %v3765, 7
  %v3767 = vsub.s32 %v3764, %v3766
  %v3768 = vrot.slane %v3725, %v3767
  %v3770 = vunpack.c.l.s4 1966171168
  %v3771 = vunpack.c.0.s8 %v3770
  %v3772 = vlaneseq
  %v3773 = vshrl.u32 %v3772, 7
  %v3774 = vsub.s32 %v3771, %v3773
  %v3775 = vrot.slane %v3724, %v3774
  %v3777 = vunpack.c.l.s4 1966171168
  %v3778 = vunpack.c.0.s8 %v3777
  %v3779 = vlaneseq
  %v3780 = vshrl.u32 %v3779, 7
  %v3781 = vsub.s32 %v3778, %v3780
  %v3782 = vrot.slane %v3726, %v3781
  %v3783 = vcombine.low %v3733, %v3761
  %v3784 = vcombine.high %v3733, %v3761
  %v3785 = vcombine.low %v3740, %v3768
  %v3786 = vcombine.low %v3747, %v3775
  %v3787 = vcombine.high %v3747, %v3775
  %v3788 = vcombine.low %v3754, %v3782
  %v3789 = vcombine.low %v3301, %v3300
  %v3790 = vcombine.high %v3301, %v3300
  %v3791 = vcombine.low %v3357, %v3359
  %v3792 = vcombine.high %v3357, %v3359
  %v3793 = vcombine.low %v3358, %v3415
  %v3794 = vcombine.high %v3358, %v3415
  %v3795 = vcombine.low %v3417, %v3416
  %v3796 = vcombine.high %v3417, %v3416
  %v3798 = vunpack.c.l.s4 1966171168
  %v3799 = vunpack.c.0.s8 %v3798
  %v3800 = vlaneseq
  %v3801 = vshrl.u32 %v3800, 7
  %v3802 = vsub.s32 %v3799, %v3801
  %v3803 = vrot.slane %v3789, %v3802
  %v3805 = vunpack.c.l.s4 1966171168
  %v3806 = vunpack.c.0.s8 %v3805
  %v3807 = vlaneseq
  %v3808 = vshrl.u32 %v3807, 7
  %v3809 = vsub.s32 %v3806, %v3808
  %v3810 = vrot.slane %v3790, %v3809
  %v3812 = vunpack.c.l.s4 1966171168
  %v3813 = vunpack.c.0.s8 %v3812
  %v3814 = vlaneseq
  %v3815 = vshrl.u32 %v3814, 7
  %v3816 = vsub.s32 %v3813, %v3815
  %v3817 = vrot.slane %v3791, %v3816
  %v3819 = vunpack.c.l.s4 1966171168
  %v3820 = vunpack.c.0.s8 %v3819
  %v3821 = vlaneseq
  %v3822 = vshrl.u32 %v3821, 7
  %v3823 = vsub.s32 %v3820, %v3822
  %v3824 = vrot.slane %v3792, %v3823
  %v3826 = vunpack.c.l.s4 1966171168
  %v3827 = vunpack.c.0.s8 %v3826
  %v3828 = vlaneseq
  %v3829 = vshrl.u32 %v3828, 7
  %v3830 = vsub.s32 %v3827, %v3829
  %v3831 = vrot.slane %v3793, %v3830
  %v3833 = vunpack.c.l.s4 1966171168
  %v3834 = vunpack.c.0.s8 %v3833
  %v3835 = vlaneseq
  %v3836 = vshrl.u32 %v3835, 7
  %v3837 = vsub.s32 %v3834, %v3836
  %v3838 = vrot.slane %v3794, %v3837
  %v3840 = vunpack.c.l.s4 1966171168
  %v3841 = vunpack.c.0.s8 %v3840
  %v3842 = vlaneseq
  %v3843 = vshrl.u32 %v3842, 7
  %v3844 = vsub.s32 %v3841, %v3843
  %v3845 = vrot.slane %v3795, %v3844
  %v3847 = vunpack.c.l.s4 1966171168
  %v3848 = vunpack.c.0.s8 %v3847
  %v3849 = vlaneseq
  %v3850 = vshrl.u32 %v3849, 7
  %v3851 = vsub.s32 %v3848, %v3850
  %v3852 = vrot.slane %v3796, %v3851
  %v3853 = vcombine.low %v3803, %v3817
  %v3854 = vcombine.high %v3803, %v3817
  %v3855 = vcombine.low %v3810, %v3824
  %v3856 = vcombine.high %v3810, %v3824
  %v3857 = vcombine.low %v3831, %v3845
  %v3858 = vcombine.high %v3831, %v3845
  %v3859 = vcombine.low %v3838, %v3852
  %v3860 = vcombine.high %v3838, %v3852
  %v3862 = vunpack.c.l.s4 1966171168
  %v3863 = vunpack.c.0.s8 %v3862
  %v3864 = vlaneseq
  %v3865 = vshrl.u32 %v3864, 7
  %v3866 = vsub.s32 %v3863, %v3865
  %v3867 = vrot.slane %v3853, %v3866
  %v3869 = vunpack.c.l.s4 1966171168
  %v3870 = vunpack.c.0.s8 %v3869
  %v3871 = vlaneseq
  %v3872 = vshrl.u32 %v3871, 7
  %v3873 = vsub.s32 %v3870, %v3872
  %v3874 = vrot.slane %v3855, %v3873
  %v3876 = vunpack.c.l.s4 1966171168
  %v3877 = vunpack.c.0.s8 %v3876
  %v3878 = vlaneseq
  %v3879 = vshrl.u32 %v3878, 7
  %v3880 = vsub.s32 %v3877, %v3879
  %v3881 = vrot.slane %v3854, %v3880
  %v3883 = vunpack.c.l.s4 1966171168
  %v3884 = vunpack.c.0.s8 %v3883
  %v3885 = vlaneseq
  %v3886 = vshrl.u32 %v3885, 7
  %v3887 = vsub.s32 %v3884, %v3886
  %v3888 = vrot.slane %v3856, %v3887
  %v3890 = vunpack.c.l.s4 1966171168
  %v3891 = vunpack.c.0.s8 %v3890
  %v3892 = vlaneseq
  %v3893 = vshrl.u32 %v3892, 7
  %v3894 = vsub.s32 %v3891, %v3893
  %v3895 = vrot.slane %v3857, %v3894
  %v3897 = vunpack.c.l.s4 1966171168
  %v3898 = vunpack.c.0.s8 %v3897
  %v3899 = vlaneseq
  %v3900 = vshrl.u32 %v3899, 7
  %v3901 = vsub.s32 %v3898, %v3900
  %v3902 = vrot.slane %v3859, %v3901
  %v3904 = vunpack.c.l.s4 1966171168
  %v3905 = vunpack.c.0.s8 %v3904
  %v3906 = vlaneseq
  %v3907 = vshrl.u32 %v3906, 7
  %v3908 = vsub.s32 %v3905, %v3907
  %v3909 = vrot.slane %v3858, %v3908
  %v3911 = vunpack.c.l.s4 1966171168
  %v3912 = vunpack.c.0.s8 %v3911
  %v3913 = vlaneseq
  %v3914 = vshrl.u32 %v3913, 7
  %v3915 = vsub.s32 %v3912, %v3914
  %v3916 = vrot.slane %v3860, %v3915
  %v3917 = vcombine.low %v3867, %v3895
  %v3918 = vcombine.high %v3867, %v3895
  %v3919 = vcombine.low %v3874, %v3902
  %v3920 = vcombine.low %v3881, %v3909
  %v3921 = vcombine.high %v3881, %v3909
  %v3922 = vcombine.low %v3888, %v3916
  %3941 = vmatprep.subr.mxu0 0.0
  %3942 = vmatpush1.msra.mxu0 %v3418
  %3943 = vmatprep.subr.mxu0 0.0
  %3944 = vmatpush1.msra.mxu0 %v3419
  %3945 = vmatprep.subr.mxu0 0.0
  %3946 = vmatpush1.msra.mxu0 %v3420
  %3947 = vmatprep.subr.mxu0 0.0
  %3948 = vmatpush1.msra.mxu0 %v3421
  %3949 = vmatprep.subr.mxu0 0.0
  %3950 = vmatpush1.msra.mxu0 %v3422
  %3951 = vmatprep.subr.mxu0 0.0
  %3952 = vmatpush1.msra.mxu0 %v3423
  %3953 = vmatprep.subr.mxu0 0.0
  %3954 = vmatpush1.msra.mxu0 %v3424
  %3955 = vmatprep.subr.mxu0 0.0
  %3956 = vmatpush1.msra.mxu0 %v3425
  %3957 = vmatprep.subr.mxu0 0.0
  %3958 = vmatpush1.msra.mxu0 %v3426
  %3959 = vmatprep.subr.mxu0 0.0
  %3960 = vmatpush1.msra.mxu0 %v3427
  %3961 = vmatprep.subr.mxu0 0.0
  %3962 = vmatpush1.msra.mxu0 %v3428
  %3963 = vmatprep.subr.mxu0 0.0
  %3964 = vmatpush1.msra.mxu0 %v3429
  %3965 = vmatprep.subr.mxu0 0.0
  %3966 = vmatpush1.msra.mxu0 %v3430
  %3967 = vmatprep.subr.mxu0 0.0
  %3968 = vmatpush1.msra.mxu0 %v3431
  %3969 = vmatprep.subr.mxu0 0.0
  %3970 = vmatpush1.msra.mxu0 %v3432
  %3971 = vmatprep.subr.mxu0 0.0
  %3972 = vmatpush1.msra.mxu0 %v3433
  %3973 = vmatprep.subr.mxu0 0.0
  %3974 = vmatpush1.msra.mxu0 %v3434
  %3975 = vmatprep.subr.mxu0 0.0
  %3976 = vmatpush1.msra.mxu0 %v3435
  %3977 = vmatprep.subr.mxu0 0.0
  %3978 = vmatpush1.msra.mxu0 %v3436
  %3979 = vmatprep.subr.mxu0 0.0
  %3980 = vmatpush1.msra.mxu0 %v3437
  %3981 = vmatprep.subr.mxu0 0.0
  %3982 = vmatpush1.msra.mxu0 %v3438
  %3983 = vmatprep.subr.mxu0 0.0
  %3984 = vmatpush1.msra.mxu0 %v3439
  %3985 = vmatprep.subr.mxu0 0.0
  %3986 = vmatpush1.msra.mxu0 %v3440
  %3987 = vmatprep.subr.mxu0 0.0
  %3988 = vmatpush1.msra.mxu0 %v3441
  %3989 = vmatprep.subr.mxu0 0.0
  %3990 = vmatpush1.msra.mxu0 %v3442
  %3991 = vmatprep.subr.mxu0 0.0
  %3992 = vmatpush1.msra.mxu0 %v3443
  %3993 = vmatprep.subr.mxu0 0.0
  %3994 = vmatpush1.msra.mxu0 %v3444
  %3995 = vmatprep.subr.mxu0 0.0
  %3996 = vmatpush1.msra.mxu0 %v3445
  %3997 = vmatprep.subr.mxu0 0.0
  %3998 = vmatpush1.msra.mxu0 %v3446
  %3999 = vmatprep.subr.mxu0 0.0
  %4000 = vmatpush1.msra.mxu0 %v3447
  %4001 = vmatprep.subr.mxu0 0.0
  %4002 = vmatpush1.msra.mxu0 %v3448
  %4003 = vmatprep.subr.mxu0 0.0
  %4004 = vmatpush1.msra.mxu0 %v3449
  %4005 = vmatprep.mubr.f32.mxu0 %v3652
  %4006 = vmatmul.mubr.f32.gmra.mrb[0].mxu0 %v3649
  %v4007 = vpop.f32.mrb[0].mxu0
  %v4008 = vadd.f32 %v3519, %v4007
  %v4009 = vpop.f32.mrb[0].mxu0
  %4010 = vmatprep.mubr.f32.mxu0 %v3786
  %4011 = vmatmul.mubr.f32.gmra.mrb[0].mxu0 %v3783
  %v4012 = vpop.f32.mrb[0].mxu0
  %v4013 = vadd.f32 %v3519, %v4012
  %v4014 = vpop.f32.mrb[0].mxu0
  %4015 = vmatprep.mubr.f32.mxu0 %v3920
  %4016 = vmatmul.mubr.f32.gmra.mrb[0].mxu0 %v3917
  %v4017 = vpop.f32.mrb[0].mxu0
  %v4018 = vadd.f32 %v3519, %v4017
  %v4019 = vpop.f32.mrb[0].mxu0
  %4020 = vdwg.mxu0
  %4021 = vmatprep.subr.mxu0 0.0
  %4022 = vmatpush1.msra.mxu0 %v3450
  %4023 = vmatprep.subr.mxu0 0.0
  %4024 = vmatpush1.msra.mxu0 %v3451
  %4025 = vmatprep.subr.mxu0 0.0
  %4026 = vmatpush1.msra.mxu0 %v3452
  %4027 = vmatprep.subr.mxu0 0.0
  %4028 = vmatpush1.msra.mxu0 %v3453
  %4029 = vmatprep.subr.mxu0 0.0
  %4030 = vmatpush1.msra.mxu0 %v3454
  %4031 = vmatprep.subr.mxu0 0.0
  %4032 = vmatpush1.msra.mxu0 %v3455
  %4033 = vmatprep.subr.mxu0 0.0
  %4034 = vmatpush1.msra.mxu0 %v3456
  %4035 = vmatprep.subr.mxu0 0.0
  %4036 = vmatpush1.msra.mxu0 %v3457
  %4037 = vmatprep.subr.mxu0 0.0
  %4038 = vmatpush1.msra.mxu0 %v3458
  %4039 = vmatprep.subr.mxu0 0.0
  %4040 = vmatpush1.msra.mxu0 %v3459
  %4041 = vmatprep.subr.mxu0 0.0
  %4042 = vmatpush1.msra.mxu0 %v3460
  %4043 = vmatprep.subr.mxu0 0.0
  %4044 = vmatpush1.msra.mxu0 %v3461
  %4045 = vmatprep.subr.mxu0 0.0
  %4046 = vmatpush1.msra.mxu0 %v3462
  %4047 = vmatprep.subr.mxu0 0.0
  %4048 = vmatpush1.msra.mxu0 %v3463
  %4049 = vmatprep.subr.mxu0 0.0
  %4050 = vmatpush1.msra.mxu0 %v3464
  %4051 = vmatprep.subr.mxu0 0.0
  %4052 = vmatpush1.msra.mxu0 %v3465
  %4053 = vmatprep.subr.mxu0 0.0
  %4054 = vmatpush1.msra.mxu0 %v3466
  %4055 = vmatprep.subr.mxu0 0.0
  %4056 = vmatpush1.msra.mxu0 %v3467
  %4057 = vmatprep.subr.mxu0 0.0
  %4058 = vmatpush1.msra.mxu0 %v3468
  %4059 = vmatprep.subr.mxu0 0.0
  %4060 = vmatpush1.msra.mxu0 %v3469
  %4061 = vmatprep.subr.mxu0 0.0
  %4062 = vmatpush1.msra.mxu0 %v3470
  %4063 = vmatprep.subr.mxu0 0.0
  %4064 = vmatpush1.msra.mxu0 %v3471
  %4065 = vmatprep.subr.mxu0 0.0
  %4066 = vmatpush1.msra.mxu0 %v3472
  %4067 = vmatprep.subr.mxu0 0.0
  %4068 = vmatpush1.msra.mxu0 %v3473
  %4069 = vmatprep.subr.mxu0 0.0
  %4070 = vmatpush1.msra.mxu0 %v3474
  %4071 = vmatprep.subr.mxu0 0.0
  %4072 = vmatpush1.msra.mxu0 %v3475
  %4073 = vmatprep.subr.mxu0 0.0
  %4074 = vmatpush1.msra.mxu0 %v3476
  %4075 = vmatprep.subr.mxu0 0.0
  %4076 = vmatpush1.msra.mxu0 %v3477
  %4077 = vmatprep.subr.mxu0 0.0
  %4078 = vmatpush1.msra.mxu0 %v3478
  %4079 = vmatprep.subr.mxu0 0.0
  %4080 = vmatpush1.msra.mxu0 %v3479
  %4081 = vmatprep.subr.mxu0 0.0
  %4082 = vmatpush1.msra.mxu0 %v3480
  %4083 = vmatprep.subr.mxu0 0.0
  %4084 = vmatpush1.msra.mxu0 %v3481
  %4085 = vmatprep.mubr.f32.mxu0 %v3653
  %4086 = vmatmul.mubr.f32.gmra.mrb[0].mxu0 %v3650
  %v4087 = vpop.f32.mrb[0].mxu0
  %v4088 = vadd.f32 %v4008, %v4087
  %v4089 = vpop.f32.mrb[0].mxu0
  %4090 = vmatprep.mubr.f32.mxu0 %v3787
  %4091 = vmatmul.mubr.f32.gmra.mrb[0].mxu0 %v3784
  %v4092 = vpop.f32.mrb[0].mxu0
  %v4093 = vadd.f32 %v4013, %v4092
  %v4094 = vpop.f32.mrb[0].mxu0
  %4095 = vmatprep.mubr.f32.mxu0 %v3921
  %4096 = vmatmul.mubr.f32.gmra.mrb[0].mxu0 %v3918
  %v4097 = vpop.f32.mrb[0].mxu0
  %v4098 = vadd.f32 %v4018, %v4097
  %v4099 = vpop.f32.mrb[0].mxu0
  %4100 = vdwg.mxu0
  %4101 = vmatprep.subr.mxu0 0.0
  %4102 = vmatpush1.msra.mxu0 %v3482
  %4103 = vmatprep.subr.mxu0 0.0
  %4104 = vmatpush1.msra.mxu0 %v3483
  %4105 = vmatprep.subr.mxu0 0.0
  %4106 = vmatpush1.msra.mxu0 %v3484
  %4107 = vmatprep.subr.mxu0 0.0
  %4108 = vmatpush1.msra.mxu0 %v3485
  %4109 = vmatprep.subr.mxu0 0.0
  %4110 = vmatpush1.msra.mxu0 %v3486
  %4111 = vmatprep.subr.mxu0 0.0
  %4112 = vmatpush1.msra.mxu0 %v3487
  %4113 = vmatprep.subr.mxu0 0.0
  %4114 = vmatpush1.msra.mxu0 %v3488
  %4115 = vmatprep.subr.mxu0 0.0
  %4116 = vmatpush1.msra.mxu0 %v3489
  %4117 = vmatprep.subr.mxu0 0.0
  %4118 = vmatpush1.msra.mxu0 %v3490
  %4119 = vmatprep.subr.mxu0 0.0
  %4120 = vmatpush1.msra.mxu0 %v3491
  %4121 = vmatprep.subr.mxu0 0.0
  %4122 = vmatpush1.msra.mxu0 %v3492
  %4123 = vmatprep.subr.mxu0 0.0
  %4124 = vmatpush1.msra.mxu0 %v3493
  %4125 = vmatprep.subr.mxu0 0.0
  %4126 = vmatpush1.msra.mxu0 %v3494
  %4127 = vmatprep.subr.mxu0 0.0
  %4128 = vmatpush1.msra.mxu0 %v3495
  %4129 = vmatprep.subr.mxu0 0.0
  %4130 = vmatpush1.msra.mxu0 %v3496
  %4131 = vmatprep.subr.mxu0 0.0
  %4132 = vmatpush1.msra.mxu0 %v3497
  %4133 = vmatprep.subr.mxu0 0.0
  %4134 = vmatpush1.msra.mxu0 %v3498
  %4135 = vmatprep.subr.mxu0 0.0
  %4136 = vmatpush1.msra.mxu0 %v3499
  %4137 = vmatprep.subr.mxu0 0.0
  %4138 = vmatpush1.msra.mxu0 %v3500
  %4139 = vmatprep.subr.mxu0 0.0
  %4140 = vmatpush1.msra.mxu0 %v3501
  %4141 = vmatprep.subr.mxu0 0.0
  %4142 = vmatpush1.msra.mxu0 %v3502
  %4143 = vmatprep.subr.mxu0 0.0
  %4144 = vmatpush1.msra.mxu0 %v3503
  %4145 = vmatprep.subr.mxu0 0.0
  %4146 = vmatpush1.msra.mxu0 %v3504
  %4147 = vmatprep.subr.mxu0 0.0
  %4148 = vmatpush1.msra.mxu0 %v3505
  %4149 = vmatprep.subr.mxu0 0.0
  %4150 = vmatpush1.msra.mxu0 %v3506
  %4151 = vmatprep.subr.mxu0 0.0
  %4152 = vmatpush1.msra.mxu0 %v3507
  %4153 = vmatprep.subr.mxu0 0.0
  %4154 = vmatpush1.msra.mxu0 %v3508
  %4155 = vmatprep.subr.mxu0 0.0
  %4156 = vmatpush1.msra.mxu0 %v3509
  %4157 = vmatprep.subr.mxu0 0.0
  %4158 = vmatpush1.msra.mxu0 %v3510
  %4159 = vmatprep.subr.mxu0 0.0
  %4160 = vmatpush1.msra.mxu0 %v3511
  %4161 = vmatprep.subr.mxu0 0.0
  %4162 = vmatpush1.msra.mxu0 %v3512
  %4163 = vmatprep.subr.mxu0 0.0
  %4164 = vmatpush1.msra.mxu0 %v3513
  %4165 = vmatprep.mubr.f32.mxu0 %v3654
  %4166 = vmatmul.mubr.f32.gmra.mrb[0].mxu0 %v3651
  %v4167 = vpop.f32.mrb[0].mxu0
  %v4168 = vadd.f32 %v4088, %v4167
  %v4169 = vpop.f32.mrb[0].mxu0
  %4170 = vmatprep.mubr.f32.mxu0 %v3788
  %4171 = vmatmul.mubr.f32.gmra.mrb[0].mxu0 %v3785
  %v4172 = vpop.f32.mrb[0].mxu0
  %v4173 = vadd.f32 %v4093, %v4172
  %v4174 = vpop.f32.mrb[0].mxu0
  %4175 = vmatprep.mubr.f32.mxu0 %v3922
  %4176 = vmatmul.mubr.f32.gmra.mrb[0].mxu0 %v3919
  %v4177 = vpop.f32.mrb[0].mxu0
  %v4178 = vadd.f32 %v4098, %v4177
  %v4179 = vpop.f32.mrb[0].mxu0
  %4180 = vdwg.mxu0
  %v4181 = vmax.f32 %v4168, 0.0
  %v4182 = vmax.f32 %v4173, 0.0
  %v4183 = vmax.f32 %v4178, 0.0
  %v4187 = vcombine.high %v4181, %v4181
  %v4189 = vunpack.c.l.s4 1966171168
  %v4190 = vunpack.c.0.s8 %v4189
  %v4191 = vlaneseq
  %v4192 = vshrl.u32 %v4191, 7
  %v4193 = vsub.s32 %v4190, %v4192
  %v4194 = vrot.slane %v4181, %v4193
  %v4196 = vunpack.c.l.s4 1966171168
  %v4197 = vunpack.c.0.s8 %v4196
  %v4198 = vlaneseq
  %v4199 = vshrl.u32 %v4198, 7
  %v4200 = vsub.s32 %v4197, %v4199
  %v4201 = vrot.slane %v4187, %v4200
  %v4202 = vcombine.high %v4194, %v4194
  %v4203 = vcombine.high %v4201, %v4201
  %v4205 = vunpack.c.l.s4 1966171168
  %v4206 = vunpack.c.0.s8 %v4205
  %v4207 = vlaneseq
  %v4208 = vshrl.u32 %v4207, 7
  %v4209 = vsub.s32 %v4206, %v4208
  %v4210 = vrot.slane %v4194, %v4209
  %v4212 = vunpack.c.l.s4 1966171168
  %v4213 = vunpack.c.0.s8 %v4212
  %v4214 = vlaneseq
  %v4215 = vshrl.u32 %v4214, 7
  %v4216 = vsub.s32 %v4213, %v4215
  %v4217 = vrot.slane %v4201, %v4216
  %v4219 = vunpack.c.l.s4 1966171168
  %v4220 = vunpack.c.0.s8 %v4219
  %v4221 = vlaneseq
  %v4222 = vshrl.u32 %v4221, 7
  %v4223 = vsub.s32 %v4220, %v4222
  %v4224 = vrot.slane %v4202, %v4223
  %v4226 = vunpack.c.l.s4 1966171168
  %v4227 = vunpack.c.0.s8 %v4226
  %v4228 = vlaneseq
  %v4229 = vshrl.u32 %v4228, 7
  %v4230 = vsub.s32 %v4227, %v4229
  %v4231 = vrot.slane %v4203, %v4230
  %v4232 = vcombine.high %v4210, %v4210
  %v4233 = vcombine.high %v4217, %v4217
  %v4234 = vcombine.high %v4224, %v4224
  %v4235 = vcombine.high %v4231, %v4231
  %v4236 = vcombine.high %v4182, %v4182
  %v4238 = vunpack.c.l.s4 1966171168
  %v4239 = vunpack.c.0.s8 %v4238
  %v4240 = vlaneseq
  %v4241 = vshrl.u32 %v4240, 7
  %v4242 = vsub.s32 %v4239, %v4241
  %v4243 = vrot.slane %v4182, %v4242
  %v4245 = vunpack.c.l.s4 1966171168
  %v4246 = vunpack.c.0.s8 %v4245
  %v4247 = vlaneseq
  %v4248 = vshrl.u32 %v4247, 7
  %v4249 = vsub.s32 %v4246, %v4248
  %v4250 = vrot.slane %v4236, %v4249
  %v4251 = vcombine.high %v4243, %v4243
  %v4252 = vcombine.high %v4250, %v4250
  %v4254 = vunpack.c.l.s4 1966171168
  %v4255 = vunpack.c.0.s8 %v4254
  %v4256 = vlaneseq
  %v4257 = vshrl.u32 %v4256, 7
  %v4258 = vsub.s32 %v4255, %v4257
  %v4259 = vrot.slane %v4243, %v4258
  %v4261 = vunpack.c.l.s4 1966171168
  %v4262 = vunpack.c.0.s8 %v4261
  %v4263 = vlaneseq
  %v4264 = vshrl.u32 %v4263, 7
  %v4265 = vsub.s32 %v4262, %v4264
  %v4266 = vrot.slane %v4250, %v4265
  %v4268 = vunpack.c.l.s4 1966171168
  %v4269 = vunpack.c.0.s8 %v4268
  %v4270 = vlaneseq
  %v4271 = vshrl.u32 %v4270, 7
  %v4272 = vsub.s32 %v4269, %v4271
  %v4273 = vrot.slane %v4251, %v4272
  %v4275 = vunpack.c.l.s4 1966171168
  %v4276 = vunpack.c.0.s8 %v4275
  %v4277 = vlaneseq
  %v4278 = vshrl.u32 %v4277, 7
  %v4279 = vsub.s32 %v4276, %v4278
  %v4280 = vrot.slane %v4252, %v4279
  %v4281 = vcombine.high %v4259, %v4259
  %v4282 = vcombine.high %v4266, %v4266
  %v4283 = vcombine.high %v4273, %v4273
  %v4284 = vcombine.high %v4280, %v4280
  %v4285 = vcombine.high %v4183, %v4183
  %v4287 = vunpack.c.l.s4 1966171168
  %v4288 = vunpack.c.0.s8 %v4287
  %v4289 = vlaneseq
  %v4290 = vshrl.u32 %v4289, 7
  %v4291 = vsub.s32 %v4288, %v4290
  %v4292 = vrot.slane %v4183, %v4291
  %v4294 = vunpack.c.l.s4 1966171168
  %v4295 = vunpack.c.0.s8 %v4294
  %v4296 = vlaneseq
  %v4297 = vshrl.u32 %v4296, 7
  %v4298 = vsub.s32 %v4295, %v4297
  %v4299 = vrot.slane %v4285, %v4298
  %v4300 = vcombine.high %v4292, %v4292
  %v4301 = vcombine.high %v4299, %v4299
  %v4303 = vunpack.c.l.s4 1966171168
  %v4304 = vunpack.c.0.s8 %v4303
  %v4305 = vlaneseq
  %v4306 = vshrl.u32 %v4305, 7
  %v4307 = vsub.s32 %v4304, %v4306
  %v4308 = vrot.slane %v4292, %v4307
  %v4310 = vunpack.c.l.s4 1966171168
  %v4311 = vunpack.c.0.s8 %v4310
  %v4312 = vlaneseq
  %v4313 = vshrl.u32 %v4312, 7
  %v4314 = vsub.s32 %v4311, %v4313
  %v4315 = vrot.slane %v4299, %v4314
  %v4317 = vunpack.c.l.s4 1966171168
  %v4318 = vunpack.c.0.s8 %v4317
  %v4319 = vlaneseq
  %v4320 = vshrl.u32 %v4319, 7
  %v4321 = vsub.s32 %v4318, %v4320
  %v4322 = vrot.slane %v4300, %v4321
  %v4324 = vunpack.c.l.s4 1966171168
  %v4325 = vunpack.c.0.s8 %v4324
  %v4326 = vlaneseq
  %v4327 = vshrl.u32 %v4326, 7
  %v4328 = vsub.s32 %v4325, %v4327
  %v4329 = vrot.slane %v4301, %v4328
  %v4330 = vcombine.high %v4308, %v4308
  %v4331 = vcombine.high %v4315, %v4315
  %v4332 = vcombine.high %v4322, %v4322
  %v4333 = vcombine.high %v4329, %v4329
  %v4334 = vcombine.low %v4210, %v4234
  %v4335 = vcombine.low %v4233, %v4273
  %v4336 = vcombine.low %v4266, %v4284
  %v4337 = vcombine.low %v4330, %v4329
  %v4339 = vunpack.c.l.s4 1966171168
  %v4340 = vunpack.c.0.s8 %v4339
  %v4341 = vlaneseq
  %v4342 = vshrl.u32 %v4341, 7
  %v4343 = vsub.s32 %v4340, %v4342
  %v4344 = vrot.slane %v4334, %v4343
  %v4346 = vunpack.c.l.s4 1966171168
  %v4347 = vunpack.c.0.s8 %v4346
  %v4348 = vlaneseq
  %v4349 = vshrl.u32 %v4348, 7
  %v4350 = vsub.s32 %v4347, %v4349
  %v4351 = vrot.slane %v4335, %v4350
  %v4353 = vunpack.c.l.s4 1966171168
  %v4354 = vunpack.c.0.s8 %v4353
  %v4355 = vlaneseq
  %v4356 = vshrl.u32 %v4355, 7
  %v4357 = vsub.s32 %v4354, %v4356
  %v4358 = vrot.slane %v4336, %v4357
  %v4360 = vunpack.c.l.s4 1966171168
  %v4361 = vunpack.c.0.s8 %v4360
  %v4362 = vlaneseq
  %v4363 = vshrl.u32 %v4362, 7
  %v4364 = vsub.s32 %v4361, %v4363
  %v4365 = vrot.slane %v4337, %v4364
  %v4366 = vcombine.low %v4344, %v4351
  %v4367 = vcombine.low %v4358, %v4365
  %v4369 = vunpack.c.l.s4 1966171168
  %v4370 = vunpack.c.0.s8 %v4369
  %v4371 = vlaneseq
  %v4372 = vshrl.u32 %v4371, 7
  %v4373 = vsub.s32 %v4370, %v4372
  %v4374 = vrot.slane %v4366, %v4373
  %v4376 = vunpack.c.l.s4 1966171168
  %v4377 = vunpack.c.0.s8 %v4376
  %v4378 = vlaneseq
  %v4379 = vshrl.u32 %v4378, 7
  %v4380 = vsub.s32 %v4377, %v4379
  %v4381 = vrot.slane %v4367, %v4380
  %v4382 = vcombine.low %v4374, %v4381
  %v4384 = vcombine.low %v4224, %v4217
  %v4385 = vcombine.low %v4235, %v4281
  %v4386 = vcombine.low %v4280, %v4308
  %v4387 = vcombine.low %v4332, %v4331
  %v4389 = vunpack.c.l.s4 1966171168
  %v4390 = vunpack.c.0.s8 %v4389
  %v4391 = vlaneseq
  %v4392 = vshrl.u32 %v4391, 7
  %v4393 = vsub.s32 %v4390, %v4392
  %v4394 = vrot.slane %v4384, %v4393
  %v4396 = vunpack.c.l.s4 1966171168
  %v4397 = vunpack.c.0.s8 %v4396
  %v4398 = vlaneseq
  %v4399 = vshrl.u32 %v4398, 7
  %v4400 = vsub.s32 %v4397, %v4399
  %v4401 = vrot.slane %v4385, %v4400
  %v4403 = vunpack.c.l.s4 1966171168
  %v4404 = vunpack.c.0.s8 %v4403
  %v4405 = vlaneseq
  %v4406 = vshrl.u32 %v4405, 7
  %v4407 = vsub.s32 %v4404, %v4406
  %v4408 = vrot.slane %v4386, %v4407
  %v4410 = vunpack.c.l.s4 1966171168
  %v4411 = vunpack.c.0.s8 %v4410
  %v4412 = vlaneseq
  %v4413 = vshrl.u32 %v4412, 7
  %v4414 = vsub.s32 %v4411, %v4413
  %v4415 = vrot.slane %v4387, %v4414
  %v4416 = vcombine.low %v4394, %v4401
  %v4417 = vcombine.low %v4408, %v4415
  %v4419 = vunpack.c.l.s4 1966171168
  %v4420 = vunpack.c.0.s8 %v4419
  %v4421 = vlaneseq
  %v4422 = vshrl.u32 %v4421, 7
  %v4423 = vsub.s32 %v4420, %v4422
  %v4424 = vrot.slane %v4416, %v4423
  %v4426 = vunpack.c.l.s4 1966171168
  %v4427 = vunpack.c.0.s8 %v4426
  %v4428 = vlaneseq
  %v4429 = vshrl.u32 %v4428, 7
  %v4430 = vsub.s32 %v4427, %v4429
  %v4431 = vrot.slane %v4417, %v4430
  %v4432 = vcombine.low %v4424, %v4431
  %v4434 = vcombine.low %v4232, %v4231
  %v4435 = vcombine.low %v4259, %v4283
  %v4436 = vcombine.low %v4282, %v4322
  %v4437 = vcombine.low %v4315, %v4333
  %v4439 = vunpack.c.l.s4 1966171168
  %v4440 = vunpack.c.0.s8 %v4439
  %v4441 = vlaneseq
  %v4442 = vshrl.u32 %v4441, 7
  %v4443 = vsub.s32 %v4440, %v4442
  %v4444 = vrot.slane %v4434, %v4443
  %v4446 = vunpack.c.l.s4 1966171168
  %v4447 = vunpack.c.0.s8 %v4446
  %v4448 = vlaneseq
  %v4449 = vshrl.u32 %v4448, 7
  %v4450 = vsub.s32 %v4447, %v4449
  %v4451 = vrot.slane %v4435, %v4450
  %v4453 = vunpack.c.l.s4 1966171168
  %v4454 = vunpack.c.0.s8 %v4453
  %v4455 = vlaneseq
  %v4456 = vshrl.u32 %v4455, 7
  %v4457 = vsub.s32 %v4454, %v4456
  %v4458 = vrot.slane %v4436, %v4457
  %v4460 = vunpack.c.l.s4 1966171168
  %v4461 = vunpack.c.0.s8 %v4460
  %v4462 = vlaneseq
  %v4463 = vshrl.u32 %v4462, 7
  %v4464 = vsub.s32 %v4461, %v4463
  %v4465 = vrot.slane %v4437, %v4464
  %v4466 = vcombine.low %v4444, %v4451
  %v4467 = vcombine.low %v4458, %v4465
  %v4469 = vunpack.c.l.s4 1966171168
  %v4470 = vunpack.c.0.s8 %v4469
  %v4471 = vlaneseq
  %v4472 = vshrl.u32 %v4471, 7
  %v4473 = vsub.s32 %v4470, %v4472
  %v4474 = vrot.slane %v4466, %v4473
  %v4476 = vunpack.c.l.s4 1966171168
  %v4477 = vunpack.c.0.s8 %v4476
  %v4478 = vlaneseq
  %v4479 = vshrl.u32 %v4478, 7
  %v4480 = vsub.s32 %v4477, %v4479
  %v4481 = vrot.slane %v4467, %v4480
  %v4482 = vcombine.low %v4474, %v4481
  %v4484 = vld [vmem:[%s5] sm:$0xff]
  %v4485 = vld [vmem:[%s5 + $0x8] sm:$0xff]
  %v4486 = vld [vmem:[%s5 + $0x10] sm:$0xff]
  %v4487 = vld [vmem:[%s5 + $0x18] sm:$0xff]
  %v4488 = vld [vmem:[%s5 + $0x20] sm:$0xff]
  %v4489 = vld [vmem:[%s5 + $0x28] sm:$0xff]
  %v4490 = vld [vmem:[%s5 + $0x30] sm:$0xff]
  %v4491 = vld [vmem:[%s5 + $0x38] sm:$0xff]
  %v4492 = vld [vmem:[%s5 + $0x40] sm:$0xff]
  %v4493 = vld [vmem:[%s5 + $0x48] sm:$0xff]
  %v4494 = vld [vmem:[%s5 + $0x50] sm:$0xff]
  %v4495 = vld [vmem:[%s5 + $0x58] sm:$0xff]
  %v4496 = vld [vmem:[%s5 + $0x60] sm:$0xff]
  %v4497 = vld [vmem:[%s5 + $0x68] sm:$0xff]
  %v4498 = vld [vmem:[%s5 + $0x70] sm:$0xff]
  %v4499 = vld [vmem:[%s5 + $0x78] sm:$0xff]
  %v4500 = vld [vmem:[%s5 + $0x80] sm:$0xff]
  %v4501 = vld [vmem:[%s5 + $0x88] sm:$0xff]
  %v4502 = vld [vmem:[%s5 + $0x90] sm:$0xff]
  %v4503 = vld [vmem:[%s5 + $0x98] sm:$0xff]
  %v4504 = vld [vmem:[%s5 + $0xa0] sm:$0xff]
  %v4505 = vld [vmem:[%s5 + $0xa8] sm:$0xff]
  %v4506 = vld [vmem:[%s5 + $0xb0] sm:$0xff]
  %v4507 = vld [vmem:[%s5 + $0xb8] sm:$0xff]
  %v4508 = vld [vmem:[%s5 + $0xc0] sm:$0xff]
  %v4509 = vld [vmem:[%s5 + $0xc8] sm:$0xff]
  %v4510 = vld [vmem:[%s5 + $0xd0] sm:$0xff]
  %v4511 = vld [vmem:[%s5 + $0xd8] sm:$0xff]
  %v4512 = vld [vmem:[%s5 + $0xe0] sm:$0xff]
  %v4513 = vld [vmem:[%s5 + $0xe8] sm:$0xff]
  %v4514 = vld [vmem:[%s5 + $0xf0] sm:$0xff]
  %v4515 = vld [vmem:[%s5 + $0xf8] sm:$0xff]
  %v4516 = vld [vmem:[%s5 + $0x100] sm:$0xff]
  %v4517 = vld [vmem:[%s5 + $0x108] sm:$0xff]
  %v4518 = vld [vmem:[%s5 + $0x110] sm:$0xff]
  %v4519 = vld [vmem:[%s5 + $0x118] sm:$0xff]
  %v4520 = vld [vmem:[%s5 + $0x120] sm:$0xff]
  %v4521 = vld [vmem:[%s5 + $0x128] sm:$0xff]
  %v4522 = vld [vmem:[%s5 + $0x130] sm:$0xff]
  %v4523 = vld [vmem:[%s5 + $0x138] sm:$0xff]
  %v4524 = vld [vmem:[%s5 + $0x140] sm:$0xff]
  %v4525 = vld [vmem:[%s5 + $0x148] sm:$0xff]
  %v4526 = vld [vmem:[%s5 + $0x150] sm:$0xff]
  %v4527 = vld [vmem:[%s5 + $0x158] sm:$0xff]
  %v4528 = vld [vmem:[%s5 + $0x160] sm:$0xff]
  %v4529 = vld [vmem:[%s5 + $0x168] sm:$0xff]
  %v4530 = vld [vmem:[%s5 + $0x170] sm:$0xff]
  %v4531 = vld [vmem:[%s5 + $0x178] sm:$0xff]
  %v4532 = vld [vmem:[%s6] sm:$0x1]
  %v4534 = vlaneseq
  %v4535 = vshrl.u32 %v4534, 7
  %v4536 = vsub.s32 0, %v4535
  %v4537 = vrot.slane %v4532, %v4536
  %4539 = vmatprep.subr.mxu0 0.0
  %4540 = vmatpush1.msra.mxu0 %v4484
  %4541 = vmatprep.subr.mxu0 0.0
  %4542 = vmatpush1.msra.mxu0 %v4485
  %4543 = vmatprep.subr.mxu0 0.0
  %4544 = vmatpush1.msra.mxu0 %v4486
  %4545 = vmatprep.subr.mxu0 0.0
  %4546 = vmatpush1.msra.mxu0 %v4487
  %4547 = vmatprep.subr.mxu0 0.0
  %4548 = vmatpush1.msra.mxu0 %v4488
  %4549 = vmatprep.subr.mxu0 0.0
  %4550 = vmatpush1.msra.mxu0 %v4489
  %4551 = vmatprep.subr.mxu0 0.0
  %4552 = vmatpush1.msra.mxu0 %v4490
  %4553 = vmatprep.subr.mxu0 0.0
  %4554 = vmatpush1.msra.mxu0 %v4491
  %4555 = vmatprep.subr.mxu0 0.0
  %4556 = vmatpush1.msra.mxu0 %v4492
  %4557 = vmatprep.subr.mxu0 0.0
  %4558 = vmatpush1.msra.mxu0 %v4493
  %4559 = vmatprep.subr.mxu0 0.0
  %4560 = vmatpush1.msra.mxu0 %v4494
  %4561 = vmatprep.subr.mxu0 0.0
  %4562 = vmatpush1.msra.mxu0 %v4495
  %4563 = vmatprep.subr.mxu0 0.0
  %4564 = vmatpush1.msra.mxu0 %v4496
  %4565 = vmatprep.subr.mxu0 0.0
  %4566 = vmatpush1.msra.mxu0 %v4497
  %4567 = vmatprep.subr.mxu0 0.0
  %4568 = vmatpush1.msra.mxu0 %v4498
  %4569 = vmatprep.subr.mxu0 0.0
  %4570 = vmatpush1.msra.mxu0 %v4499
  %4571 = vmatprep.subr.mxu0 0.0
  %4572 = vmatpush1.msra.mxu0 %v4500
  %4573 = vmatprep.subr.mxu0 0.0
  %4574 = vmatpush1.msra.mxu0 %v4501
  %4575 = vmatprep.subr.mxu0 0.0
  %4576 = vmatpush1.msra.mxu0 %v4502
  %4577 = vmatprep.subr.mxu0 0.0
  %4578 = vmatpush1.msra.mxu0 %v4503
  %4579 = vmatprep.subr.mxu0 0.0
  %4580 = vmatpush1.msra.mxu0 %v4504
  %4581 = vmatprep.subr.mxu0 0.0
  %4582 = vmatpush1.msra.mxu0 %v4505
  %4583 = vmatprep.subr.mxu0 0.0
  %4584 = vmatpush1.msra.mxu0 %v4506
  %4585 = vmatprep.subr.mxu0 0.0
  %4586 = vmatpush1.msra.mxu0 %v4507
  %4587 = vmatprep.subr.mxu0 0.0
  %4588 = vmatpush1.msra.mxu0 %v4508
  %4589 = vmatprep.subr.mxu0 0.0
  %4590 = vmatpush1.msra.mxu0 %v4509
  %4591 = vmatprep.subr.mxu0 0.0
  %4592 = vmatpush1.msra.mxu0 %v4510
  %4593 = vmatprep.subr.mxu0 0.0
  %4594 = vmatpush1.msra.mxu0 %v4511
  %4595 = vmatprep.subr.mxu0 0.0
  %4596 = vmatpush1.msra.mxu0 %v4512
  %4597 = vmatprep.subr.mxu0 0.0
  %4598 = vmatpush1.msra.mxu0 %v4513
  %4599 = vmatprep.subr.mxu0 0.0
  %4600 = vmatpush1.msra.mxu0 %v4514
  %4601 = vmatprep.subr.mxu0 0.0
  %4602 = vmatpush1.msra.mxu0 %v4515
  %4603 = vmatprep.mubr.f32.mxu0 %v4432
  %4604 = vmatmul.mubr.f32.gmra.mrb[0].mxu0 %v4382
  %v4605 = vpop.f32.mrb[0].mxu0
  %v4606 = vadd.f32 %v4537, %v4605
  %v4607 = vpop.f32.mrb[0].mxu0
  %4608 = vdwg.mxu0
  %4609 = vmatprep.subr.mxu0 0.0
  %4610 = vmatpush1.msra.mxu0 %v4516
  %4611 = vmatprep.subr.mxu0 0.0
  %4612 = vmatpush1.msra.mxu0 %v4517
  %4613 = vmatprep.subr.mxu0 0.0
  %4614 = vmatpush1.msra.mxu0 %v4518
  %4615 = vmatprep.subr.mxu0 0.0
  %4616 = vmatpush1.msra.mxu0 %v4519
  %4617 = vmatprep.subr.mxu0 0.0
  %4618 = vmatpush1.msra.mxu0 %v4520
  %4619 = vmatprep.subr.mxu0 0.0
  %4620 = vmatpush1.msra.mxu0 %v4521
  %4621 = vmatprep.subr.mxu0 0.0
  %4622 = vmatpush1.msra.mxu0 %v4522
  %4623 = vmatprep.subr.mxu0 0.0
  %4624 = vmatpush1.msra.mxu0 %v4523
  %4625 = vmatprep.subr.mxu0 0.0
  %4626 = vmatpush1.msra.mxu0 %v4524
  %4627 = vmatprep.subr.mxu0 0.0
  %4628 = vmatpush1.msra.mxu0 %v4525
  %4629 = vmatprep.subr.mxu0 0.0
  %4630 = vmatpush1.msra.mxu0 %v4526
  %4631 = vmatprep.subr.mxu0 0.0
  %4632 = vmatpush1.msra.mxu0 %v4527
  %4633 = vmatprep.subr.mxu0 0.0
  %4634 = vmatpush1.msra.mxu0 %v4528
  %4635 = vmatprep.subr.mxu0 0.0
  %4636 = vmatpush1.msra.mxu0 %v4529
  %4637 = vmatprep.subr.mxu0 0.0
  %4638 = vmatpush1.msra.mxu0 %v4530
  %4639 = vmatprep.subr.mxu0 0.0
  %4640 = vmatpush1.msra.mxu0 %v4531
  %4641 = vmatprep.subr.mxu0 0.0
  %4642 = vmatpush1.msra.mxu0 0.0
  %4643 = vmatprep.subr.mxu0 0.0
  %4644 = vmatpush1.msra.mxu0 0.0
  %4645 = vmatprep.subr.mxu0 0.0
  %4646 = vmatpush1.msra.mxu0 0.0
  %4647 = vmatprep.subr.mxu0 0.0
  %4648 = vmatpush1.msra.mxu0 0.0
  %4649 = vmatprep.subr.mxu0 0.0
  %4650 = vmatpush1.msra.mxu0 0.0
  %4651 = vmatprep.subr.mxu0 0.0
  %4652 = vmatpush1.msra.mxu0 0.0
  %4653 = vmatprep.subr.mxu0 0.0
  %4654 = vmatpush1.msra.mxu0 0.0
  %4655 = vmatprep.subr.mxu0 0.0
  %4656 = vmatpush1.msra.mxu0 0.0
  %4657 = vmatprep.subr.mxu0 0.0
  %4658 = vmatpush1.msra.mxu0 0.0
  %4659 = vmatprep.subr.mxu0 0.0
  %4660 = vmatpush1.msra.mxu0 0.0
  %4661 = vmatprep.subr.mxu0 0.0
  %4662 = vmatpush1.msra.mxu0 0.0
  %4663 = vmatprep.subr.mxu0 0.0
  %4664 = vmatpush1.msra.mxu0 0.0
  %4665 = vmatprep.subr.mxu0 0.0
  %4666 = vmatpush1.msra.mxu0 0.0
  %4667 = vmatprep.subr.mxu0 0.0
  %4668 = vmatpush1.msra.mxu0 0.0
  %4669 = vmatprep.subr.mxu0 0.0
  %4670 = vmatpush1.msra.mxu0 0.0
  %4671 = vmatprep.subr.mxu0 0.0
  %4672 = vmatpush1.msra.mxu0 0.0
  %4673 = vmatprep.mubr.f32.mxu0 0.0
  %4674 = vmatmul.mubr.f32.gmra.mrb[0].mxu0 %v4482
  %v4675 = vpop.f32.mrb[0].mxu0
  %v4676 = vadd.f32 %v4606, %v4675
  %v4677 = vpop.f32.mrb[0].mxu0
  %4678 = vdwg.mxu0
  %v4679 = vmax.f32 %v4676, 0.0
  %v4680 = vld [vmem:[%s7] sm:$0xff]
  %v4681 = vld [vmem:[%s7 + $0x8] sm:$0xff]
  %v4682 = vld [vmem:[%s7 + $0x10] sm:$0xff]
  %v4683 = vld [vmem:[%s7 + $0x18] sm:$0xff]
  %v4684 = vld [vmem:[%s7 + $0x20] sm:$0xff]
  %v4685 = vld [vmem:[%s7 + $0x28] sm:$0xff]
  %v4686 = vld [vmem:[%s7 + $0x30] sm:$0xff]
  %v4687 = vld [vmem:[%s7 + $0x38] sm:$0xff]
  %v4688 = vld [vmem:[%s8] sm:$0x1]
  %v4690 = vlaneseq
  %v4691 = vshrl.u32 %v4690, 7
  %v4692 = vsub.s32 0, %v4691
  %v4693 = vrot.slane %v4688, %v4692
  %vm4695 = vcmask 523264
  %v4697 = vsel %vm4695, %v4679, 0
  %4699 = vmatprep.subr.mxu0 0.0
  %4700 = vmatpush1.msra.mxu0 %v4680
  %4701 = vmatprep.subr.mxu0 0.0
  %4702 = vmatpush1.msra.mxu0 %v4681
  %4703 = vmatprep.subr.mxu0 0.0
  %4704 = vmatpush1.msra.mxu0 %v4682
  %4705 = vmatprep.subr.mxu0 0.0
  %4706 = vmatpush1.msra.mxu0 %v4683
  %4707 = vmatprep.subr.mxu0 0.0
  %4708 = vmatpush1.msra.mxu0 %v4684
  %4709 = vmatprep.subr.mxu0 0.0
  %4710 = vmatpush1.msra.mxu0 %v4685
  %4711 = vmatprep.subr.mxu0 0.0
  %4712 = vmatpush1.msra.mxu0 %v4686
  %4713 = vmatprep.subr.mxu0 0.0
  %4714 = vmatpush1.msra.mxu0 %v4687
  %4715 = vmatprep.subr.mxu0 0.0
  %4716 = vmatpush1.msra.mxu0 0.0
  %4717 = vmatprep.subr.mxu0 0.0
  %4718 = vmatpush1.msra.mxu0 0.0
  %4719 = vmatprep.subr.mxu0 0.0
  %4720 = vmatpush1.msra.mxu0 0.0
  %4721 = vmatprep.subr.mxu0 0.0
  %4722 = vmatpush1.msra.mxu0 0.0
  %4723 = vmatprep.subr.mxu0 0.0
  %4724 = vmatpush1.msra.mxu0 0.0
  %4725 = vmatprep.subr.mxu0 0.0
  %4726 = vmatpush1.msra.mxu0 0.0
  %4727 = vmatprep.subr.mxu0 0.0
  %4728 = vmatpush1.msra.mxu0 0.0
  %4729 = vmatprep.subr.mxu0 0.0
  %4730 = vmatpush1.msra.mxu0 0.0
  %4731 = vmatprep.subr.mxu0 0.0
  %4732 = vmatpush1.msra.mxu0 0.0
  %4733 = vmatprep.subr.mxu0 0.0
  %4734 = vmatpush1.msra.mxu0 0.0
  %4735 = vmatprep.subr.mxu0 0.0
  %4736 = vmatpush1.msra.mxu0 0.0
  %4737 = vmatprep.subr.mxu0 0.0
  %4738 = vmatpush1.msra.mxu0 0.0
  %4739 = vmatprep.subr.mxu0 0.0
  %4740 = vmatpush1.msra.mxu0 0.0
  %4741 = vmatprep.subr.mxu0 0.0
  %4742 = vmatpush1.msra.mxu0 0.0
  %4743 = vmatprep.subr.mxu0 0.0
  %4744 = vmatpush1.msra.mxu0 0.0
  %4745 = vmatprep.subr.mxu0 0.0
  %4746 = vmatpush1.msra.mxu0 0.0
  %4747 = vmatprep.subr.mxu0 0.0
  %4748 = vmatpush1.msra.mxu0 0.0
  %4749 = vmatprep.subr.mxu0 0.0
  %4750 = vmatpush1.msra.mxu0 0.0
  %4751 = vmatprep.subr.mxu0 0.0
  %4752 = vmatpush1.msra.mxu0 0.0
  %4753 = vmatprep.subr.mxu0 0.0
  %4754 = vmatpush1.msra.mxu0 0.0
  %4755 = vmatprep.subr.mxu0 0.0
  %4756 = vmatpush1.msra.mxu0 0.0
  %4757 = vmatprep.subr.mxu0 0.0
  %4758 = vmatpush1.msra.mxu0 0.0
  %4759 = vmatprep.subr.mxu0 0.0
  %4760 = vmatpush1.msra.mxu0 0.0
  %4761 = vmatprep.subr.mxu0 0.0
  %4762 = vmatpush1.msra.mxu0 0.0
  %4763 = vmatprep.mubr.f32.mxu0 0.0
  %4764 = vmatmul.mubr.f32.gmra.mrb[0].mxu0 %v4697
  %v4765 = vpop.f32.mrb[0].mxu0
  %v4766 = vadd.f32 %v4693, %v4765
  %v4767 = vpop.f32.mrb[0].mxu0
  %4768 = vdwg.mxu0
  %v4769 = vmax.f32 %v4766, 0.0
  %v4770 = vld [vmem:[%s9] sm:$0xff]
  %v4771 = vld [vmem:[%s9 + $0x8] sm:$0xff]
  %v4772 = vld [vmem:[%s9 + $0x10] sm:$0xff]
  %v4773 = vld [vmem:[%s9 + $0x18] sm:$0xff]
  %v4774 = vld [vmem:[%s10] sm:$0x1]
  %v4776 = vlaneseq
  %v4777 = vshrl.u32 %v4776, 7
  %v4778 = vsub.s32 0, %v4777
  %v4779 = vrot.slane %v4774, %v4778
  %vm4781 = vcmask 261120
  %v4783 = vsel %vm4781, %v4769, 0
  %4785 = vmatprep.subr.mxu0 0.0
  %4786 = vmatpush1.msra.mxu0 %v4770
  %4787 = vmatprep.subr.mxu0 0.0
  %4788 = vmatpush1.msra.mxu0 %v4771
  %4789 = vmatprep.subr.mxu0 0.0
  %4790 = vmatpush1.msra.mxu0 %v4772
  %4791 = vmatprep.subr.mxu0 0.0
  %4792 = vmatpush1.msra.mxu0 %v4773
  %4793 = vmatprep.subr.mxu0 0.0
  %4794 = vmatpush1.msra.mxu0 0.0
  %4795 = vmatprep.subr.mxu0 0.0
  %4796 = vmatpush1.msra.mxu0 0.0
  %4797 = vmatprep.subr.mxu0 0.0
  %4798 = vmatpush1.msra.mxu0 0.0
  %4799 = vmatprep.subr.mxu0 0.0
  %4800 = vmatpush1.msra.mxu0 0.0
  %4801 = vmatprep.subr.mxu0 0.0
  %4802 = vmatpush1.msra.mxu0 0.0
  %4803 = vmatprep.subr.mxu0 0.0
  %4804 = vmatpush1.msra.mxu0 0.0
  %4805 = vmatprep.subr.mxu0 0.0
  %4806 = vmatpush1.msra.mxu0 0.0
  %4807 = vmatprep.subr.mxu0 0.0
  %4808 = vmatpush1.msra.mxu0 0.0
  %4809 = vmatprep.subr.mxu0 0.0
  %4810 = vmatpush1.msra.mxu0 0.0
  %4811 = vmatprep.subr.mxu0 0.0
  %4812 = vmatpush1.msra.mxu0 0.0
  %4813 = vmatprep.subr.mxu0 0.0
  %4814 = vmatpush1.msra.mxu0 0.0
  %4815 = vmatprep.subr.mxu0 0.0
  %4816 = vmatpush1.msra.mxu0 0.0
  %4817 = vmatprep.subr.mxu0 0.0
  %4818 = vmatpush1.msra.mxu0 0.0
  %4819 = vmatprep.subr.mxu0 0.0
  %4820 = vmatpush1.msra.mxu0 0.0
  %4821 = vmatprep.subr.mxu0 0.0
  %4822 = vmatpush1.msra.mxu0 0.0
  %4823 = vmatprep.subr.mxu0 0.0
  %4824 = vmatpush1.msra.mxu0 0.0
  %4825 = vmatprep.subr.mxu0 0.0
  %4826 = vmatpush1.msra.mxu0 0.0
  %4827 = vmatprep.subr.mxu0 0.0
  %4828 = vmatpush1.msra.mxu0 0.0
  %4829 = vmatprep.subr.mxu0 0.0
  %4830 = vmatpush1.msra.mxu0 0.0
  %4831 = vmatprep.subr.mxu0 0.0
  %4832 = vmatpush1.msra.mxu0 0.0
  %4833 = vmatprep.subr.mxu0 0.0
  %4834 = vmatpush1.msra.mxu0 0.0
  %4835 = vmatprep.subr.mxu0 0.0
  %4836 = vmatpush1.msra.mxu0 0.0
  %4837 = vmatprep.subr.mxu0 0.0
  %4838 = vmatpush1.msra.mxu0 0.0
  %4839 = vmatprep.subr.mxu0 0.0
  %4840 = vmatpush1.msra.mxu0 0.0
  %4841 = vmatprep.subr.mxu0 0.0
  %4842 = vmatpush1.msra.mxu0 0.0
  %4843 = vmatprep.subr.mxu0 0.0
  %4844 = vmatpush1.msra.mxu0 0.0
  %4845 = vmatprep.subr.mxu0 0.0
  %4846 = vmatpush1.msra.mxu0 0.0
  %4847 = vmatprep.subr.mxu0 0.0
  %4848 = vmatpush1.msra.mxu0 0.0
  %4849 = vmatprep.mubr.f32.mxu0 0.0
  %4850 = vmatmul.mubr.f32.gmra.mrb[0].mxu0 %v4783
  %v4851 = vpop.f32.mrb[0].mxu0
  %v4852 = vadd.f32 %v4779, %v4851
  %v4853 = vpop.f32.mrb[0].mxu0
  %4854 = vdwg.mxu0
  %4855 = vst [vmem:[%s11] sm:$0xff] %v4852
  // Predicated region
  $region46: #{softmax_forward.1} parent=0 // pred_check
    _
  $region47: #{softmax_forward.1} parent=0 // pred_check_branch
    %4857 = sbr.rel (0) target = $region49
  $region48: #{softmax_forward.1} parent=0 // pred_region
    _
  $region49: #{softmax_forward.1} parent=0 // pred_fallthru
    _
  // Predicated region
  $region50: #{softmax_forward.1} parent=0 // pred_check
    _
  $region51: #{softmax_forward.1} parent=0 // pred_check_branch
    %4859 = sbr.rel (0) target = $region53
  $region52: #{softmax_forward.1} parent=0 // pred_region
    _
  $region53: #{softmax_forward.1} parent=0 // pred_fallthru
    _

</llo_original>
